<compile_context>
chip_gen: v6e
topology: v6e:2x2x1
jax: 0.10.0
libtpu: 0.0.40
codegen_flags: <defaults>
</compile_context>

<pallas_src>
import functools
import math

import jax
import jax.numpy as jnp
from jax.experimental import pallas as pl
from jax.experimental.pallas import tpu as pltpu

_LN_EPS = 1e-5
_ROW_TILE = 512        # rows (B*L) per grid step for the row-parallel kernels
_Q_TILE = 256          # query rows per MHA grid step
_KV_TILE = 512         # key/value rows per MHA grid step (online-softmax streaming)
_F_TILE = 2048         # FFN hidden columns per reduction grid step
_VMEM_LIMIT = 48 * 1024 * 1024   # above 16/32 MiB scoped defaults, below v7x 64 MiB


def _row_tile(m, target=_ROW_TILE):
    # Block sublane dim must be a multiple of 8 or equal the full dim.
    return m if m <= target else target


def _safe_tile(n, target):
    # Axes that feed a reduction (Lk, F): block padding would inject garbage into the
    # accumulator, so only tile when the tile divides the axis exactly.
    return target if (n > target and n % target == 0) else n


def _cparams(semantics):
    return pltpu.CompilerParams(dimension_semantics=semantics,
                                vmem_limit_bytes=_VMEM_LIMIT)


# ----------------------------- Pallas kernels ------------------------------

def _matmul_bias_kernel(x_ref, w_ref, b_ref, o_ref):
    # x: (TM, K) f32, w: (K, N) bf16, b: (1, N) f32 -> (TM, N)
    o_ref[...] = (jnp.dot(x_ref[...].astype(jnp.bfloat16), w_ref[...],
                          preferred_element_type=jnp.float32)
                  + b_ref[...]).astype(o_ref.dtype)


def _mha_kernel(q_ref, kv_ref, o_ref, m_sc, l_sc, acc_sc, *,
                nhead, dh, q_off, k_off, v_off):
    # grid = (B, Lq tiles, Lk tiles); online softmax over the Lk axis.
    # q_ref: (1, TQ, Wq), kv_ref: (1, TK, Wkv); q already carries the 1/sqrt(dh) scale.
    E = nhead * dh
    TQ = q_ref.shape[1]
    TK = kv_ref.shape[1]
    ki = pl.program_id(2)

    @pl.when(ki == 0)
    def _():
        m_sc[...] = jnp.full_like(m_sc, -jnp.inf)
        l_sc[...] = jnp.zeros_like(l_sc)
        acc_sc[...] = jnp.zeros_like(acc_sc)

    # Head-batched q/k/v (no per-head loop, no output concat).
    q = (q_ref[0, :, q_off:q_off + E].reshape(TQ, nhead, dh)
         .transpose(1, 0, 2).astype(jnp.bfloat16))           # (H, TQ, dh)
    k = (kv_ref[0, :, k_off:k_off + E].reshape(TK, nhead, dh)
         .transpose(1, 0, 2).astype(jnp.bfloat16))           # (H, TK, dh)
    v = (kv_ref[0, :, v_off:v_off + E].reshape(TK, nhead, dh)
         .transpose(1, 0, 2).astype(jnp.bfloat16))           # (H, TK, dh)

    # Contract dh last-vs-last; no explicit K transpose materialized.
    s = jnp.einsum("hqd,hkd->hqk", q, k,
                   preferred_element_type=jnp.float32)        # (H, TQ, TK)

    m_prev = m_sc[...]
    m_new = jnp.maximum(m_prev, jnp.max(s, axis=-1, keepdims=True))
    alpha = jnp.exp(m_prev - m_new)
    p = jnp.exp(s - m_new)
    l_sc[...] = alpha * l_sc[...] + jnp.sum(p, axis=-1, keepdims=True)
    acc_sc[...] = alpha * acc_sc[...] + jnp.einsum(
        "hqk,hkd->hqd", p.astype(jnp.bfloat16), v,
        preferred_element_type=jnp.float32)                   # (H, TQ, dh)
    m_sc[...] = m_new

    @pl.when(ki == pl.num_programs(2) - 1)
    def _():
        out = acc_sc[...] / l_sc[...]          # exact divide for PyTorch softmax parity
        o_ref[0] = out.transpose(1, 0, 2).reshape(TQ, E).astype(o_ref.dtype)


def _proj_add_ln_kernel(a_ref, res_ref, w_ref, b_ref, g_ref, beta_ref, o_ref, *, eps):
    # attention out-projection + residual add + LayerNorm, fused
    y = (jnp.dot(a_ref[...].astype(jnp.bfloat16), w_ref[...],
                 preferred_element_type=jnp.float32)
         + b_ref[...] + res_ref[...].astype(jnp.float32))
    mu = jnp.mean(y, axis=-1, keepdims=True)
    var = jnp.mean(jnp.square(y - mu), axis=-1, keepdims=True)
    o_ref[...] = ((y - mu) * jax.lax.rsqrt(var + eps) * g_ref[...]
                  + beta_ref[...]).astype(o_ref.dtype)


def _proj_add_ln_q_kernel(a_ref, res_ref, w_ref, b_ref, g_ref, beta_ref,
                          wq_ref, bq_ref, o_ref, q_out_ref, *, eps):
    # out-projection + residual + LayerNorm, plus the NEXT block's Q projection
    # emitted from the same row tile (saves one HBM round trip of (B*L, E)).
    y = (jnp.dot(a_ref[...].astype(jnp.bfloat16), w_ref[...],
                 preferred_element_type=jnp.float32)
         + b_ref[...] + res_ref[...].astype(jnp.float32))
    mu = jnp.mean(y, axis=-1, keepdims=True)
    var = jnp.mean(jnp.square(y - mu), axis=-1, keepdims=True)
    xln = (y - mu) * jax.lax.rsqrt(var + eps) * g_ref[...] + beta_ref[...]
    o_ref[...] = xln.astype(o_ref.dtype)
    q_out_ref[...] = (jnp.dot(xln.astype(jnp.bfloat16), wq_ref[...],
                              preferred_element_type=jnp.float32)
                      + bq_ref[...]).astype(q_out_ref.dtype)


def _ffn_add_ln_kernel(x_ref, w1_ref, b1_ref, w2_ref, b2_ref, g_ref, beta_ref,
                       o_ref, acc_ref, *, eps):
    # Streams the hidden dim F as a reduction grid axis; linear1->relu->linear2 is
    # accumulated into (TM, E) f32 scratch; +x / LayerNorm epilogue on last F tile.
    f = pl.program_id(1)

    @pl.when(f == 0)
    def _():
        acc_ref[...] = jnp.zeros_like(acc_ref)

    x16 = x_ref[...].astype(jnp.bfloat16)
    h = jnp.maximum(jnp.dot(x16, w1_ref[...],
                            preferred_element_type=jnp.float32) + b1_ref[...], 0.0)
    acc_ref[...] += jnp.dot(h.astype(jnp.bfloat16), w2_ref[...],
                            preferred_element_type=jnp.float32)

    @pl.when(f == pl.num_programs(1) - 1)
    def _():
        y = acc_ref[...] + b2_ref[...] + x_ref[...].astype(jnp.float32)
        mu = jnp.mean(y, axis=-1, keepdims=True)
        var = jnp.mean(jnp.square(y - mu), axis=-1, keepdims=True)
        o_ref[...] = ((y - mu) * jax.lax.rsqrt(var + eps) * g_ref[...]
                      + beta_ref[...]).astype(o_ref.dtype)


# ----------------------------- Pallas wrappers ------------------------------

def pallas_matmul_bias(x, w, b):
    """x: (M, K) f32 @ w: (K, N) bf16 + b: (1, N) -> (M, N) f32; rows tiled."""
    M, K = x.shape
    N = w.shape[1]
    TM = _row_tile(M)
    return pl.pallas_call(
        _matmul_bias_kernel,
        out_shape=jax.ShapeDtypeStruct((M, N), x.dtype),
        grid=(pl.cdiv(M, TM),),
        in_specs=[pl.BlockSpec((TM, K), lambda i: (i, 0)),
                  pl.BlockSpec((K, N), lambda i: (0, 0)),
                  pl.BlockSpec((1, N), lambda i: (0, 0))],
        out_specs=pl.BlockSpec((TM, N), lambda i: (i, 0)),
        compiler_params=_cparams(("parallel",)),
    )(x, w, b)


def pallas_mha(q_arr, kv_arr, q_off, k_off, v_off, nhead, d_model):
    """q_arr: (B, Lq, Wq), kv_arr: (B, Lk, Wkv) -> (B, Lq, E).

    q/k/v live at static column offsets inside q_arr / kv_arr (for self-attention
    both point at the same fused QKV buffer).  Flash-style streaming over Lk keeps
    VMEM at O(TQ*TK); grid over (B, Lq tiles) gives both TensorCores work.
    """
    B, Lq, Wq = q_arr.shape
    _, Lk, Wkv = kv_arr.shape
    dh = d_model // nhead
    TQ = _row_tile(Lq, _Q_TILE)
    TK = _safe_tile(Lk, _KV_TILE)
    kernel = functools.partial(_mha_kernel, nhead=nhead, dh=dh,
                               q_off=q_off, k_off=k_off, v_off=v_off)
    return pl.pallas_call(
        kernel,
        out_shape=jax.ShapeDtypeStruct((B, Lq, d_model), q_arr.dtype),
        grid=(B, pl.cdiv(Lq, TQ), pl.cdiv(Lk, TK)),
        in_specs=[pl.BlockSpec((1, TQ, Wq), lambda b, qi, ki: (b, qi, 0)),
                  pl.BlockSpec((1, TK, Wkv), lambda b, qi, ki: (b, ki, 0))],
        out_specs=pl.BlockSpec((1, TQ, d_model), lambda b, qi, ki: (b, qi, 0)),
        scratch_shapes=[pltpu.VMEM((nhead, TQ, 1), jnp.float32),
                        pltpu.VMEM((nhead, TQ, 1), jnp.float32),
                        pltpu.VMEM((nhead, TQ, dh), jnp.float32)],
        compiler_params=_cparams(("parallel", "parallel", "arbitrary")),
    )(q_arr, kv_arr)


def pallas_proj_add_ln(attn, residual, w, b, gamma, beta, eps=_LN_EPS):
    """LayerNorm(residual + attn @ w + b).  attn/residual: (M, E)."""
    M, E = attn.shape
    TM = _row_tile(M)
    return pl.pallas_call(
        functools.partial(_proj_add_ln_kernel, eps=eps),
        out_shape=jax.ShapeDtypeStruct((M, E), attn.dtype),
        grid=(pl.cdiv(M, TM),),
        in_specs=[pl.BlockSpec((TM, E), lambda i: (i, 0)),
                  pl.BlockSpec((TM, E), lambda i: (i, 0)),
                  pl.BlockSpec((E, E), lambda i: (0, 0)),
                  pl.BlockSpec((1, E), lambda i: (0, 0)),
                  pl.BlockSpec((1, E), lambda i: (0, 0)),
                  pl.BlockSpec((1, E), lambda i: (0, 0))],
        out_specs=pl.BlockSpec((TM, E), lambda i: (i, 0)),
        compiler_params=_cparams(("parallel",)),
    )(attn, residual, w, b, gamma, beta)


def pallas_proj_add_ln_q(attn, residual, w, b, gamma, beta, wq, bq, eps=_LN_EPS):
    """Returns (LayerNorm(residual + attn @ w + b), that_LN @ wq + bq)."""
    M, E = attn.shape
    TM = _row_tile(M)
    return pl.pallas_call(
        functools.partial(_proj_add_ln_q_kernel, eps=eps),
        out_shape=(jax.ShapeDtypeStruct((M, E), attn.dtype),
                   jax.ShapeDtypeStruct((M, E), attn.dtype)),
        grid=(pl.cdiv(M, TM),),
        in_specs=[pl.BlockSpec((TM, E), lambda i: (i, 0)),
                  pl.BlockSpec((TM, E), lambda i: (i, 0)),
                  pl.BlockSpec((E, E), lambda i: (0, 0)),
                  pl.BlockSpec((1, E), lambda i: (0, 0)),
                  pl.BlockSpec((1, E), lambda i: (0, 0)),
                  pl.BlockSpec((1, E), lambda i: (0, 0)),
                  pl.BlockSpec((E, E), lambda i: (0, 0)),
                  pl.BlockSpec((1, E), lambda i: (0, 0))],
        out_specs=[pl.BlockSpec((TM, E), lambda i: (i, 0)),
                   pl.BlockSpec((TM, E), lambda i: (i, 0))],
        compiler_params=_cparams(("parallel",)),
    )(attn, residual, w, b, gamma, beta, wq, bq)


def pallas_ffn_add_ln(x, w1, b1, w2, b2, gamma, beta, eps=_LN_EPS):
    """LayerNorm(x + linear2(relu(linear1(x)))), F streamed as a reduction axis."""
    M, E = x.shape
    F = w1.shape[1]
    TM = _row_tile(M)
    TF = _safe_tile(F, _F_TILE)
    return pl.pallas_call(
        functools.partial(_ffn_add_ln_kernel, eps=eps),
        out_shape=jax.ShapeDtypeStruct((M, E), x.dtype),
        grid=(pl.cdiv(M, TM), pl.cdiv(F, TF)),
        in_specs=[pl.BlockSpec((TM, E), lambda i, f: (i, 0)),
                  pl.BlockSpec((E, TF), lambda i, f: (0, f)),
                  pl.BlockSpec((1, TF), lambda i, f: (0, f)),
                  pl.BlockSpec((TF, E), lambda i, f: (f, 0)),
                  pl.BlockSpec((1, E), lambda i, f: (0, 0)),
                  pl.BlockSpec((1, E), lambda i, f: (0, 0)),
                  pl.BlockSpec((1, E), lambda i, f: (0, 0))],
        out_specs=pl.BlockSpec((TM, E), lambda i, f: (i, 0)),
        scratch_shapes=[pltpu.VMEM((TM, E), jnp.float32)],
        compiler_params=_cparams(("parallel", "arbitrary")),
    )(x, w1, b1, w2, b2, gamma, beta)


# --------------------------- decoder-layer forward ---------------------------

def decoder_layer_forward_batch_first(x, mem, dev, nhead, B, L, S):
    """x: (B*L, E) rows, mem: (B*S, E) rows -> (B*L, E) rows."""
    E = x.shape[1]
    sa, ca = dev["self"], dev["cross"]

    # --- self-attention block (fused QKV, flash MHA, fused epilogue + cross-Q) ---
    qkv = pallas_matmul_bias(x, sa["w_qkv"], sa["b_qkv"])            # (B*L, 3E)
    qkv3 = qkv.reshape(B, L, 3 * E)                                  # free reshape
    attn = pallas_mha(qkv3, qkv3, 0, E, 2 * E, nhead, E)             # (B, L, E)
    x, q = pallas_proj_add_ln_q(attn.reshape(B * L, E), x,
                                sa["w_out"], sa["b_out"],
                                dev["ln1_g"], dev["ln1_b"],
                                ca["w_q"], ca["b_q"])

    # --- cross-attention block ---
    kv = pallas_matmul_bias(mem, ca["w_kv"], ca["b_kv"])             # (B*S, 2E)
    attn = pallas_mha(q.reshape(B, L, E), kv.reshape(B, S, 2 * E),
                      0, 0, E, nhead, E)                             # (B, L, E)
    x = pallas_proj_add_ln(attn.reshape(B * L, E), x,
                           ca["w_out"], ca["b_out"], dev["ln2_g"], dev["ln2_b"])

    # --- feed-forward block (F-streamed, fused residual + LN3) ---
    x = pallas_ffn_add_ln(x, dev["w1"], dev["b1"], dev["w2"], dev["b2"],
                          dev["ln3_g"], dev["ln3_b"])
    return x


def decoder_layer_forward(tgt, memory, dev, nhead):
    """tgt: (L, B, E), memory: (S, B, E) -> (L, B, E).  dev = prepare_params(...)."""
    L, B, E = tgt.shape
    S = memory.shape[0]
    # Single layout change to batch-first row space; for a decoder STACK hoist these
    # two transposes to the model boundary and chain decoder_layer_forward_batch_first.
    x = jnp.transpose(tgt, (1, 0, 2)).reshape(B * L, E)
    mem = jnp.transpose(memory, (1, 0, 2)).reshape(B * S, E)
    x = decoder_layer_forward_batch_first(x, mem, dev, nhead, B, L, S)
    return x.reshape(B, L, E).transpose(1, 0, 2)


# ------------------------------ param handling -------------------------------

def init_params(key, d_model, nhead, dff):
    """PyTorch-layout parameters (in_proj_weight (3E,E), linear W (out,in), ...)."""
    ks = jax.random.split(key, 12)

    def w(k, shape, scale=0.05):
        return jax.random.normal(k, shape, jnp.float32) * scale

    return {
        "self_attn": {"in_w": w(ks[0], (3 * d_model, d_model)),
                      "in_b": w(ks[1], (3 * d_model,)),
                      "out_w": w(ks[2], (d_model, d_model)),
                      "out_b": w(ks[3], (d_model,))},
        "cross_attn": {"in_w": w(ks[4], (3 * d_model, d_model)),
                       "in_b": w(ks[5], (3 * d_model,)),
                       "out_w": w(ks[6], (d_model, d_model)),
                       "out_b": w(ks[7], (d_model,))},
        "w1": w(ks[8], (dff, d_model)), "b1": w(ks[9], (dff,)),
        "w2": w(ks[10], (d_model, dff)), "b2": w(ks[11], (d_model,)),
        "ln1_g": jnp.ones((d_model,), jnp.float32), "ln1_b": jnp.zeros((d_model,), jnp.float32),
        "ln2_g": jnp.ones((d_model,), jnp.float32), "ln2_b": jnp.zeros((d_model,), jnp.float32),
        "ln3_g": jnp.ones((d_model,), jnp.float32), "ln3_b": jnp.zeros((d_model,), jnp.float32),
    }


def prepare_params(params, d_model, nhead, weight_dtype=jnp.bfloat16):
    """One-time device layout: transpose weights, fuse QKV/KV, fold 1/sqrt(dh) into q,
    and store matmul weights in bf16 (MXU-native).  Biases / LN params stay f32."""
    E = d_model
    scale = 1.0 / math.sqrt(E // nhead)

    def pack_attn(p, fuse_qkv):
        w, b = p["in_w"], p["in_b"]                        # (3E, E), (3E,)
        wq_t = (w[:E] * scale).T                           # (E, E), scale folded into q
        bq = b[:E] * scale
        wkv_t = w[E:].T                                    # (E, 2E)
        bkv = b[E:]
        out = {"w_out": p["out_w"].T.astype(weight_dtype),
               "b_out": p["out_b"].reshape(1, E).astype(jnp.float32)}
        if fuse_qkv:
            out["w_qkv"] = jnp.concatenate([wq_t, wkv_t], axis=1).astype(weight_dtype)
            out["b_qkv"] = jnp.concatenate([bq, bkv]).reshape(1, 3 * E).astype(jnp.float32)
        else:
            out["w_q"] = wq_t.astype(weight_dtype)
            out["b_q"] = bq.reshape(1, E).astype(jnp.float32)
            out["w_kv"] = wkv_t.astype(weight_dtype)
            out["b_kv"] = bkv.reshape(1, 2 * E).astype(jnp.float32)
        return out

    dev = {"self": pack_attn(params["self_attn"], True),
           "cross": pack_attn(params["cross_attn"], False),
           "w1": params["w1"].T.astype(weight_dtype),
           "b1": params["b1"].reshape(1, -1).astype(jnp.float32),
           "w2": params["w2"].T.astype(weight_dtype),
           "b2": params["b2"].reshape(1, -1).astype(jnp.float32)}
    for name in ("ln1", "ln2", "ln3"):
        dev[name + "_g"] = params[name + "_g"].reshape(1, E).astype(jnp.float32)
        dev[name + "_b"] = params[name + "_b"].reshape(1, E).astype(jnp.float32)
    return dev


def quantize_weights_bf16(params):
    """Round matmul weights to bf16-and-back so the f32 reference shares exactly the
    stored weights (isolates kernel-math error from weight storage rounding)."""
    def _q(x):
        return x.astype(jnp.bfloat16).astype(jnp.float32)

    out = dict(params)
    for name in ("self_attn", "cross_attn"):
        out[name] = {**params[name],
                     "in_w": _q(params[name]["in_w"]),
                     "out_w": _q(params[name]["out_w"])}
    out["w1"] = _q(params["w1"])
    out["w2"] = _q(params["w2"])
    return out


# --------------------------- pure-JAX reference ------------------------------

def _ref_mha(q_in, k_in, v_in, p, nhead):
    Lq, B, E = q_in.shape
    Lk = k_in.shape[0]
    dh = E // nhead
    q = q_in @ p["in_w"][:E].T + p["in_b"][:E]
    k = k_in @ p["in_w"][E:2 * E].T + p["in_b"][E:2 * E]
    v = v_in @ p["in_w"][2 * E:].T + p["in_b"][2 * E:]
    q = q.reshape(Lq, B * nhead, dh).transpose(1, 0, 2)
    k = k.reshape(Lk, B * nhead, dh).transpose(1, 0, 2)
    v = v.reshape(Lk, B * nhead, dh).transpose(1, 0, 2)
    s = jnp.einsum("bqd,bkd->bqk", q, k) / math.sqrt(dh)
    a = jax.nn.softmax(s, axis=-1)
    o = jnp.einsum("bqk,bkd->bqd", a, v)
    o = o.transpose(1, 0, 2).reshape(Lq, B, E)
    return o @ p["out_w"].T + p["out_b"]


def _ref_ln(x, g, b, eps=_LN_EPS):
    mu = jnp.mean(x, axis=-1, keepdims=True)
    var = jnp.mean(jnp.square(x - mu), axis=-1, keepdims=True)
    return (x - mu) * jax.lax.rsqrt(var + eps) * g + b


def reference_forward(tgt, memory, params, nhead):
    x = _ref_ln(tgt + _ref_mha(tgt, tgt, tgt, params["self_attn"], nhead),
                params["ln1_g"], params["ln1_b"])
    x = _ref_ln(x + _ref_mha(x, memory, memory, params["cross_attn"], nhead),
                params["ln2_g"], params["ln2_b"])
    h = jnp.maximum(x @ params["w1"].T + params["b1"], 0.0)
    ff = h @ params["w2"].T + params["b2"]
    return _ref_ln(x + ff, params["ln3_g"], params["ln3_b"])


# --------------------------------- main --------------------------------------

if __name__ == "__main__":
    d_model, nhead, dff = 32, 4, 64
    L_tgt, L_mem, B = 8, 12, 2

    root = jax.random.PRNGKey(0)
    kp, kt, km = jax.random.split(root, 3)
    params = init_params(kp, d_model, nhead, dff)
    # Reference uses the same bf16-rounded weights the kernels consume, so the check
    # isolates kernel math (bf16 MXU operands, online softmax) from storage rounding.
    params_q = quantize_weights_bf16(params)
    dev_params = prepare_params(params_q, d_model, nhead)      # one-time layout prep

    tgt = jax.random.normal(kt, (L_tgt, B, d_model), jnp.float32)
    memory = jax.random.normal(km, (L_mem, B, d_model), jnp.float32)

    fwd = jax.jit(functools.partial(decoder_layer_forward, nhead=nhead))
    out = jax.block_until_ready(fwd(tgt, memory, dev_params))

    ref = reference_forward(tgt, memory, params_q, nhead)
    assert out.shape == (L_tgt, B, d_model)
    # tolerance accounts for bf16 activation casts feeding the MXU (f32 accumulation)
    assert bool(jnp.allclose(out, ref, atol=2e-2, rtol=2e-2)), "Pallas/JAX mismatch"

    print("KERNEL_OK")
</pallas_src>

<mosaic_0001>
module attributes {stable_mosaic.version = 11 : i64} {
  func.func @_proj_add_ln_q_kernel(%arg0: i32, %arg1: memref<16x32xf32, #tpu.memory_space<vmem>>, %arg2: memref<16x32xf32, #tpu.memory_space<vmem>>, %arg3: memref<32x32xbf16, #tpu.memory_space<vmem>>, %arg4: memref<1x32xf32, #tpu.memory_space<vmem>>, %arg5: memref<1x32xf32, #tpu.memory_space<vmem>>, %arg6: memref<1x32xf32, #tpu.memory_space<vmem>>, %arg7: memref<32x32xbf16, #tpu.memory_space<vmem>>, %arg8: memref<1x32xf32, #tpu.memory_space<vmem>>, %arg9: memref<16x32xf32, #tpu.memory_space<vmem>>, %arg10: memref<16x32xf32, #tpu.memory_space<vmem>>) attributes {dimension_semantics = [#tpu.dimension_semantics<parallel>], iteration_bounds = array<i64: 1>, scalar_prefetch = 0 : i64, scratch_operands = 0 : i64, tpu.core_type = #tpu.core_type<tc>, window_params = [{transform_indices = @transform_0, window_bounds = array<i64: 16, 32>}, {transform_indices = @transform_1, window_bounds = array<i64: 16, 32>}, {pipeline_mode = #tpu.pipeline_mode<synchronous>, transform_indices = @transform_2, window_bounds = array<i64: 32, 32>}, {pipeline_mode = #tpu.pipeline_mode<synchronous>, transform_indices = @transform_3, window_bounds = array<i64: 1, 32>}, {pipeline_mode = #tpu.pipeline_mode<synchronous>, transform_indices = @transform_4, window_bounds = array<i64: 1, 32>}, {pipeline_mode = #tpu.pipeline_mode<synchronous>, transform_indices = @transform_5, window_bounds = array<i64: 1, 32>}, {pipeline_mode = #tpu.pipeline_mode<synchronous>, transform_indices = @transform_6, window_bounds = array<i64: 32, 32>}, {pipeline_mode = #tpu.pipeline_mode<synchronous>, transform_indices = @transform_7, window_bounds = array<i64: 1, 32>}, {transform_indices = @transform_8, window_bounds = array<i64: 16, 32>}, {transform_indices = @transform_9, window_bounds = array<i64: 16, 32>}]} {
    %c0 = arith.constant 0 : index
    %c0_0 = arith.constant 0 : index
    %0 = vector.load %arg1[%c0, %c0_0] : memref<16x32xf32, #tpu.memory_space<vmem>>, vector<16x32xf32>
    %1 = arith.truncf %0 : vector<16x32xf32> to vector<16x32xbf16>
    %c0_1 = arith.constant 0 : index
    %c0_2 = arith.constant 0 : index
    %2 = vector.load %arg3[%c0_1, %c0_2] : memref<32x32xbf16, #tpu.memory_space<vmem>>, vector<32x32xbf16>
    %cst = arith.constant dense<0.000000e+00> : vector<16x32xf32>
    %3 = tpu.matmul %1, %2, %cst {dimension_numbers = #tpu.dot_dimension_numbers<[1], [0], [0], [1], [0, 0, 1, 1], [], []>} : vector<16x32xbf16>, vector<32x32xbf16>, vector<16x32xf32> -> vector<16x32xf32>
    %c0_3 = arith.constant 0 : index
    %c0_4 = arith.constant 0 : index
    %4 = vector.load %arg4[%c0_3, %c0_4] : memref<1x32xf32, #tpu.memory_space<vmem>>, vector<1x32xf32>
    %5 = vector.broadcast %4 : vector<1x32xf32> to vector<16x32xf32>
    %6 = arith.addf %3, %5 : vector<16x32xf32>
    %c0_5 = arith.constant 0 : index
    %c0_6 = arith.constant 0 : index
    %7 = vector.load %arg2[%c0_5, %c0_6] : memref<16x32xf32, #tpu.memory_space<vmem>>, vector<16x32xf32>
    %8 = arith.addf %6, %7 : vector<16x32xf32>
    %cst_7 = arith.constant dense<0.000000e+00> : vector<16xf32>
    %9 = vector.multi_reduction <add>, %8, %cst_7 [1] : vector<16x32xf32> to vector<16xf32>
    %10 = vector.shape_cast %9 : vector<16xf32> to vector<16x1xf32>
    %cst_8 = arith.constant 3.200000e+01 : f32
    %11 = vector.broadcast %cst_8 : f32 to vector<16x1xf32>
    %12 = arith.divf %10, %11 : vector<16x1xf32>
    %13 = vector.broadcast %12 : vector<16x1xf32> to vector<16x32xf32>
    %14 = arith.subf %8, %13 : vector<16x32xf32>
    %15 = arith.mulf %14, %14 : vector<16x32xf32>
    %cst_9 = arith.constant dense<0.000000e+00> : vector<16xf32>
    %16 = vector.multi_reduction <add>, %15, %cst_9 [1] : vector<16x32xf32> to vector<16xf32>
    %17 = vector.shape_cast %16 : vector<16xf32> to vector<16x1xf32>
    %cst_10 = arith.constant 3.200000e+01 : f32
    %18 = vector.broadcast %cst_10 : f32 to vector<16x1xf32>
    %19 = arith.divf %17, %18 : vector<16x1xf32>
    %20 = vector.broadcast %12 : vector<16x1xf32> to vector<16x32xf32>
    %21 = arith.subf %8, %20 : vector<16x32xf32>
    %cst_11 = arith.constant 9.99999974E-6 : f32
    %22 = vector.broadcast %cst_11 : f32 to vector<16x1xf32>
    %23 = arith.addf %19, %22 : vector<16x1xf32>
    %24 = math.rsqrt %23 : vector<16x1xf32>
    %25 = vector.broadcast %24 : vector<16x1xf32> to vector<16x32xf32>
    %26 = arith.mulf %21, %25 : vector<16x32xf32>
    %c0_12 = arith.constant 0 : index
    %c0_13 = arith.constant 0 : index
    %27 = vector.load %arg5[%c0_12, %c0_13] : memref<1x32xf32, #tpu.memory_space<vmem>>, vector<1x32xf32>
    %28 = vector.broadcast %27 : vector<1x32xf32> to vector<16x32xf32>
    %29 = arith.mulf %26, %28 : vector<16x32xf32>
    %c0_14 = arith.constant 0 : index
    %c0_15 = arith.constant 0 : index
    %30 = vector.load %arg6[%c0_14, %c0_15] : memref<1x32xf32, #tpu.memory_space<vmem>>, vector<1x32xf32>
    %31 = vector.broadcast %30 : vector<1x32xf32> to vector<16x32xf32>
    %32 = arith.addf %29, %31 : vector<16x32xf32>
    %c0_16 = arith.constant 0 : index
    %c0_17 = arith.constant 0 : index
    %33 = vector.load %arg9[%c0_16, %c0_17] : memref<16x32xf32, #tpu.memory_space<vmem>>, vector<16x32xf32>
    tpu.vector_store %arg9[%c0_16, %c0_17], %32 {strides = array<i32>} : memref<16x32xf32, #tpu.memory_space<vmem>>, vector<16x32xf32>,
    %34 = arith.truncf %32 : vector<16x32xf32> to vector<16x32xbf16>
    %c0_18 = arith.constant 0 : index
    %c0_19 = arith.constant 0 : index
    %35 = vector.load %arg7[%c0_18, %c0_19] : memref<32x32xbf16, #tpu.memory_space<vmem>>, vector<32x32xbf16>
    %cst_20 = arith.constant dense<0.000000e+00> : vector<16x32xf32>
    %36 = tpu.matmul %34, %35, %cst_20 {dimension_numbers = #tpu.dot_dimension_numbers<[1], [0], [0], [1], [0, 0, 1, 1], [], []>} : vector<16x32xbf16>, vector<32x32xbf16>, vector<16x32xf32> -> vector<16x32xf32>
    %c0_21 = arith.constant 0 : index
    %c0_22 = arith.constant 0 : index
    %37 = vector.load %arg8[%c0_21, %c0_22] : memref<1x32xf32, #tpu.memory_space<vmem>>, vector<1x32xf32>
    %38 = vector.broadcast %37 : vector<1x32xf32> to vector<16x32xf32>
    %39 = arith.addf %36, %38 : vector<16x32xf32>
    %c0_23 = arith.constant 0 : index
    %c0_24 = arith.constant 0 : index
    %40 = vector.load %arg10[%c0_23, %c0_24] : memref<16x32xf32, #tpu.memory_space<vmem>>, vector<16x32xf32>
    tpu.vector_store %arg10[%c0_23, %c0_24], %39 {strides = array<i32>} : memref<16x32xf32, #tpu.memory_space<vmem>>, vector<16x32xf32>,
    return
  }
  func.func @transform_0(%arg0: i32) -> (i32, i32) {
    %c0_i32 = arith.constant 0 : i32
    %c0_i32_0 = arith.constant 0 : i32
    return %arg0, %c0_i32 : i32, i32
  }
  func.func @transform_1(%arg0: i32) -> (i32, i32) {
    %c0_i32 = arith.constant 0 : i32
    %c0_i32_0 = arith.constant 0 : i32
    return %arg0, %c0_i32 : i32, i32
  }
  func.func @transform_2(%arg0: i32) -> (i32, i32) {
    %c0_i32 = arith.constant 0 : i32
    %c0_i32_0 = arith.constant 0 : i32
    %c0_i32_1 = arith.constant 0 : i32
    return %c0_i32, %c0_i32_0 : i32, i32
  }
  func.func @transform_3(%arg0: i32) -> (i32, i32) {
    %c0_i32 = arith.constant 0 : i32
    %c0_i32_0 = arith.constant 0 : i32
    %c0_i32_1 = arith.constant 0 : i32
    return %c0_i32, %c0_i32_0 : i32, i32
  }
  func.func @transform_4(%arg0: i32) -> (i32, i32) {
    %c0_i32 = arith.constant 0 : i32
    %c0_i32_0 = arith.constant 0 : i32
    %c0_i32_1 = arith.constant 0 : i32
    return %c0_i32, %c0_i32_0 : i32, i32
  }
  func.func @transform_5(%arg0: i32) -> (i32, i32) {
    %c0_i32 = arith.constant 0 : i32
    %c0_i32_0 = arith.constant 0 : i32
    %c0_i32_1 = arith.constant 0 : i32
    return %c0_i32, %c0_i32_0 : i32, i32
  }
  func.func @transform_6(%arg0: i32) -> (i32, i32) {
    %c0_i32 = arith.constant 0 : i32
    %c0_i32_0 = arith.constant 0 : i32
    %c0_i32_1 = arith.constant 0 : i32
    return %c0_i32, %c0_i32_0 : i32, i32
  }
  func.func @transform_7(%arg0: i32) -> (i32, i32) {
    %c0_i32 = arith.constant 0 : i32
    %c0_i32_0 = arith.constant 0 : i32
    %c0_i32_1 = arith.constant 0 : i32
    return %c0_i32, %c0_i32_0 : i32, i32
  }
  func.func @transform_8(%arg0: i32) -> (i32, i32) {
    %c0_i32 = arith.constant 0 : i32
    %c0_i32_0 = arith.constant 0 : i32
    return %arg0, %c0_i32 : i32, i32
  }
  func.func @transform_9(%arg0: i32) -> (i32, i32) {
    %c0_i32 = arith.constant 0 : i32
    %c0_i32_0 = arith.constant 0 : i32
    return %arg0, %c0_i32 : i32, i32
  }
}

module attributes {stable_mosaic.version = 11 : i64} {
  func.func @_matmul_bias_kernel(%arg0: i32, %arg1: memref<16x32xf32, #tpu.memory_space<vmem>>, %arg2: memref<32x96xbf16, #tpu.memory_space<vmem>>, %arg3: memref<1x96xf32, #tpu.memory_space<vmem>>, %arg4: memref<16x96xf32, #tpu.memory_space<vmem>>) attributes {dimension_semantics = [#tpu.dimension_semantics<parallel>], iteration_bounds = array<i64: 1>, scalar_prefetch = 0 : i64, scratch_operands = 0 : i64, tpu.core_type = #tpu.core_type<tc>, window_params = [{transform_indices = @transform_0, window_bounds = array<i64: 16, 32>}, {pipeline_mode = #tpu.pipeline_mode<synchronous>, transform_indices = @transform_1, window_bounds = array<i64: 32, 96>}, {pipeline_mode = #tpu.pipeline_mode<synchronous>, transform_indices = @transform_2, window_bounds = array<i64: 1, 96>}, {transform_indices = @transform_3, window_bounds = array<i64: 16, 96>}]} {
    %c0 = arith.constant 0 : index
    %c0_0 = arith.constant 0 : index
    %0 = vector.load %arg1[%c0, %c0_0] : memref<16x32xf32, #tpu.memory_space<vmem>>, vector<16x32xf32>
    %1 = arith.truncf %0 : vector<16x32xf32> to vector<16x32xbf16>
    %c0_1 = arith.constant 0 : index
    %c0_2 = arith.constant 0 : index
    %2 = vector.load %arg2[%c0_1, %c0_2] : memref<32x96xbf16, #tpu.memory_space<vmem>>, vector<32x96xbf16>
    %cst = arith.constant dense<0.000000e+00> : vector<16x96xf32>
    %3 = tpu.matmul %1, %2, %cst {dimension_numbers = #tpu.dot_dimension_numbers<[1], [0], [0], [1], [0, 0, 1, 1], [], []>} : vector<16x32xbf16>, vector<32x96xbf16>, vector<16x96xf32> -> vector<16x96xf32>
    %c0_3 = arith.constant 0 : index
    %c0_4 = arith.constant 0 : index
    %4 = vector.load %arg3[%c0_3, %c0_4] : memref<1x96xf32, #tpu.memory_space<vmem>>, vector<1x96xf32>
    %5 = vector.broadcast %4 : vector<1x96xf32> to vector<16x96xf32>
    %6 = arith.addf %3, %5 : vector<16x96xf32>
    %c0_5 = arith.constant 0 : index
    %c0_6 = arith.constant 0 : index
    %7 = vector.load %arg4[%c0_5, %c0_6] : memref<16x96xf32, #tpu.memory_space<vmem>>, vector<16x96xf32>
    tpu.vector_store %arg4[%c0_5, %c0_6], %6 {strides = array<i32>} : memref<16x96xf32, #tpu.memory_space<vmem>>, vector<16x96xf32>,
    return
  }
  func.func @transform_0(%arg0: i32) -> (i32, i32) {
    %c0_i32 = arith.constant 0 : i32
    %c0_i32_0 = arith.constant 0 : i32
    return %arg0, %c0_i32 : i32, i32
  }
  func.func @transform_1(%arg0: i32) -> (i32, i32) {
    %c0_i32 = arith.constant 0 : i32
    %c0_i32_0 = arith.constant 0 : i32
    %c0_i32_1 = arith.constant 0 : i32
    return %c0_i32, %c0_i32_0 : i32, i32
  }
  func.func @transform_2(%arg0: i32) -> (i32, i32) {
    %c0_i32 = arith.constant 0 : i32
    %c0_i32_0 = arith.constant 0 : i32
    %c0_i32_1 = arith.constant 0 : i32
    return %c0_i32, %c0_i32_0 : i32, i32
  }
  func.func @transform_3(%arg0: i32) -> (i32, i32) {
    %c0_i32 = arith.constant 0 : i32
    %c0_i32_0 = arith.constant 0 : i32
    return %arg0, %c0_i32 : i32, i32
  }
}

module attributes {stable_mosaic.version = 11 : i64} {
  func.func @_mha_kernel(%arg0: i32, %arg1: i32, %arg2: i32, %arg3: memref<1x8x96xf32, #tpu.memory_space<vmem>>, %arg4: memref<1x8x96xf32, #tpu.memory_space<vmem>>, %arg5: memref<1x8x32xf32, #tpu.memory_space<vmem>>, %arg6: memref<4x8x1xf32, #tpu.memory_space<vmem>>, %arg7: memref<4x8x1xf32, #tpu.memory_space<vmem>>, %arg8: memref<4x8x8xf32, #tpu.memory_space<vmem>>) attributes {dimension_semantics = [#tpu.dimension_semantics<parallel>, #tpu.dimension_semantics<parallel>, #tpu.dimension_semantics<arbitrary>], iteration_bounds = array<i64: 2, 1, 1>, scalar_prefetch = 0 : i64, scratch_operands = 3 : i64, tpu.core_type = #tpu.core_type<tc>, window_params = [{transform_indices = @transform_0, window_bounds = array<i64: 1, 8, 96>}, {transform_indices = @transform_1, window_bounds = array<i64: 1, 8, 96>}, {transform_indices = @transform_2, window_bounds = array<i64: 1, 8, 32>}]} {
    %c0_i32 = arith.constant 0 : i32
    %0 = arith.cmpi eq, %arg2, %c0_i32 : i32
    %1 = arith.extui %0 : i1 to i32
    %c0_i32_0 = arith.constant 0 : i32
    %2 = arith.cmpi ne, %1, %c0_i32_0 : i32
    scf.if %2 {
      %cst_30 = arith.constant 0xFF800000 : f32
      %45 = vector.broadcast %cst_30 : f32 to vector<4x8x1xf32>
      %c0_31 = arith.constant 0 : index
      %c0_32 = arith.constant 0 : index
      %c0_33 = arith.constant 0 : index
      %46 = vector.load %arg6[%c0_31, %c0_32, %c0_33] : memref<4x8x1xf32, #tpu.memory_space<vmem>>, vector<4x8x1xf32>
      tpu.vector_store %arg6[%c0_31, %c0_32, %c0_33], %45 {strides = array<i32>} : memref<4x8x1xf32, #tpu.memory_space<vmem>>, vector<4x8x1xf32>,
      %cst_34 = arith.constant 0.000000e+00 : f32
      %47 = vector.broadcast %cst_34 : f32 to vector<4x8x1xf32>
      %c0_35 = arith.constant 0 : index
      %c0_36 = arith.constant 0 : index
      %c0_37 = arith.constant 0 : index
      %48 = vector.load %arg7[%c0_35, %c0_36, %c0_37] : memref<4x8x1xf32, #tpu.memory_space<vmem>>, vector<4x8x1xf32>
      tpu.vector_store %arg7[%c0_35, %c0_36, %c0_37], %47 {strides = array<i32>} : memref<4x8x1xf32, #tpu.memory_space<vmem>>, vector<4x8x1xf32>,
      %cst_38 = arith.constant 0.000000e+00 : f32
      %49 = vector.broadcast %cst_38 : f32 to vector<4x8x8xf32>
      %c0_39 = arith.constant 0 : index
      %c0_40 = arith.constant 0 : index
      %c0_41 = arith.constant 0 : index
      %50 = vector.load %arg8[%c0_39, %c0_40, %c0_41] : memref<4x8x8xf32, #tpu.memory_space<vmem>>, vector<4x8x8xf32>
      tpu.vector_store %arg8[%c0_39, %c0_40, %c0_41], %49 {strides = array<i32>} : memref<4x8x8xf32, #tpu.memory_space<vmem>>, vector<4x8x8xf32>,
    } else {
    }
    %c0 = arith.constant 0 : index
    %c0_1 = arith.constant 0 : index
    %c0_2 = arith.constant 0 : index
    %3 = vector.load %arg3[%c0, %c0_1, %c0_2] : memref<1x8x96xf32, #tpu.memory_space<vmem>>, vector<1x8x32xf32>
    %4 = vector.shape_cast %3 : vector<1x8x32xf32> to vector<8x32xf32>
    %5 = vector.shape_cast %4 : vector<8x32xf32> to vector<8x4x8xf32>
    %6 = tpu.transpose %5, [1, 0, 2] : vector<8x4x8xf32> -> vector<4x8x8xf32>
    %7 = arith.truncf %6 : vector<4x8x8xf32> to vector<4x8x8xbf16>
    %c0_3 = arith.constant 0 : index
    %c0_4 = arith.constant 0 : index
    %c32 = arith.constant 32 : index
    %8 = vector.load %arg4[%c0_3, %c0_4, %c32] : memref<1x8x96xf32, #tpu.memory_space<vmem>>, vector<1x8x32xf32>
    %9 = vector.shape_cast %8 : vector<1x8x32xf32> to vector<8x32xf32>
    %10 = vector.shape_cast %9 : vector<8x32xf32> to vector<8x4x8xf32>
    %11 = tpu.transpose %10, [1, 0, 2] : vector<8x4x8xf32> -> vector<4x8x8xf32>
    %12 = arith.truncf %11 : vector<4x8x8xf32> to vector<4x8x8xbf16>
    %c0_5 = arith.constant 0 : index
    %c0_6 = arith.constant 0 : index
    %c64 = arith.constant 64 : index
    %13 = vector.load %arg4[%c0_5, %c0_6, %c64] : memref<1x8x96xf32, #tpu.memory_space<vmem>>, vector<1x8x32xf32>
    %14 = vector.shape_cast %13 : vector<1x8x32xf32> to vector<8x32xf32>
    %15 = vector.shape_cast %14 : vector<8x32xf32> to vector<8x4x8xf32>
    %16 = tpu.transpose %15, [1, 0, 2] : vector<8x4x8xf32> -> vector<4x8x8xf32>
    %17 = arith.truncf %16 : vector<4x8x8xf32> to vector<4x8x8xbf16>
    "tpu.trace_start"() <{level = 10 : i32, message = "hqd,hkd->hqk"}> : () -> ()
    %cst = arith.constant dense<0.000000e+00> : vector<4x8x8xf32>
    %18 = tpu.matmul %7, %12, %cst {dimension_numbers = #tpu.dot_dimension_numbers<[2], [2], [1], [1], [0, 0, 0, 1, 1, 1], [0], [0]>} : vector<4x8x8xbf16>, vector<4x8x8xbf16>, vector<4x8x8xf32> -> vector<4x8x8xf32>
    "tpu.trace_stop"() : () -> ()
    %c0_7 = arith.constant 0 : index
    %c0_8 = arith.constant 0 : index
    %c0_9 = arith.constant 0 : index
    %19 = vector.load %arg6[%c0_7, %c0_8, %c0_9] : memref<4x8x1xf32, #tpu.memory_space<vmem>>, vector<4x8x1xf32>
    %cst_10 = arith.constant dense<0xFF800000> : vector<4x8xf32>
    %20 = vector.multi_reduction <maximumf>, %18, %cst_10 [2] : vector<4x8x8xf32> to vector<4x8xf32>
    %21 = vector.shape_cast %20 : vector<4x8xf32> to vector<4x8x1xf32>
    %22 = arith.maximumf %19, %21 : vector<4x8x1xf32>
    %23 = arith.subf %19, %22 : vector<4x8x1xf32>
    %24 = math.exp %23 : vector<4x8x1xf32>
    %25 = vector.broadcast %22 : vector<4x8x1xf32> to vector<4x8x8xf32>
    %26 = arith.subf %18, %25 : vector<4x8x8xf32>
    %27 = math.exp %26 : vector<4x8x8xf32>
    %c0_11 = arith.constant 0 : index
    %c0_12 = arith.constant 0 : index
    %c0_13 = arith.constant 0 : index
    %28 = vector.load %arg7[%c0_11, %c0_12, %c0_13] : memref<4x8x1xf32, #tpu.memory_space<vmem>>, vector<4x8x1xf32>
    %29 = arith.mulf %24, %28 : vector<4x8x1xf32>
    %cst_14 = arith.constant dense<0.000000e+00> : vector<4x8xf32>
    %30 = vector.multi_reduction <add>, %27, %cst_14 [2] : vector<4x8x8xf32> to vector<4x8xf32>
    %31 = vector.shape_cast %30 : vector<4x8xf32> to vector<4x8x1xf32>
    %32 = arith.addf %29, %31 : vector<4x8x1xf32>
    %c0_15 = arith.constant 0 : index
    %c0_16 = arith.constant 0 : index
    %c0_17 = arith.constant 0 : index
    %33 = vector.load %arg7[%c0_15, %c0_16, %c0_17] : memref<4x8x1xf32, #tpu.memory_space<vmem>>, vector<4x8x1xf32>
    tpu.vector_store %arg7[%c0_15, %c0_16, %c0_17], %32 {strides = array<i32>} : memref<4x8x1xf32, #tpu.memory_space<vmem>>, vector<4x8x1xf32>,
    %c0_18 = arith.constant 0 : index
    %c0_19 = arith.constant 0 : index
    %c0_20 = arith.constant 0 : index
    %34 = vector.load %arg8[%c0_18, %c0_19, %c0_20] : memref<4x8x8xf32, #tpu.memory_space<vmem>>, vector<4x8x8xf32>
    %35 = vector.broadcast %24 : vector<4x8x1xf32> to vector<4x8x8xf32>
    %36 = arith.mulf %35, %34 : vector<4x8x8xf32>
    %37 = arith.truncf %27 : vector<4x8x8xf32> to vector<4x8x8xbf16>
    "tpu.trace_start"() <{level = 10 : i32, message = "hqk,hkd->hqd"}> : () -> ()
    %cst_21 = arith.constant dense<0.000000e+00> : vector<4x8x8xf32>
    %38 = tpu.matmul %37, %17, %cst_21 {dimension_numbers = #tpu.dot_dimension_numbers<[2], [1], [1], [2], [0, 0, 0, 1, 1, 2], [0], [0]>} : vector<4x8x8xbf16>, vector<4x8x8xbf16>, vector<4x8x8xf32> -> vector<4x8x8xf32>
    "tpu.trace_stop"() : () -> ()
    %39 = arith.addf %36, %38 : vector<4x8x8xf32>
    %c0_22 = arith.constant 0 : index
    %c0_23 = arith.constant 0 : index
    %c0_24 = arith.constant 0 : index
    %40 = vector.load %arg8[%c0_22, %c0_23, %c0_24] : memref<4x8x8xf32, #tpu.memory_space<vmem>>, vector<4x8x8xf32>
    tpu.vector_store %arg8[%c0_22, %c0_23, %c0_24], %39 {strides = array<i32>} : memref<4x8x8xf32, #tpu.memory_space<vmem>>, vector<4x8x8xf32>,
    %c0_25 = arith.constant 0 : index
    %c0_26 = arith.constant 0 : index
    %c0_27 = arith.constant 0 : index
    %41 = vector.load %arg6[%c0_25, %c0_26, %c0_27] : memref<4x8x1xf32, #tpu.memory_space<vmem>>, vector<4x8x1xf32>
    tpu.vector_store %arg6[%c0_25, %c0_26, %c0_27], %22 {strides = array<i32>} : memref<4x8x1xf32, #tpu.memory_space<vmem>>, vector<4x8x1xf32>,
    %c0_i32_28 = arith.constant 0 : i32
    %42 = arith.cmpi eq, %arg2, %c0_i32_28 : i32
    %43 = arith.extui %42 : i1 to i32
    %c0_i32_29 = arith.constant 0 : i32
    %44 = arith.cmpi ne, %43, %c0_i32_29 : i32
    scf.if %44 {
      %c0_30 = arith.constant 0 : index
      %c0_31 = arith.constant 0 : index
      %c0_32 = arith.constant 0 : index
      %45 = vector.load %arg8[%c0_30, %c0_31, %c0_32] : memref<4x8x8xf32, #tpu.memory_space<vmem>>, vector<4x8x8xf32>
      %c0_33 = arith.constant 0 : index
      %c0_34 = arith.constant 0 : index
      %c0_35 = arith.constant 0 : index
      %46 = vector.load %arg7[%c0_33, %c0_34, %c0_35] : memref<4x8x1xf32, #tpu.memory_space<vmem>>, vector<4x8x1xf32>
      %47 = vector.broadcast %46 : vector<4x8x1xf32> to vector<4x8x8xf32>
      %48 = arith.divf %45, %47 : vector<4x8x8xf32>
      %49 = tpu.transpose %48, [1, 0, 2] : vector<4x8x8xf32> -> vector<8x4x8xf32>
      %50 = vector.shape_cast %49 : vector<8x4x8xf32> to vector<8x32xf32>
      %c0_36 = arith.constant 0 : index
      %c0_37 = arith.constant 0 : index
      %c0_38 = arith.constant 0 : index
      %51 = vector.load %arg5[%c0_36, %c0_37, %c0_38] : memref<1x8x32xf32, #tpu.memory_space<vmem>>, vector<1x8x32xf32>
      %52 = vector.shape_cast %51 : vector<1x8x32xf32> to vector<8x32xf32>
      %53 = vector.shape_cast %50 : vector<8x32xf32> to vector<1x8x32xf32>
      tpu.vector_store %arg5[%c0_36, %c0_37, %c0_38], %53 {strides = array<i32>} : memref<1x8x32xf32, #tpu.memory_space<vmem>>, vector<1x8x32xf32>,
    } else {
    }
    return
  }
  func.func @transform_0(%arg0: i32, %arg1: i32, %arg2: i32) -> (i32, i32, i32) {
    %c0_i32 = arith.constant 0 : i32
    %c0_i32_0 = arith.constant 0 : i32
    return %arg0, %arg1, %c0_i32 : i32, i32, i32
  }
  func.func @transform_1(%arg0: i32, %arg1: i32, %arg2: i32) -> (i32, i32, i32) {
    %c0_i32 = arith.constant 0 : i32
    %c0_i32_0 = arith.constant 0 : i32
    return %arg0, %arg2, %c0_i32 : i32, i32, i32
  }
  func.func @transform_2(%arg0: i32, %arg1: i32, %arg2: i32) -> (i32, i32, i32) {
    %c0_i32 = arith.constant 0 : i32
    %c0_i32_0 = arith.constant 0 : i32
    return %arg0, %arg1, %c0_i32 : i32, i32, i32
  }
}

module attributes {stable_mosaic.version = 11 : i64} {
  func.func @_matmul_bias_kernel(%arg0: i32, %arg1: memref<24x32xf32, #tpu.memory_space<vmem>>, %arg2: memref<32x64xbf16, #tpu.memory_space<vmem>>, %arg3: memref<1x64xf32, #tpu.memory_space<vmem>>, %arg4: memref<24x64xf32, #tpu.memory_space<vmem>>) attributes {dimension_semantics = [#tpu.dimension_semantics<parallel>], iteration_bounds = array<i64: 1>, scalar_prefetch = 0 : i64, scratch_operands = 0 : i64, tpu.core_type = #tpu.core_type<tc>, window_params = [{transform_indices = @transform_0, window_bounds = array<i64: 24, 32>}, {pipeline_mode = #tpu.pipeline_mode<synchronous>, transform_indices = @transform_1, window_bounds = array<i64: 32, 64>}, {pipeline_mode = #tpu.pipeline_mode<synchronous>, transform_indices = @transform_2, window_bounds = array<i64: 1, 64>}, {transform_indices = @transform_3, window_bounds = array<i64: 24, 64>}]} {
    %c0 = arith.constant 0 : index
    %c0_0 = arith.constant 0 : index
    %0 = vector.load %arg1[%c0, %c0_0] : memref<24x32xf32, #tpu.memory_space<vmem>>, vector<24x32xf32>
    %1 = arith.truncf %0 : vector<24x32xf32> to vector<24x32xbf16>
    %c0_1 = arith.constant 0 : index
    %c0_2 = arith.constant 0 : index
    %2 = vector.load %arg2[%c0_1, %c0_2] : memref<32x64xbf16, #tpu.memory_space<vmem>>, vector<32x64xbf16>
    %cst = arith.constant dense<0.000000e+00> : vector<24x64xf32>
    %3 = tpu.matmul %1, %2, %cst {dimension_numbers = #tpu.dot_dimension_numbers<[1], [0], [0], [1], [0, 0, 1, 1], [], []>} : vector<24x32xbf16>, vector<32x64xbf16>, vector<24x64xf32> -> vector<24x64xf32>
    %c0_3 = arith.constant 0 : index
    %c0_4 = arith.constant 0 : index
    %4 = vector.load %arg3[%c0_3, %c0_4] : memref<1x64xf32, #tpu.memory_space<vmem>>, vector<1x64xf32>
    %5 = vector.broadcast %4 : vector<1x64xf32> to vector<24x64xf32>
    %6 = arith.addf %3, %5 : vector<24x64xf32>
    %c0_5 = arith.constant 0 : index
    %c0_6 = arith.constant 0 : index
    %7 = vector.load %arg4[%c0_5, %c0_6] : memref<24x64xf32, #tpu.memory_space<vmem>>, vector<24x64xf32>
    tpu.vector_store %arg4[%c0_5, %c0_6], %6 {strides = array<i32>} : memref<24x64xf32, #tpu.memory_space<vmem>>, vector<24x64xf32>,
    return
  }
  func.func @transform_0(%arg0: i32) -> (i32, i32) {
    %c0_i32 = arith.constant 0 : i32
    %c0_i32_0 = arith.constant 0 : i32
    return %arg0, %c0_i32 : i32, i32
  }
  func.func @transform_1(%arg0: i32) -> (i32, i32) {
    %c0_i32 = arith.constant 0 : i32
    %c0_i32_0 = arith.constant 0 : i32
    %c0_i32_1 = arith.constant 0 : i32
    return %c0_i32, %c0_i32_0 : i32, i32
  }
  func.func @transform_2(%arg0: i32) -> (i32, i32) {
    %c0_i32 = arith.constant 0 : i32
    %c0_i32_0 = arith.constant 0 : i32
    %c0_i32_1 = arith.constant 0 : i32
    return %c0_i32, %c0_i32_0 : i32, i32
  }
  func.func @transform_3(%arg0: i32) -> (i32, i32) {
    %c0_i32 = arith.constant 0 : i32
    %c0_i32_0 = arith.constant 0 : i32
    return %arg0, %c0_i32 : i32, i32
  }
}

module attributes {stable_mosaic.version = 11 : i64} {
  func.func @_proj_add_ln_kernel(%arg0: i32, %arg1: memref<16x32xf32, #tpu.memory_space<vmem>>, %arg2: memref<16x32xf32, #tpu.memory_space<vmem>>, %arg3: memref<32x32xbf16, #tpu.memory_space<vmem>>, %arg4: memref<1x32xf32, #tpu.memory_space<vmem>>, %arg5: memref<1x32xf32, #tpu.memory_space<vmem>>, %arg6: memref<1x32xf32, #tpu.memory_space<vmem>>, %arg7: memref<16x32xf32, #tpu.memory_space<vmem>>) attributes {dimension_semantics = [#tpu.dimension_semantics<parallel>], iteration_bounds = array<i64: 1>, scalar_prefetch = 0 : i64, scratch_operands = 0 : i64, tpu.core_type = #tpu.core_type<tc>, window_params = [{transform_indices = @transform_0, window_bounds = array<i64: 16, 32>}, {transform_indices = @transform_1, window_bounds = array<i64: 16, 32>}, {pipeline_mode = #tpu.pipeline_mode<synchronous>, transform_indices = @transform_2, window_bounds = array<i64: 32, 32>}, {pipeline_mode = #tpu.pipeline_mode<synchronous>, transform_indices = @transform_3, window_bounds = array<i64: 1, 32>}, {pipeline_mode = #tpu.pipeline_mode<synchronous>, transform_indices = @transform_4, window_bounds = array<i64: 1, 32>}, {pipeline_mode = #tpu.pipeline_mode<synchronous>, transform_indices = @transform_5, window_bounds = array<i64: 1, 32>}, {transform_indices = @transform_6, window_bounds = array<i64: 16, 32>}]} {
    %c0 = arith.constant 0 : index
    %c0_0 = arith.constant 0 : index
    %0 = vector.load %arg1[%c0, %c0_0] : memref<16x32xf32, #tpu.memory_space<vmem>>, vector<16x32xf32>
    %1 = arith.truncf %0 : vector<16x32xf32> to vector<16x32xbf16>
    %c0_1 = arith.constant 0 : index
    %c0_2 = arith.constant 0 : index
    %2 = vector.load %arg3[%c0_1, %c0_2] : memref<32x32xbf16, #tpu.memory_space<vmem>>, vector<32x32xbf16>
    %cst = arith.constant dense<0.000000e+00> : vector<16x32xf32>
    %3 = tpu.matmul %1, %2, %cst {dimension_numbers = #tpu.dot_dimension_numbers<[1], [0], [0], [1], [0, 0, 1, 1], [], []>} : vector<16x32xbf16>, vector<32x32xbf16>, vector<16x32xf32> -> vector<16x32xf32>
    %c0_3 = arith.constant 0 : index
    %c0_4 = arith.constant 0 : index
    %4 = vector.load %arg4[%c0_3, %c0_4] : memref<1x32xf32, #tpu.memory_space<vmem>>, vector<1x32xf32>
    %5 = vector.broadcast %4 : vector<1x32xf32> to vector<16x32xf32>
    %6 = arith.addf %3, %5 : vector<16x32xf32>
    %c0_5 = arith.constant 0 : index
    %c0_6 = arith.constant 0 : index
    %7 = vector.load %arg2[%c0_5, %c0_6] : memref<16x32xf32, #tpu.memory_space<vmem>>, vector<16x32xf32>
    %8 = arith.addf %6, %7 : vector<16x32xf32>
    %cst_7 = arith.constant dense<0.000000e+00> : vector<16xf32>
    %9 = vector.multi_reduction <add>, %8, %cst_7 [1] : vector<16x32xf32> to vector<16xf32>
    %10 = vector.shape_cast %9 : vector<16xf32> to vector<16x1xf32>
    %cst_8 = arith.constant 3.200000e+01 : f32
    %11 = vector.broadcast %cst_8 : f32 to vector<16x1xf32>
    %12 = arith.divf %10, %11 : vector<16x1xf32>
    %13 = vector.broadcast %12 : vector<16x1xf32> to vector<16x32xf32>
    %14 = arith.subf %8, %13 : vector<16x32xf32>
    %15 = arith.mulf %14, %14 : vector<16x32xf32>
    %cst_9 = arith.constant dense<0.000000e+00> : vector<16xf32>
    %16 = vector.multi_reduction <add>, %15, %cst_9 [1] : vector<16x32xf32> to vector<16xf32>
    %17 = vector.shape_cast %16 : vector<16xf32> to vector<16x1xf32>
    %cst_10 = arith.constant 3.200000e+01 : f32
    %18 = vector.broadcast %cst_10 : f32 to vector<16x1xf32>
    %19 = arith.divf %17, %18 : vector<16x1xf32>
    %20 = vector.broadcast %12 : vector<16x1xf32> to vector<16x32xf32>
    %21 = arith.subf %8, %20 : vector<16x32xf32>
    %cst_11 = arith.constant 9.99999974E-6 : f32
    %22 = vector.broadcast %cst_11 : f32 to vector<16x1xf32>
    %23 = arith.addf %19, %22 : vector<16x1xf32>
    %24 = math.rsqrt %23 : vector<16x1xf32>
    %25 = vector.broadcast %24 : vector<16x1xf32> to vector<16x32xf32>
    %26 = arith.mulf %21, %25 : vector<16x32xf32>
    %c0_12 = arith.constant 0 : index
    %c0_13 = arith.constant 0 : index
    %27 = vector.load %arg5[%c0_12, %c0_13] : memref<1x32xf32, #tpu.memory_space<vmem>>, vector<1x32xf32>
    %28 = vector.broadcast %27 : vector<1x32xf32> to vector<16x32xf32>
    %29 = arith.mulf %26, %28 : vector<16x32xf32>
    %c0_14 = arith.constant 0 : index
    %c0_15 = arith.constant 0 : index
    %30 = vector.load %arg6[%c0_14, %c0_15] : memref<1x32xf32, #tpu.memory_space<vmem>>, vector<1x32xf32>
    %31 = vector.broadcast %30 : vector<1x32xf32> to vector<16x32xf32>
    %32 = arith.addf %29, %31 : vector<16x32xf32>
    %c0_16 = arith.constant 0 : index
    %c0_17 = arith.constant 0 : index
    %33 = vector.load %arg7[%c0_16, %c0_17] : memref<16x32xf32, #tpu.memory_space<vmem>>, vector<16x32xf32>
    tpu.vector_store %arg7[%c0_16, %c0_17], %32 {strides = array<i32>} : memref<16x32xf32, #tpu.memory_space<vmem>>, vector<16x32xf32>,
    return
  }
  func.func @transform_0(%arg0: i32) -> (i32, i32) {
    %c0_i32 = arith.constant 0 : i32
    %c0_i32_0 = arith.constant 0 : i32
    return %arg0, %c0_i32 : i32, i32
  }
  func.func @transform_1(%arg0: i32) -> (i32, i32) {
    %c0_i32 = arith.constant 0 : i32
    %c0_i32_0 = arith.constant 0 : i32
    return %arg0, %c0_i32 : i32, i32
  }
  func.func @transform_2(%arg0: i32) -> (i32, i32) {
    %c0_i32 = arith.constant 0 : i32
    %c0_i32_0 = arith.constant 0 : i32
    %c0_i32_1 = arith.constant 0 : i32
    return %c0_i32, %c0_i32_0 : i32, i32
  }
  func.func @transform_3(%arg0: i32) -> (i32, i32) {
    %c0_i32 = arith.constant 0 : i32
    %c0_i32_0 = arith.constant 0 : i32
    %c0_i32_1 = arith.constant 0 : i32
    return %c0_i32, %c0_i32_0 : i32, i32
  }
  func.func @transform_4(%arg0: i32) -> (i32, i32) {
    %c0_i32 = arith.constant 0 : i32
    %c0_i32_0 = arith.constant 0 : i32
    %c0_i32_1 = arith.constant 0 : i32
    return %c0_i32, %c0_i32_0 : i32, i32
  }
  func.func @transform_5(%arg0: i32) -> (i32, i32) {
    %c0_i32 = arith.constant 0 : i32
    %c0_i32_0 = arith.constant 0 : i32
    %c0_i32_1 = arith.constant 0 : i32
    return %c0_i32, %c0_i32_0 : i32, i32
  }
  func.func @transform_6(%arg0: i32) -> (i32, i32) {
    %c0_i32 = arith.constant 0 : i32
    %c0_i32_0 = arith.constant 0 : i32
    return %arg0, %c0_i32 : i32, i32
  }
}

module attributes {stable_mosaic.version = 11 : i64} {
  func.func @_ffn_add_ln_kernel(%arg0: i32, %arg1: i32, %arg2: memref<16x32xf32, #tpu.memory_space<vmem>>, %arg3: memref<32x64xbf16, #tpu.memory_space<vmem>>, %arg4: memref<1x64xf32, #tpu.memory_space<vmem>>, %arg5: memref<64x32xbf16, #tpu.memory_space<vmem>>, %arg6: memref<1x32xf32, #tpu.memory_space<vmem>>, %arg7: memref<1x32xf32, #tpu.memory_space<vmem>>, %arg8: memref<1x32xf32, #tpu.memory_space<vmem>>, %arg9: memref<16x32xf32, #tpu.memory_space<vmem>>, %arg10: memref<16x32xf32, #tpu.memory_space<vmem>>) attributes {dimension_semantics = [#tpu.dimension_semantics<parallel>, #tpu.dimension_semantics<arbitrary>], iteration_bounds = array<i64: 1, 1>, scalar_prefetch = 0 : i64, scratch_operands = 1 : i64, tpu.core_type = #tpu.core_type<tc>, window_params = [{transform_indices = @transform_0, window_bounds = array<i64: 16, 32>}, {transform_indices = @transform_1, window_bounds = array<i64: 32, 64>}, {transform_indices = @transform_2, window_bounds = array<i64: 1, 64>}, {transform_indices = @transform_3, window_bounds = array<i64: 64, 32>}, {pipeline_mode = #tpu.pipeline_mode<synchronous>, transform_indices = @transform_4, window_bounds = array<i64: 1, 32>}, {pipeline_mode = #tpu.pipeline_mode<synchronous>, transform_indices = @transform_5, window_bounds = array<i64: 1, 32>}, {pipeline_mode = #tpu.pipeline_mode<synchronous>, transform_indices = @transform_6, window_bounds = array<i64: 1, 32>}, {transform_indices = @transform_7, window_bounds = array<i64: 16, 32>}]} {
    %c0_i32 = arith.constant 0 : i32
    %0 = arith.cmpi eq, %arg1, %c0_i32 : i32
    %1 = arith.extui %0 : i1 to i32
    %c0_i32_0 = arith.constant 0 : i32
    %2 = arith.cmpi ne, %1, %c0_i32_0 : i32
    scf.if %2 {
      %cst_16 = arith.constant 0.000000e+00 : f32
      %21 = vector.broadcast %cst_16 : f32 to vector<16x32xf32>
      %c0_17 = arith.constant 0 : index
      %c0_18 = arith.constant 0 : index
      %22 = vector.load %arg10[%c0_17, %c0_18] : memref<16x32xf32, #tpu.memory_space<vmem>>, vector<16x32xf32>
      tpu.vector_store %arg10[%c0_17, %c0_18], %21 {strides = array<i32>} : memref<16x32xf32, #tpu.memory_space<vmem>>, vector<16x32xf32>,
    } else {
    }
    %c0 = arith.constant 0 : index
    %c0_1 = arith.constant 0 : index
    %3 = vector.load %arg2[%c0, %c0_1] : memref<16x32xf32, #tpu.memory_space<vmem>>, vector<16x32xf32>
    %4 = arith.truncf %3 : vector<16x32xf32> to vector<16x32xbf16>
    %c0_2 = arith.constant 0 : index
    %c0_3 = arith.constant 0 : index
    %5 = vector.load %arg3[%c0_2, %c0_3] : memref<32x64xbf16, #tpu.memory_space<vmem>>, vector<32x64xbf16>
    %cst = arith.constant dense<0.000000e+00> : vector<16x64xf32>
    %6 = tpu.matmul %4, %5, %cst {dimension_numbers = #tpu.dot_dimension_numbers<[1], [0], [0], [1], [0, 0, 1, 1], [], []>} : vector<16x32xbf16>, vector<32x64xbf16>, vector<16x64xf32> -> vector<16x64xf32>
    %c0_4 = arith.constant 0 : index
    %c0_5 = arith.constant 0 : index
    %7 = vector.load %arg4[%c0_4, %c0_5] : memref<1x64xf32, #tpu.memory_space<vmem>>, vector<1x64xf32>
    %8 = vector.broadcast %7 : vector<1x64xf32> to vector<16x64xf32>
    %9 = arith.addf %6, %8 : vector<16x64xf32>
    %cst_6 = arith.constant 0.000000e+00 : f32
    %10 = vector.broadcast %cst_6 : f32 to vector<16x64xf32>
    %11 = arith.maximumf %9, %10 : vector<16x64xf32>
    %c0_7 = arith.constant 0 : index
    %c0_8 = arith.constant 0 : index
    %12 = vector.load %arg10[%c0_7, %c0_8] : memref<16x32xf32, #tpu.memory_space<vmem>>, vector<16x32xf32>
    %13 = arith.truncf %11 : vector<16x64xf32> to vector<16x64xbf16>
    %c0_9 = arith.constant 0 : index
    %c0_10 = arith.constant 0 : index
    %14 = vector.load %arg5[%c0_9, %c0_10] : memref<64x32xbf16, #tpu.memory_space<vmem>>, vector<64x32xbf16>
    %cst_11 = arith.constant dense<0.000000e+00> : vector<16x32xf32>
    %15 = tpu.matmul %13, %14, %cst_11 {dimension_numbers = #tpu.dot_dimension_numbers<[1], [0], [0], [1], [0, 0, 1, 1], [], []>} : vector<16x64xbf16>, vector<64x32xbf16>, vector<16x32xf32> -> vector<16x32xf32>
    %16 = arith.addf %12, %15 : vector<16x32xf32>
    %c0_12 = arith.constant 0 : index
    %c0_13 = arith.constant 0 : index
    %17 = vector.load %arg10[%c0_12, %c0_13] : memref<16x32xf32, #tpu.memory_space<vmem>>, vector<16x32xf32>
    tpu.vector_store %arg10[%c0_12, %c0_13], %16 {strides = array<i32>} : memref<16x32xf32, #tpu.memory_space<vmem>>, vector<16x32xf32>,
    %c0_i32_14 = arith.constant 0 : i32
    %18 = arith.cmpi eq, %arg1, %c0_i32_14 : i32
    %19 = arith.extui %18 : i1 to i32
    %c0_i32_15 = arith.constant 0 : i32
    %20 = arith.cmpi ne, %19, %c0_i32_15 : i32
    scf.if %20 {
      %c0_16 = arith.constant 0 : index
      %c0_17 = arith.constant 0 : index
      %21 = vector.load %arg10[%c0_16, %c0_17] : memref<16x32xf32, #tpu.memory_space<vmem>>, vector<16x32xf32>
      %c0_18 = arith.constant 0 : index
      %c0_19 = arith.constant 0 : index
      %22 = vector.load %arg6[%c0_18, %c0_19] : memref<1x32xf32, #tpu.memory_space<vmem>>, vector<1x32xf32>
      %23 = vector.broadcast %22 : vector<1x32xf32> to vector<16x32xf32>
      %24 = arith.addf %21, %23 : vector<16x32xf32>
      %c0_20 = arith.constant 0 : index
      %c0_21 = arith.constant 0 : index
      %25 = vector.load %arg2[%c0_20, %c0_21] : memref<16x32xf32, #tpu.memory_space<vmem>>, vector<16x32xf32>
      %26 = arith.addf %24, %25 : vector<16x32xf32>
      %cst_22 = arith.constant dense<0.000000e+00> : vector<16xf32>
      %27 = vector.multi_reduction <add>, %26, %cst_22 [1] : vector<16x32xf32> to vector<16xf32>
      %28 = vector.shape_cast %27 : vector<16xf32> to vector<16x1xf32>
      %cst_23 = arith.constant 3.200000e+01 : f32
      %29 = vector.broadcast %cst_23 : f32 to vector<16x1xf32>
      %30 = arith.divf %28, %29 : vector<16x1xf32>
      %31 = vector.broadcast %30 : vector<16x1xf32> to vector<16x32xf32>
      %32 = arith.subf %26, %31 : vector<16x32xf32>
      %33 = arith.mulf %32, %32 : vector<16x32xf32>
      %cst_24 = arith.constant dense<0.000000e+00> : vector<16xf32>
      %34 = vector.multi_reduction <add>, %33, %cst_24 [1] : vector<16x32xf32> to vector<16xf32>
      %35 = vector.shape_cast %34 : vector<16xf32> to vector<16x1xf32>
      %cst_25 = arith.constant 3.200000e+01 : f32
      %36 = vector.broadcast %cst_25 : f32 to vector<16x1xf32>
      %37 = arith.divf %35, %36 : vector<16x1xf32>
      %38 = vector.broadcast %30 : vector<16x1xf32> to vector<16x32xf32>
      %39 = arith.subf %26, %38 : vector<16x32xf32>
      %cst_26 = arith.constant 9.99999974E-6 : f32
      %40 = vector.broadcast %cst_26 : f32 to vector<16x1xf32>
      %41 = arith.addf %37, %40 : vector<16x1xf32>
      %42 = math.rsqrt %41 : vector<16x1xf32>
      %43 = vector.broadcast %42 : vector<16x1xf32> to vector<16x32xf32>
      %44 = arith.mulf %39, %43 : vector<16x32xf32>
      %c0_27 = arith.constant 0 : index
      %c0_28 = arith.constant 0 : index
      %45 = vector.load %arg7[%c0_27, %c0_28] : memref<1x32xf32, #tpu.memory_space<vmem>>, vector<1x32xf32>
      %46 = vector.broadcast %45 : vector<1x32xf32> to vector<16x32xf32>
      %47 = arith.mulf %44, %46 : vector<16x32xf32>
      %c0_29 = arith.constant 0 : index
      %c0_30 = arith.constant 0 : index
      %48 = vector.load %arg8[%c0_29, %c0_30] : memref<1x32xf32, #tpu.memory_space<vmem>>, vector<1x32xf32>
      %49 = vector.broadcast %48 : vector<1x32xf32> to vector<16x32xf32>
      %50 = arith.addf %47, %49 : vector<16x32xf32>
      %c0_31 = arith.constant 0 : index
      %c0_32 = arith.constant 0 : index
      %51 = vector.load %arg9[%c0_31, %c0_32] : memref<16x32xf32, #tpu.memory_space<vmem>>, vector<16x32xf32>
      tpu.vector_store %arg9[%c0_31, %c0_32], %50 {strides = array<i32>} : memref<16x32xf32, #tpu.memory_space<vmem>>, vector<16x32xf32>,
    } else {
    }
    return
  }
  func.func @transform_0(%arg0: i32, %arg1: i32) -> (i32, i32) {
    %c0_i32 = arith.constant 0 : i32
    %c0_i32_0 = arith.constant 0 : i32
    return %arg0, %c0_i32 : i32, i32
  }
  func.func @transform_1(%arg0: i32, %arg1: i32) -> (i32, i32) {
    %c0_i32 = arith.constant 0 : i32
    %c0_i32_0 = arith.constant 0 : i32
    return %c0_i32, %arg1 : i32, i32
  }
  func.func @transform_2(%arg0: i32, %arg1: i32) -> (i32, i32) {
    %c0_i32 = arith.constant 0 : i32
    %c0_i32_0 = arith.constant 0 : i32
    return %c0_i32, %arg1 : i32, i32
  }
  func.func @transform_3(%arg0: i32, %arg1: i32) -> (i32, i32) {
    %c0_i32 = arith.constant 0 : i32
    %c0_i32_0 = arith.constant 0 : i32
    return %arg1, %c0_i32 : i32, i32
  }
  func.func @transform_4(%arg0: i32, %arg1: i32) -> (i32, i32) {
    %c0_i32 = arith.constant 0 : i32
    %c0_i32_0 = arith.constant 0 : i32
    %c0_i32_1 = arith.constant 0 : i32
    return %c0_i32, %c0_i32_0 : i32, i32
  }
  func.func @transform_5(%arg0: i32, %arg1: i32) -> (i32, i32) {
    %c0_i32 = arith.constant 0 : i32
    %c0_i32_0 = arith.constant 0 : i32
    %c0_i32_1 = arith.constant 0 : i32
    return %c0_i32, %c0_i32_0 : i32, i32
  }
  func.func @transform_6(%arg0: i32, %arg1: i32) -> (i32, i32) {
    %c0_i32 = arith.constant 0 : i32
    %c0_i32_0 = arith.constant 0 : i32
    %c0_i32_1 = arith.constant 0 : i32
    return %c0_i32, %c0_i32_0 : i32, i32
  }
  func.func @transform_7(%arg0: i32, %arg1: i32) -> (i32, i32) {
    %c0_i32 = arith.constant 0 : i32
    %c0_i32_0 = arith.constant 0 : i32
    return %arg0, %c0_i32 : i32, i32
  }
}

module attributes {stable_mosaic.version = 11 : i64} {
  func.func @_mha_kernel(%arg0: i32, %arg1: i32, %arg2: i32, %arg3: memref<1x8x32xf32, #tpu.memory_space<vmem>>, %arg4: memref<1x12x64xf32, #tpu.memory_space<vmem>>, %arg5: memref<1x8x32xf32, #tpu.memory_space<vmem>>, %arg6: memref<4x8x1xf32, #tpu.memory_space<vmem>>, %arg7: memref<4x8x1xf32, #tpu.memory_space<vmem>>, %arg8: memref<4x8x8xf32, #tpu.memory_space<vmem>>) attributes {dimension_semantics = [#tpu.dimension_semantics<parallel>, #tpu.dimension_semantics<parallel>, #tpu.dimension_semantics<arbitrary>], iteration_bounds = array<i64: 2, 1, 1>, scalar_prefetch = 0 : i64, scratch_operands = 3 : i64, tpu.core_type = #tpu.core_type<tc>, window_params = [{transform_indices = @transform_0, window_bounds = array<i64: 1, 8, 32>}, {transform_indices = @transform_1, window_bounds = array<i64: 1, 12, 64>}, {transform_indices = @transform_2, window_bounds = array<i64: 1, 8, 32>}]} {
    %c0_i32 = arith.constant 0 : i32
    %0 = arith.cmpi eq, %arg2, %c0_i32 : i32
    %1 = arith.extui %0 : i1 to i32
    %c0_i32_0 = arith.constant 0 : i32
    %2 = arith.cmpi ne, %1, %c0_i32_0 : i32
    scf.if %2 {
      %cst_31 = arith.constant 0xFF800000 : f32
      %45 = vector.broadcast %cst_31 : f32 to vector<4x8x1xf32>
      %c0_32 = arith.constant 0 : index
      %c0_33 = arith.constant 0 : index
      %c0_34 = arith.constant 0 : index
      %46 = vector.load %arg6[%c0_32, %c0_33, %c0_34] : memref<4x8x1xf32, #tpu.memory_space<vmem>>, vector<4x8x1xf32>
      tpu.vector_store %arg6[%c0_32, %c0_33, %c0_34], %45 {strides = array<i32>} : memref<4x8x1xf32, #tpu.memory_space<vmem>>, vector<4x8x1xf32>,
      %cst_35 = arith.constant 0.000000e+00 : f32
      %47 = vector.broadcast %cst_35 : f32 to vector<4x8x1xf32>
      %c0_36 = arith.constant 0 : index
      %c0_37 = arith.constant 0 : index
      %c0_38 = arith.constant 0 : index
      %48 = vector.load %arg7[%c0_36, %c0_37, %c0_38] : memref<4x8x1xf32, #tpu.memory_space<vmem>>, vector<4x8x1xf32>
      tpu.vector_store %arg7[%c0_36, %c0_37, %c0_38], %47 {strides = array<i32>} : memref<4x8x1xf32, #tpu.memory_space<vmem>>, vector<4x8x1xf32>,
      %cst_39 = arith.constant 0.000000e+00 : f32
      %49 = vector.broadcast %cst_39 : f32 to vector<4x8x8xf32>
      %c0_40 = arith.constant 0 : index
      %c0_41 = arith.constant 0 : index
      %c0_42 = arith.constant 0 : index
      %50 = vector.load %arg8[%c0_40, %c0_41, %c0_42] : memref<4x8x8xf32, #tpu.memory_space<vmem>>, vector<4x8x8xf32>
      tpu.vector_store %arg8[%c0_40, %c0_41, %c0_42], %49 {strides = array<i32>} : memref<4x8x8xf32, #tpu.memory_space<vmem>>, vector<4x8x8xf32>,
    } else {
    }
    %c0 = arith.constant 0 : index
    %c0_1 = arith.constant 0 : index
    %c0_2 = arith.constant 0 : index
    %3 = vector.load %arg3[%c0, %c0_1, %c0_2] : memref<1x8x32xf32, #tpu.memory_space<vmem>>, vector<1x8x32xf32>
    %4 = vector.shape_cast %3 : vector<1x8x32xf32> to vector<8x32xf32>
    %5 = vector.shape_cast %4 : vector<8x32xf32> to vector<8x4x8xf32>
    %6 = tpu.transpose %5, [1, 0, 2] : vector<8x4x8xf32> -> vector<4x8x8xf32>
    %7 = arith.truncf %6 : vector<4x8x8xf32> to vector<4x8x8xbf16>
    %c0_3 = arith.constant 0 : index
    %c0_4 = arith.constant 0 : index
    %c0_5 = arith.constant 0 : index
    %8 = vector.load %arg4[%c0_3, %c0_4, %c0_5] : memref<1x12x64xf32, #tpu.memory_space<vmem>>, vector<1x12x32xf32>
    %9 = vector.shape_cast %8 : vector<1x12x32xf32> to vector<12x32xf32>
    %10 = vector.shape_cast %9 : vector<12x32xf32> to vector<12x4x8xf32>
    %11 = tpu.transpose %10, [1, 0, 2] : vector<12x4x8xf32> -> vector<4x12x8xf32>
    %12 = arith.truncf %11 : vector<4x12x8xf32> to vector<4x12x8xbf16>
    %c0_6 = arith.constant 0 : index
    %c0_7 = arith.constant 0 : index
    %c32 = arith.constant 32 : index
    %13 = vector.load %arg4[%c0_6, %c0_7, %c32] : memref<1x12x64xf32, #tpu.memory_space<vmem>>, vector<1x12x32xf32>
    %14 = vector.shape_cast %13 : vector<1x12x32xf32> to vector<12x32xf32>
    %15 = vector.shape_cast %14 : vector<12x32xf32> to vector<12x4x8xf32>
    %16 = tpu.transpose %15, [1, 0, 2] : vector<12x4x8xf32> -> vector<4x12x8xf32>
    %17 = arith.truncf %16 : vector<4x12x8xf32> to vector<4x12x8xbf16>
    "tpu.trace_start"() <{level = 10 : i32, message = "hqd,hkd->hqk"}> : () -> ()
    %cst = arith.constant dense<0.000000e+00> : vector<4x8x12xf32>
    %18 = tpu.matmul %7, %12, %cst {dimension_numbers = #tpu.dot_dimension_numbers<[2], [2], [1], [1], [0, 0, 0, 1, 1, 1], [0], [0]>} : vector<4x8x8xbf16>, vector<4x12x8xbf16>, vector<4x8x12xf32> -> vector<4x8x12xf32>
    "tpu.trace_stop"() : () -> ()
    %c0_8 = arith.constant 0 : index
    %c0_9 = arith.constant 0 : index
    %c0_10 = arith.constant 0 : index
    %19 = vector.load %arg6[%c0_8, %c0_9, %c0_10] : memref<4x8x1xf32, #tpu.memory_space<vmem>>, vector<4x8x1xf32>
    %cst_11 = arith.constant dense<0xFF800000> : vector<4x8xf32>
    %20 = vector.multi_reduction <maximumf>, %18, %cst_11 [2] : vector<4x8x12xf32> to vector<4x8xf32>
    %21 = vector.shape_cast %20 : vector<4x8xf32> to vector<4x8x1xf32>
    %22 = arith.maximumf %19, %21 : vector<4x8x1xf32>
    %23 = arith.subf %19, %22 : vector<4x8x1xf32>
    %24 = math.exp %23 : vector<4x8x1xf32>
    %25 = vector.broadcast %22 : vector<4x8x1xf32> to vector<4x8x12xf32>
    %26 = arith.subf %18, %25 : vector<4x8x12xf32>
    %27 = math.exp %26 : vector<4x8x12xf32>
    %c0_12 = arith.constant 0 : index
    %c0_13 = arith.constant 0 : index
    %c0_14 = arith.constant 0 : index
    %28 = vector.load %arg7[%c0_12, %c0_13, %c0_14] : memref<4x8x1xf32, #tpu.memory_space<vmem>>, vector<4x8x1xf32>
    %29 = arith.mulf %24, %28 : vector<4x8x1xf32>
    %cst_15 = arith.constant dense<0.000000e+00> : vector<4x8xf32>
    %30 = vector.multi_reduction <add>, %27, %cst_15 [2] : vector<4x8x12xf32> to vector<4x8xf32>
    %31 = vector.shape_cast %30 : vector<4x8xf32> to vector<4x8x1xf32>
    %32 = arith.addf %29, %31 : vector<4x8x1xf32>
    %c0_16 = arith.constant 0 : index
    %c0_17 = arith.constant 0 : index
    %c0_18 = arith.constant 0 : index
    %33 = vector.load %arg7[%c0_16, %c0_17, %c0_18] : memref<4x8x1xf32, #tpu.memory_space<vmem>>, vector<4x8x1xf32>
    tpu.vector_store %arg7[%c0_16, %c0_17, %c0_18], %32 {strides = array<i32>} : memref<4x8x1xf32, #tpu.memory_space<vmem>>, vector<4x8x1xf32>,
    %c0_19 = arith.constant 0 : index
    %c0_20 = arith.constant 0 : index
    %c0_21 = arith.constant 0 : index
    %34 = vector.load %arg8[%c0_19, %c0_20, %c0_21] : memref<4x8x8xf32, #tpu.memory_space<vmem>>, vector<4x8x8xf32>
    %35 = vector.broadcast %24 : vector<4x8x1xf32> to vector<4x8x8xf32>
    %36 = arith.mulf %35, %34 : vector<4x8x8xf32>
    %37 = arith.truncf %27 : vector<4x8x12xf32> to vector<4x8x12xbf16>
    "tpu.trace_start"() <{level = 10 : i32, message = "hqk,hkd->hqd"}> : () -> ()
    %cst_22 = arith.constant dense<0.000000e+00> : vector<4x8x8xf32>
    %38 = tpu.matmul %37, %17, %cst_22 {dimension_numbers = #tpu.dot_dimension_numbers<[2], [1], [1], [2], [0, 0, 0, 1, 1, 2], [0], [0]>} : vector<4x8x12xbf16>, vector<4x12x8xbf16>, vector<4x8x8xf32> -> vector<4x8x8xf32>
    "tpu.trace_stop"() : () -> ()
    %39 = arith.addf %36, %38 : vector<4x8x8xf32>
    %c0_23 = arith.constant 0 : index
    %c0_24 = arith.constant 0 : index
    %c0_25 = arith.constant 0 : index
    %40 = vector.load %arg8[%c0_23, %c0_24, %c0_25] : memref<4x8x8xf32, #tpu.memory_space<vmem>>, vector<4x8x8xf32>
    tpu.vector_store %arg8[%c0_23, %c0_24, %c0_25], %39 {strides = array<i32>} : memref<4x8x8xf32, #tpu.memory_space<vmem>>, vector<4x8x8xf32>,
    %c0_26 = arith.constant 0 : index
    %c0_27 = arith.constant 0 : index
    %c0_28 = arith.constant 0 : index
    %41 = vector.load %arg6[%c0_26, %c0_27, %c0_28] : memref<4x8x1xf32, #tpu.memory_space<vmem>>, vector<4x8x1xf32>
    tpu.vector_store %arg6[%c0_26, %c0_27, %c0_28], %22 {strides = array<i32>} : memref<4x8x1xf32, #tpu.memory_space<vmem>>, vector<4x8x1xf32>,
    %c0_i32_29 = arith.constant 0 : i32
    %42 = arith.cmpi eq, %arg2, %c0_i32_29 : i32
    %43 = arith.extui %42 : i1 to i32
    %c0_i32_30 = arith.constant 0 : i32
    %44 = arith.cmpi ne, %43, %c0_i32_30 : i32
    scf.if %44 {
      %c0_31 = arith.constant 0 : index
      %c0_32 = arith.constant 0 : index
      %c0_33 = arith.constant 0 : index
      %45 = vector.load %arg8[%c0_31, %c0_32, %c0_33] : memref<4x8x8xf32, #tpu.memory_space<vmem>>, vector<4x8x8xf32>
      %c0_34 = arith.constant 0 : index
      %c0_35 = arith.constant 0 : index
      %c0_36 = arith.constant 0 : index
      %46 = vector.load %arg7[%c0_34, %c0_35, %c0_36] : memref<4x8x1xf32, #tpu.memory_space<vmem>>, vector<4x8x1xf32>
      %47 = vector.broadcast %46 : vector<4x8x1xf32> to vector<4x8x8xf32>
      %48 = arith.divf %45, %47 : vector<4x8x8xf32>
      %49 = tpu.transpose %48, [1, 0, 2] : vector<4x8x8xf32> -> vector<8x4x8xf32>
      %50 = vector.shape_cast %49 : vector<8x4x8xf32> to vector<8x32xf32>
      %c0_37 = arith.constant 0 : index
      %c0_38 = arith.constant 0 : index
      %c0_39 = arith.constant 0 : index
      %51 = vector.load %arg5[%c0_37, %c0_38, %c0_39] : memref<1x8x32xf32, #tpu.memory_space<vmem>>, vector<1x8x32xf32>
      %52 = vector.shape_cast %51 : vector<1x8x32xf32> to vector<8x32xf32>
      %53 = vector.shape_cast %50 : vector<8x32xf32> to vector<1x8x32xf32>
      tpu.vector_store %arg5[%c0_37, %c0_38, %c0_39], %53 {strides = array<i32>} : memref<1x8x32xf32, #tpu.memory_space<vmem>>, vector<1x8x32xf32>,
    } else {
    }
    return
  }
  func.func @transform_0(%arg0: i32, %arg1: i32, %arg2: i32) -> (i32, i32, i32) {
    %c0_i32 = arith.constant 0 : i32
    %c0_i32_0 = arith.constant 0 : i32
    return %arg0, %arg1, %c0_i32 : i32, i32, i32
  }
  func.func @transform_1(%arg0: i32, %arg1: i32, %arg2: i32) -> (i32, i32, i32) {
    %c0_i32 = arith.constant 0 : i32
    %c0_i32_0 = arith.constant 0 : i32
    return %arg0, %arg2, %c0_i32 : i32, i32, i32
  }
  func.func @transform_2(%arg0: i32, %arg1: i32, %arg2: i32) -> (i32, i32, i32) {
    %c0_i32 = arith.constant 0 : i32
    %c0_i32_0 = arith.constant 0 : i32
    return %arg0, %arg1, %c0_i32 : i32, i32, i32
  }
}

</mosaic_0001>

<llo_original>
// kernel: decoder_layer_forward.7
$region0: #{decoder_layer_forward.7}
  #allocation0 [shape = 'u32[]', space=smem, size = 0x4, offset = 0x4, fixed_abs, tag = 'smem constant byte address 0x4 - core index']
  #allocation1 [shape = 'u32[144,128]{1,0:T(1,128)}', space=vmem, size = 0x12000, scoped, tag = 'internal scratch']
  %s0 = inlined_call_operand.vmem [shape: f32[16,32], index: 0, kind: input, shape index: {}]
  %s1 = inlined_call_operand.vmem [shape: bf16[32,96], index: 1, kind: input, shape index: {}]
  %s2 = inlined_call_operand.vmem [shape: f32[1,96], index: 2, kind: input, shape index: {}]
  %s3 = inlined_call_operand.vmem [shape: f32[16,96], index: 3, kind: output, shape index: {}]
  %s4 = sld [smem:[#allocation0]]
  $region22: #{decoder_layer_forward.7} parent=0
    _
  %s6 = ssub.s32 1, %s4
  %s7 = scalar_select 0, %s6, %s4
  // Predicated region
  $region2: #{decoder_layer_forward.7} parent=0 // pred_check
    _
  $region3: #{decoder_layer_forward.7} parent=0 // pred_check_branch
    %9 = sbr.rel (0) target = $region5
  $region4: #{decoder_layer_forward.7} parent=0 // pred_region
    _
  $region5: #{decoder_layer_forward.7} parent=0 // pred_fallthru
    _
  // Predicated region
  $region6: #{decoder_layer_forward.7} parent=0 // pred_check
    _
  $region7: #{decoder_layer_forward.7} parent=0 // pred_check_branch
    %11 = sbr.rel (0) target = $region9
  $region8: #{decoder_layer_forward.7} parent=0 // pred_region
    _
  $region9: #{decoder_layer_forward.7} parent=0 // pred_fallthru
    _
  // Predicated region
  $region10: #{decoder_layer_forward.7} parent=0 // pred_check
    _
  $region11: #{decoder_layer_forward.7} parent=0 // pred_check_branch
    %13 = sbr.rel (0) target = $region13
  $region12: #{decoder_layer_forward.7} parent=0 // pred_region
    _
  $region13: #{decoder_layer_forward.7} parent=0 // pred_fallthru
    _
  %v15 = vld [vmem:[%s0] sm:$0xff]
  %v16 = vld [vmem:[%s0 + $0x8] sm:$0xff]
  %v17 = vpack.c.bf16 %v16, %v15
  %v18 = vld [vmem:[%s1] sm:$0xf]
  %v19 = vld [vmem:[%s1 + $0x4] sm:$0xf]
  %v20 = vld [vmem:[%s1 + $0x8] sm:$0xf]
  %v21 = vld [vmem:[%s1 + $0xc] sm:$0xf]
  %v22 = vld [vmem:[%s2] sm:$0x1]
  %v24 = vlaneseq
  %v25 = vshrl.u32 %v24, 7
  %v26 = vsub.s32 0, %v25
  %v27 = vrot.slane %v22, %v26
  %v33 = vunpack.c.l.b16 %v18
  %v34 = vunpack.c.l.b16 %v19
  %v35 = vunpack.c.l.b16 %v20
  %v36 = vunpack.c.l.b16 %v21
  %v37 = vpack.c.b16 %v34, %v33
  %v38 = vpack.c.b16 %v36, %v35
  %vm41 = vcmask 261120
  %v43 = vsel %vm41, %v17, 0
  %45 = vmatprep.subr.bf16.mxu0 0
  %46 = vmatpush1.bf16.msra.mxu0 0
  %47 = vmatprep.subr.bf16.mxu0 0
  %48 = vmatpush1.bf16.msra.mxu0 0
  %49 = vmatprep.subr.bf16.mxu0 0
  %50 = vmatpush1.bf16.msra.mxu0 0
  %51 = vmatprep.subr.bf16.mxu0 0
  %52 = vmatpush1.bf16.msra.mxu0 0
  %53 = vmatprep.subr.bf16.mxu0 0
  %54 = vmatpush1.bf16.msra.mxu0 0
  %55 = vmatprep.subr.bf16.mxu0 0
  %56 = vmatpush1.bf16.msra.mxu0 0
  %57 = vmatprep.subr.bf16.mxu0 0
  %58 = vmatpush1.bf16.msra.mxu0 %v38
  %59 = vmatprep.subr.bf16.mxu0 0
  %60 = vmatpush1.bf16.msra.mxu0 %v37
  %61 = vmatprep.subr.bf16.mxu0 0
  %62 = vmatpush2.bf16.msra.mxu0 0
  %63 = vmatprep.subr.bf16.mxu0 0
  %64 = vmatpush2.bf16.msra.mxu0 0
  %65 = vmatprep.subr.bf16.mxu0 0
  %66 = vmatpush2.bf16.msra.mxu0 0
  %67 = vmatprep.subr.bf16.mxu0 0
  %68 = vmatpush2.bf16.msra.mxu0 0
  %69 = vmatprep.subr.bf16.mxu0 0
  %70 = vmatpush2.bf16.msra.mxu0 0
  %71 = vmatprep.subr.bf16.mxu0 0
  %72 = vmatpush2.bf16.msra.mxu0 0
  %73 = vmatprep.subr.bf16.mxu0 0
  %74 = vmatpush2.bf16.msra.mxu0 0
  %75 = vmatprep.subr.bf16.mxu0 0
  %76 = vmatpush2.bf16.msra.mxu0 0
  %77 = vmatprep.mubr.bf16.mxu0 0
  %78 = vmatmul.mubr.bf16.gmra.mxu0 %v43
  %v79 = vpop.f32.mrf.mxu0
  %v80 = vadd.f32 %v27, %v79
  %v81 = vpop.f32.mrf.mxu0
  %v82 = vpop.f32.mrf.mxu0
  %v83 = vadd.f32 %v27, %v82
  %v84 = vpop.f32.mrf.mxu0
  %85 = vdwg.mxu0
  %vm86 = vcmask 785408
  %87 = vst.msk [vmem:[%s3] sm:$0xff] %vm86, %v80
  %88 = vst.msk [vmem:[%s3 + $0x8] sm:$0xff] %vm86, %v83
  // Predicated region
  $region14: #{decoder_layer_forward.7} parent=0 // pred_check
    _
  $region15: #{decoder_layer_forward.7} parent=0 // pred_check_branch
    %90 = sbr.rel (0) target = $region17
  $region16: #{decoder_layer_forward.7} parent=0 // pred_region
    _
  $region17: #{decoder_layer_forward.7} parent=0 // pred_fallthru
    _
  // Predicated region
  $region18: #{decoder_layer_forward.7} parent=0 // pred_check
    _
  $region19: #{decoder_layer_forward.7} parent=0 // pred_check_branch
    %92 = sbr.rel (0) target = $region21
  $region20: #{decoder_layer_forward.7} parent=0 // pred_region
    _
  $region21: #{decoder_layer_forward.7} parent=0 // pred_fallthru
    _

// kernel: decoder_layer_forward.9
$region0: #{decoder_layer_forward.9}
  #allocation0 [shape = 'u32[]', space=smem, size = 0x4, offset = 0x4, fixed_abs, tag = 'smem constant byte address 0x4 - core index']
  #allocation1 [shape = 'u32[144,128]{1,0:T(1,128)}', space=vmem, size = 0x12000, scoped, tag = 'internal scratch']
  %s0 = inlined_call_operand.vmem [shape: f32[16,32], index: 0, kind: input, shape index: {}]
  %s1 = inlined_call_operand.vmem [shape: f32[16,32], index: 1, kind: input, shape index: {}]
  %s2 = inlined_call_operand.vmem [shape: bf16[32,32], index: 2, kind: input, shape index: {}]
  %s3 = inlined_call_operand.vmem [shape: f32[1,32], index: 3, kind: input, shape index: {}]
  %s4 = inlined_call_operand.vmem [shape: f32[1,32], index: 4, kind: input, shape index: {}]
  %s5 = inlined_call_operand.vmem [shape: f32[1,32], index: 5, kind: input, shape index: {}]
  %s6 = inlined_call_operand.vmem [shape: bf16[32,32], index: 6, kind: input, shape index: {}]
  %s7 = inlined_call_operand.vmem [shape: f32[1,32], index: 7, kind: input, shape index: {}]
  %s8 = inlined_call_operand.vmem [shape: f32[16,32], index: 8, kind: output, shape index: {0}]
  %s9 = inlined_call_operand.vmem [shape: f32[16,32], index: 9, kind: output, shape index: {1}]
  %10 = xla_tuple %s8, %s9
  %s11 = sld [smem:[#allocation0]]
  $region50: #{decoder_layer_forward.9} parent=0
    _
  %s13 = ssub.s32 1, %s11
  %s14 = scalar_select 0, %s13, %s11
  // Predicated region
  $region2: #{decoder_layer_forward.9} parent=0 // pred_check
    _
  $region3: #{decoder_layer_forward.9} parent=0 // pred_check_branch
    %16 = sbr.rel (0) target = $region5
  $region4: #{decoder_layer_forward.9} parent=0 // pred_region
    _
  $region5: #{decoder_layer_forward.9} parent=0 // pred_fallthru
    _
  // Predicated region
  $region6: #{decoder_layer_forward.9} parent=0 // pred_check
    _
  $region7: #{decoder_layer_forward.9} parent=0 // pred_check_branch
    %18 = sbr.rel (0) target = $region9
  $region8: #{decoder_layer_forward.9} parent=0 // pred_region
    _
  $region9: #{decoder_layer_forward.9} parent=0 // pred_fallthru
    _
  // Predicated region
  $region10: #{decoder_layer_forward.9} parent=0 // pred_check
    _
  $region11: #{decoder_layer_forward.9} parent=0 // pred_check_branch
    %20 = sbr.rel (0) target = $region13
  $region12: #{decoder_layer_forward.9} parent=0 // pred_region
    _
  $region13: #{decoder_layer_forward.9} parent=0 // pred_fallthru
    _
  // Predicated region
  $region14: #{decoder_layer_forward.9} parent=0 // pred_check
    _
  $region15: #{decoder_layer_forward.9} parent=0 // pred_check_branch
    %22 = sbr.rel (0) target = $region17
  $region16: #{decoder_layer_forward.9} parent=0 // pred_region
    _
  $region17: #{decoder_layer_forward.9} parent=0 // pred_fallthru
    _
  // Predicated region
  $region18: #{decoder_layer_forward.9} parent=0 // pred_check
    _
  $region19: #{decoder_layer_forward.9} parent=0 // pred_check_branch
    %24 = sbr.rel (0) target = $region21
  $region20: #{decoder_layer_forward.9} parent=0 // pred_region
    _
  $region21: #{decoder_layer_forward.9} parent=0 // pred_fallthru
    _
  // Predicated region
  $region22: #{decoder_layer_forward.9} parent=0 // pred_check
    _
  $region23: #{decoder_layer_forward.9} parent=0 // pred_check_branch
    %26 = sbr.rel (0) target = $region25
  $region24: #{decoder_layer_forward.9} parent=0 // pred_region
    _
  $region25: #{decoder_layer_forward.9} parent=0 // pred_fallthru
    _
  // Predicated region
  $region26: #{decoder_layer_forward.9} parent=0 // pred_check
    _
  $region27: #{decoder_layer_forward.9} parent=0 // pred_check_branch
    %28 = sbr.rel (0) target = $region29
  $region28: #{decoder_layer_forward.9} parent=0 // pred_region
    _
  $region29: #{decoder_layer_forward.9} parent=0 // pred_fallthru
    _
  // Predicated region
  $region30: #{decoder_layer_forward.9} parent=0 // pred_check
    _
  $region31: #{decoder_layer_forward.9} parent=0 // pred_check_branch
    %30 = sbr.rel (0) target = $region33
  $region32: #{decoder_layer_forward.9} parent=0 // pred_region
    _
  $region33: #{decoder_layer_forward.9} parent=0 // pred_fallthru
    _
  %v32 = vld [vmem:[%s0] sm:$0xff]
  %v33 = vld [vmem:[%s0 + $0x8] sm:$0xff]
  %v34 = vpack.c.bf16 %v33, %v32
  %v35 = vld [vmem:[%s2] sm:$0xf]
  %v36 = vld [vmem:[%s2 + $0x4] sm:$0xf]
  %v37 = vld [vmem:[%s2 + $0x8] sm:$0xf]
  %v38 = vld [vmem:[%s2 + $0xc] sm:$0xf]
  %v39 = vld [vmem:[%s3] sm:$0x1]
  %v41 = vlaneseq
  %v42 = vshrl.u32 %v41, 7
  %v43 = vsub.s32 0, %v42
  %v44 = vrot.slane %v39, %v43
  %v50 = vunpack.c.l.b16 %v35
  %v51 = vunpack.c.l.b16 %v36
  %v52 = vunpack.c.l.b16 %v37
  %v53 = vunpack.c.l.b16 %v38
  %v54 = vpack.c.b16 %v51, %v50
  %v55 = vpack.c.b16 %v53, %v52
  %vm58 = vcmask 261120
  %v60 = vsel %vm58, %v34, 0
  %62 = vmatprep.subr.bf16.mxu0 0
  %63 = vmatpush1.bf16.msra.mxu0 0
  %64 = vmatprep.subr.bf16.mxu0 0
  %65 = vmatpush1.bf16.msra.mxu0 0
  %66 = vmatprep.subr.bf16.mxu0 0
  %67 = vmatpush1.bf16.msra.mxu0 0
  %68 = vmatprep.subr.bf16.mxu0 0
  %69 = vmatpush1.bf16.msra.mxu0 0
  %70 = vmatprep.subr.bf16.mxu0 0
  %71 = vmatpush1.bf16.msra.mxu0 0
  %72 = vmatprep.subr.bf16.mxu0 0
  %73 = vmatpush1.bf16.msra.mxu0 0
  %74 = vmatprep.subr.bf16.mxu0 0
  %75 = vmatpush1.bf16.msra.mxu0 %v55
  %76 = vmatprep.subr.bf16.mxu0 0
  %77 = vmatpush1.bf16.msra.mxu0 %v54
  %78 = vmatprep.subr.bf16.mxu0 0
  %79 = vmatpush2.bf16.msra.mxu0 0
  %80 = vmatprep.subr.bf16.mxu0 0
  %81 = vmatpush2.bf16.msra.mxu0 0
  %82 = vmatprep.subr.bf16.mxu0 0
  %83 = vmatpush2.bf16.msra.mxu0 0
  %84 = vmatprep.subr.bf16.mxu0 0
  %85 = vmatpush2.bf16.msra.mxu0 0
  %86 = vmatprep.subr.bf16.mxu0 0
  %87 = vmatpush2.bf16.msra.mxu0 0
  %88 = vmatprep.subr.bf16.mxu0 0
  %89 = vmatpush2.bf16.msra.mxu0 0
  %90 = vmatprep.subr.bf16.mxu0 0
  %91 = vmatpush2.bf16.msra.mxu0 0
  %92 = vmatprep.subr.bf16.mxu0 0
  %93 = vmatpush2.bf16.msra.mxu0 0
  %94 = vmatprep.mubr.bf16.mxu0 0
  %95 = vmatmul.mubr.bf16.gmra.mxu0 %v60
  %v96 = vpop.f32.mrf.mxu0
  %v97 = vadd.f32 %v44, %v96
  %v98 = vpop.f32.mrf.mxu0
  %v99 = vpop.f32.mrf.mxu0
  %v100 = vadd.f32 %v44, %v99
  %v101 = vpop.f32.mrf.mxu0
  %102 = vdwg.mxu0
  %v103 = vld [vmem:[%s1] sm:$0xff]
  %v104 = vld [vmem:[%s1 + $0x8] sm:$0xff]
  %v105 = vadd.f32 %v97, %v103
  %v106 = vadd.f32 %v100, %v104
  %v107 = vsel %vm58, %v105, 0.0
  %108 = vadd.xlane.f32.xlu0 %v107
  %v109 = vpop.xlane.xlu0 %108
  %v110 = vsel %vm58, %v106, 0.0
  %111 = vadd.xlane.f32.xlu0 %v110
  %v112 = vpop.xlane.xlu0 %111
  %v113 = vrcp.pop 32.0
  %v114 = vmul.f32 %v109, %v113
  %v115 = vmul.f32 %v112, %v113
  %v116 = vsub.f32 %v105, %v114
  %v117 = vsub.f32 %v106, %v115
  %v118 = vmul.f32 %v116, %v116
  %v119 = vmul.f32 %v117, %v117
  %v120 = vsel %vm58, %v118, 0.0
  %121 = vadd.xlane.f32.xlu0 %v120
  %v122 = vpop.xlane.xlu0 %121
  %v123 = vsel %vm58, %v119, 0.0
  %124 = vadd.xlane.f32.xlu0 %v123
  %v125 = vpop.xlane.xlu0 %124
  %v126 = vmul.f32 %v122, %v113
  %v127 = vmul.f32 %v125, %v113
  %v128 = vadd.f32 %v126, 1e-05
  %v129 = vadd.f32 %v127, 1e-05
  %v130 = vrsqrt.pop %v128
  %v131 = vrsqrt.pop %v129
  %v132 = vmul.f32 %v116, %v130
  %v133 = vmul.f32 %v117, %v131
  %v134 = vld [vmem:[%s4] sm:$0x1]
  %v136 = vlaneseq
  %v137 = vshrl.u32 %v136, 7
  %v138 = vsub.s32 0, %v137
  %v139 = vrot.slane %v134, %v138
  %v141 = vmul.f32 %v132, %v139
  %v142 = vmul.f32 %v133, %v139
  %v143 = vld [vmem:[%s5] sm:$0x1]
  %v145 = vlaneseq
  %v146 = vshrl.u32 %v145, 7
  %v147 = vsub.s32 0, %v146
  %v148 = vrot.slane %v143, %v147
  %v150 = vadd.f32 %v141, %v148
  %v151 = vadd.f32 %v142, %v148
  %152 = vst.msk [vmem:[%s8] sm:$0xff] %vm58, %v150
  %153 = vst.msk [vmem:[%s8 + $0x8] sm:$0xff] %vm58, %v151
  %v154 = vpack.c.bf16 %v151, %v150
  %v155 = vld [vmem:[%s6] sm:$0xf]
  %v156 = vld [vmem:[%s6 + $0x4] sm:$0xf]
  %v157 = vld [vmem:[%s6 + $0x8] sm:$0xf]
  %v158 = vld [vmem:[%s6 + $0xc] sm:$0xf]
  %v159 = vld [vmem:[%s7] sm:$0x1]
  %v161 = vlaneseq
  %v162 = vshrl.u32 %v161, 7
  %v163 = vsub.s32 0, %v162
  %v164 = vrot.slane %v159, %v163
  %v170 = vunpack.c.l.b16 %v155
  %v171 = vunpack.c.l.b16 %v156
  %v172 = vunpack.c.l.b16 %v157
  %v173 = vunpack.c.l.b16 %v158
  %v174 = vpack.c.b16 %v171, %v170
  %v175 = vpack.c.b16 %v173, %v172
  %v179 = vsel %vm58, %v154, 0
  %181 = vmatprep.subr.bf16.mxu0 0
  %182 = vmatpush1.bf16.msra.mxu0 0
  %183 = vmatprep.subr.bf16.mxu0 0
  %184 = vmatpush1.bf16.msra.mxu0 0
  %185 = vmatprep.subr.bf16.mxu0 0
  %186 = vmatpush1.bf16.msra.mxu0 0
  %187 = vmatprep.subr.bf16.mxu0 0
  %188 = vmatpush1.bf16.msra.mxu0 0
  %189 = vmatprep.subr.bf16.mxu0 0
  %190 = vmatpush1.bf16.msra.mxu0 0
  %191 = vmatprep.subr.bf16.mxu0 0
  %192 = vmatpush1.bf16.msra.mxu0 0
  %193 = vmatprep.subr.bf16.mxu0 0
  %194 = vmatpush1.bf16.msra.mxu0 %v175
  %195 = vmatprep.subr.bf16.mxu0 0
  %196 = vmatpush1.bf16.msra.mxu0 %v174
  %197 = vmatprep.subr.bf16.mxu0 0
  %198 = vmatpush2.bf16.msra.mxu0 0
  %199 = vmatprep.subr.bf16.mxu0 0
  %200 = vmatpush2.bf16.msra.mxu0 0
  %201 = vmatprep.subr.bf16.mxu0 0
  %202 = vmatpush2.bf16.msra.mxu0 0
  %203 = vmatprep.subr.bf16.mxu0 0
  %204 = vmatpush2.bf16.msra.mxu0 0
  %205 = vmatprep.subr.bf16.mxu0 0
  %206 = vmatpush2.bf16.msra.mxu0 0
  %207 = vmatprep.subr.bf16.mxu0 0
  %208 = vmatpush2.bf16.msra.mxu0 0
  %209 = vmatprep.subr.bf16.mxu0 0
  %210 = vmatpush2.bf16.msra.mxu0 0
  %211 = vmatprep.subr.bf16.mxu0 0
  %212 = vmatpush2.bf16.msra.mxu0 0
  %213 = vmatprep.mubr.bf16.mxu0 0
  %214 = vmatmul.mubr.bf16.gmra.mxu0 %v179
  %v215 = vpop.f32.mrf.mxu0
  %v216 = vadd.f32 %v164, %v215
  %v217 = vpop.f32.mrf.mxu0
  %v218 = vpop.f32.mrf.mxu0
  %v219 = vadd.f32 %v164, %v218
  %v220 = vpop.f32.mrf.mxu0
  %221 = vdwg.mxu0
  %222 = vst.msk [vmem:[%s9] sm:$0xff] %vm58, %v216
  %223 = vst.msk [vmem:[%s9 + $0x8] sm:$0xff] %vm58, %v219
  // Predicated region
  $region34: #{decoder_layer_forward.9} parent=0 // pred_check
    _
  $region35: #{decoder_layer_forward.9} parent=0 // pred_check_branch
    %225 = sbr.rel (0) target = $region37
  $region36: #{decoder_layer_forward.9} parent=0 // pred_region
    _
  $region37: #{decoder_layer_forward.9} parent=0 // pred_fallthru
    _
  // Predicated region
  $region38: #{decoder_layer_forward.9} parent=0 // pred_check
    _
  $region39: #{decoder_layer_forward.9} parent=0 // pred_check_branch
    %227 = sbr.rel (0) target = $region41
  $region40: #{decoder_layer_forward.9} parent=0 // pred_region
    _
  $region41: #{decoder_layer_forward.9} parent=0 // pred_fallthru
    _
  // Predicated region
  $region42: #{decoder_layer_forward.9} parent=0 // pred_check
    _
  $region43: #{decoder_layer_forward.9} parent=0 // pred_check_branch
    %229 = sbr.rel (0) target = $region45
  $region44: #{decoder_layer_forward.9} parent=0 // pred_region
    _
  $region45: #{decoder_layer_forward.9} parent=0 // pred_fallthru
    _
  // Predicated region
  $region46: #{decoder_layer_forward.9} parent=0 // pred_check
    _
  $region47: #{decoder_layer_forward.9} parent=0 // pred_check_branch
    %231 = sbr.rel (0) target = $region49
  $region48: #{decoder_layer_forward.9} parent=0 // pred_region
    _
  $region49: #{decoder_layer_forward.9} parent=0 // pred_fallthru
    _

// kernel: decoder_layer_forward.10
$region0: #{decoder_layer_forward.10}
  #allocation0 [shape = 'u32[]', space=smem, size = 0x4, offset = 0x4, fixed_abs, tag = 'smem constant byte address 0x4 - core index']
  #allocation1 [shape = 'u32[144,128]{1,0:T(1,128)}', space=vmem, size = 0x12000, scoped, tag = 'internal scratch']
  %s0 = inlined_call_operand.vmem [shape: f32[24,32], index: 0, kind: input, shape index: {}]
  %s1 = inlined_call_operand.vmem [shape: bf16[32,64], index: 1, kind: input, shape index: {}]
  %s2 = inlined_call_operand.vmem [shape: f32[1,64], index: 2, kind: input, shape index: {}]
  %s3 = inlined_call_operand.vmem [shape: f32[24,64], index: 3, kind: output, shape index: {}]
  %s4 = sld [smem:[#allocation0]]
  $region22: #{decoder_layer_forward.10} parent=0
    _
  %s6 = ssub.s32 1, %s4
  %s7 = scalar_select 0, %s6, %s4
  // Predicated region
  $region2: #{decoder_layer_forward.10} parent=0 // pred_check
    _
  $region3: #{decoder_layer_forward.10} parent=0 // pred_check_branch
    %9 = sbr.rel (0) target = $region5
  $region4: #{decoder_layer_forward.10} parent=0 // pred_region
    _
  $region5: #{decoder_layer_forward.10} parent=0 // pred_fallthru
    _
  // Predicated region
  $region6: #{decoder_layer_forward.10} parent=0 // pred_check
    _
  $region7: #{decoder_layer_forward.10} parent=0 // pred_check_branch
    %11 = sbr.rel (0) target = $region9
  $region8: #{decoder_layer_forward.10} parent=0 // pred_region
    _
  $region9: #{decoder_layer_forward.10} parent=0 // pred_fallthru
    _
  // Predicated region
  $region10: #{decoder_layer_forward.10} parent=0 // pred_check
    _
  $region11: #{decoder_layer_forward.10} parent=0 // pred_check_branch
    %13 = sbr.rel (0) target = $region13
  $region12: #{decoder_layer_forward.10} parent=0 // pred_region
    _
  $region13: #{decoder_layer_forward.10} parent=0 // pred_fallthru
    _
  %v15 = vld [vmem:[%s0] sm:$0xff]
  %v16 = vld [vmem:[%s0 + $0x8] sm:$0xff]
  %v17 = vld [vmem:[%s0 + $0x10] sm:$0xff]
  %v18 = vpack.c.bf16 %v16, %v15
  %v19 = vpack.c.bf16 %v17, %v17
  %v20 = vld [vmem:[%s1] sm:$0xf]
  %v21 = vld [vmem:[%s1 + $0x4] sm:$0xf]
  %v22 = vld [vmem:[%s1 + $0x8] sm:$0xf]
  %v23 = vld [vmem:[%s1 + $0xc] sm:$0xf]
  %v24 = vld [vmem:[%s2] sm:$0x1]
  %v26 = vlaneseq
  %v27 = vshrl.u32 %v26, 7
  %v28 = vsub.s32 0, %v27
  %v29 = vrot.slane %v24, %v28
  %v35 = vunpack.c.l.b16 %v20
  %v36 = vunpack.c.l.b16 %v21
  %v37 = vunpack.c.l.b16 %v22
  %v38 = vunpack.c.l.b16 %v23
  %v39 = vpack.c.b16 %v36, %v35
  %v40 = vpack.c.b16 %v38, %v37
  %vm43 = vcmask 261120
  %v45 = vsel %vm43, %v18, 0
  %v48 = vsel %vm43, %v19, 0
  %50 = vmatprep.subr.bf16.mxu0 0
  %51 = vmatpush1.bf16.msra.mxu0 0
  %52 = vmatprep.subr.bf16.mxu0 0
  %53 = vmatpush1.bf16.msra.mxu0 0
  %54 = vmatprep.subr.bf16.mxu0 0
  %55 = vmatpush1.bf16.msra.mxu0 0
  %56 = vmatprep.subr.bf16.mxu0 0
  %57 = vmatpush1.bf16.msra.mxu0 0
  %58 = vmatprep.subr.bf16.mxu0 0
  %59 = vmatpush1.bf16.msra.mxu0 0
  %60 = vmatprep.subr.bf16.mxu0 0
  %61 = vmatpush1.bf16.msra.mxu0 0
  %62 = vmatprep.subr.bf16.mxu0 0
  %63 = vmatpush1.bf16.msra.mxu0 %v40
  %64 = vmatprep.subr.bf16.mxu0 0
  %65 = vmatpush1.bf16.msra.mxu0 %v39
  %66 = vmatprep.subr.bf16.mxu0 0
  %67 = vmatpush2.bf16.msra.mxu0 0
  %68 = vmatprep.subr.bf16.mxu0 0
  %69 = vmatpush2.bf16.msra.mxu0 0
  %70 = vmatprep.subr.bf16.mxu0 0
  %71 = vmatpush2.bf16.msra.mxu0 0
  %72 = vmatprep.subr.bf16.mxu0 0
  %73 = vmatpush2.bf16.msra.mxu0 0
  %74 = vmatprep.subr.bf16.mxu0 0
  %75 = vmatpush2.bf16.msra.mxu0 0
  %76 = vmatprep.subr.bf16.mxu0 0
  %77 = vmatpush2.bf16.msra.mxu0 0
  %78 = vmatprep.subr.bf16.mxu0 0
  %79 = vmatpush2.bf16.msra.mxu0 0
  %80 = vmatprep.subr.bf16.mxu0 0
  %81 = vmatpush2.bf16.msra.mxu0 0
  %82 = vmatprep.mubr.bf16.mxu0 0
  %83 = vmatmul.mubr.bf16.gmra.mxu0 %v45
  %v84 = vpop.f32.mrf.mxu0
  %v85 = vadd.f32 %v29, %v84
  %v86 = vpop.f32.mrf.mxu0
  %v87 = vpop.f32.mrf.mxu0
  %v88 = vadd.f32 %v29, %v87
  %v89 = vpop.f32.mrf.mxu0
  %90 = vmatprep.mubr.bf16.mxu0 0
  %91 = vmatmul.mubr.bf16.gmra.mxu0 %v48
  %v92 = vpop.f32.mrf.mxu0
  %v93 = vadd.f32 %v29, %v92
  %v94 = vpop.f32.mrf.mxu0
  %v95 = vpop.f32.mrf.mxu0
  %v96 = vpop.f32.mrf.mxu0
  %97 = vdwg.mxu0
  %vm98 = vcmask 523264
  %99 = vst.msk [vmem:[%s3] sm:$0xff] %vm98, %v85
  %100 = vst.msk [vmem:[%s3 + $0x8] sm:$0xff] %vm98, %v88
  %101 = vst.msk [vmem:[%s3 + $0x10] sm:$0xff] %vm98, %v93
  // Predicated region
  $region14: #{decoder_layer_forward.10} parent=0 // pred_check
    _
  $region15: #{decoder_layer_forward.10} parent=0 // pred_check_branch
    %103 = sbr.rel (0) target = $region17
  $region16: #{decoder_layer_forward.10} parent=0 // pred_region
    _
  $region17: #{decoder_layer_forward.10} parent=0 // pred_fallthru
    _
  // Predicated region
  $region18: #{decoder_layer_forward.10} parent=0 // pred_check
    _
  $region19: #{decoder_layer_forward.10} parent=0 // pred_check_branch
    %105 = sbr.rel (0) target = $region21
  $region20: #{decoder_layer_forward.10} parent=0 // pred_region
    _
  $region21: #{decoder_layer_forward.10} parent=0 // pred_fallthru
    _

// kernel: decoder_layer_forward.8
$region0: #{decoder_layer_forward.8}
  #allocation0 [shape = 'u32[]', space=smem, size = 0x4, offset = 0x4, fixed_abs, tag = 'smem constant byte address 0x4 - core index']
  #allocation1 [shape = 'u32[144,128]{1,0:T(1,128)}', space=vmem, size = 0x12000, scoped, tag = 'internal scratch']
  #allocation2 [shape = 'f32[4,8,1]{2,1,0:T(8,128)}', space=vmem, size = 0x4000, scoped, tag = 'scratch operand']
  #allocation3 [shape = 'f32[4,8,1]{2,1,0:T(8,128)}', space=vmem, size = 0x4000, scoped, tag = 'scratch operand']
  #allocation4 [shape = 'f32[4,8,8]{2,1,0:T(8,128)}', space=vmem, size = 0x4000, scoped, tag = 'scratch operand']
  %s0 = inlined_call_operand.vmem [shape: f32[2,8,96], index: 0, kind: input, shape index: {}, may-alias: {0,1}]
  %s1 = inlined_call_operand.vmem [shape: f32[2,8,96], index: 1, kind: input, shape index: {}, may-alias: {0,1}]
  %s2 = inlined_call_operand.vmem [shape: f32[2,8,32], index: 2, kind: output, shape index: {}]
  %s3 = sld [smem:[#allocation0]]
  $region49: #{decoder_layer_forward.8} parent=0
    _
  %s5 = ssub.s32 1, %s3
  %s6 = scalar_select 0, %s5, %s3
  loop: start=0, step=1, limit=4
  $region2: #{decoder_layer_forward.8} parent=0 // loop_pre_header
    _
  $region3: #{decoder_layer_forward.8} parent=0 // loop_header
    %s8 = sphi 0, %s12
    %p9 = scmp.ge.s32.totalorder %s8, 4
    %s15 = sphi 0, %s34
    %s16 = sphi 0, %s30
    %s17 = sphi 0, %s26
    %s18 = sphi 0, %s15
    %s19 = sphi 0, %s16
    %s20 = sphi 0, %s17
    %s21 = sphi 0, %s18
    %s22 = sphi 0, %s19
    %s23 = sphi 0, %s20
    %s39 = sphi 0, %s41
    %s42 = sphi 0, %s39
    %s43 = sphi 0, %s42
    %s59 = sphi 0, %s43
    %s67 = sphi 0, %s69
    %s70 = sphi 0, %s67
    %s71 = sphi 0, %s70
    %s87 = sphi 0, %s71
    %s95 = sphi 0, %s97
    %s98 = sphi 0, %s95
    %s99 = sphi 0, %s98
    %s115 = sphi 0, %s99
  $region4: #{decoder_layer_forward.8} parent=0 // loop_header_branch
    %11 = sbr.rel (%p9) target = $region8
  $region5: #{decoder_layer_forward.8} parent=0 // loop_body
    %s13 = ssub.s32 %s8, 1
    %s14 = ssub.s32 %s8, 2
    %s24 = sadd.s32 1, %s17
    %p25 = scmp.ge.s32.totalorder %s24, 1
    %s26 = scalar_select %p25, 0, %s24
    %s27 = sadd.s32 1, %s16
    %s28 = scalar_select %p25, %s27, %s16
    %p29 = scmp.ge.s32.totalorder %s28, 1
    %s30 = scalar_select %p29, 0, %s28
    %s31 = sadd.s32 1, %s15
    %s32 = scalar_select %p29, %s31, %s15
    %p33 = scmp.ge.s32.totalorder %s32, 2
    %s34 = scalar_select %p33, 0, %s32
    %s35 = ssub.s32 %s15, %s34
    %s36 = ssub.s32 %s16, %s30
    %s37 = sor.u32 %s35, %s36
    %p38 = scmp.eq.s32.totalorder %s37, 0
    %s40 = sadd.s32 %s39, 1
    %s41 = scalar_select %p38, %s39, %s40
    %p44 = pneg %p38
    %p45 = scmp.eq.s32.totalorder %s8, 1
    %p46 = por %p44, %p45
    %p47 = scmp.ne.s32.totalorder %s39, %s42
    %p48 = scmp.eq.s32.totalorder %s8, 0
    %p49 = por %p47, %p48
    %p50 = scmp.ne.s32.totalorder %s39, %s42
    %p51 = scmp.eq.s32.totalorder %s13, 1
    %p52 = por %p50, %p51
    %p53 = scmp.ne.s32.totalorder %s42, %s43
    %p54 = scmp.eq.s32.totalorder %s13, 0
    %p55 = por %p53, %p54
    %p56 = scmp.ne.s32.totalorder %s42, %s43
    %p57 = scmp.eq.s32.totalorder %s14, 1
    %p58 = por %p56, %p57
    %p60 = scmp.ne.s32.totalorder %s43, %s59
    %p61 = scmp.eq.s32.totalorder %s14, 0
    %p62 = por %p60, %p61
    %s63 = ssub.s32 %s15, %s34
    %s64 = ssub.s32 %s17, %s26
    %s65 = sor.u32 %s63, %s64
    %p66 = scmp.eq.s32.totalorder %s65, 0
    %s68 = sadd.s32 %s67, 1
    %s69 = scalar_select %p66, %s67, %s68
    %p72 = pneg %p66
    %p73 = scmp.eq.s32.totalorder %s8, 1
    %p74 = por %p72, %p73
    %p75 = scmp.ne.s32.totalorder %s67, %s70
    %p76 = scmp.eq.s32.totalorder %s8, 0
    %p77 = por %p75, %p76
    %p78 = scmp.ne.s32.totalorder %s67, %s70
    %p79 = scmp.eq.s32.totalorder %s13, 1
    %p80 = por %p78, %p79
    %p81 = scmp.ne.s32.totalorder %s70, %s71
    %p82 = scmp.eq.s32.totalorder %s13, 0
    %p83 = por %p81, %p82
    %p84 = scmp.ne.s32.totalorder %s70, %s71
    %p85 = scmp.eq.s32.totalorder %s14, 1
    %p86 = por %p84, %p85
    %p88 = scmp.ne.s32.totalorder %s71, %s87
    %p89 = scmp.eq.s32.totalorder %s14, 0
    %p90 = por %p88, %p89
    %s91 = ssub.s32 %s15, %s34
    %s92 = ssub.s32 %s16, %s30
    %s93 = sor.u32 %s91, %s92
    %p94 = scmp.eq.s32.totalorder %s93, 0
    %s96 = sadd.s32 %s95, 1
    %s97 = scalar_select %p94, %s95, %s96
    %p100 = pneg %p94
    %p101 = scmp.eq.s32.totalorder %s8, 1
    %p102 = por %p100, %p101
    %p103 = scmp.ne.s32.totalorder %s95, %s98
    %p104 = scmp.eq.s32.totalorder %s8, 0
    %p105 = por %p103, %p104
    %p106 = scmp.ne.s32.totalorder %s95, %s98
    %p107 = scmp.eq.s32.totalorder %s13, 1
    %p108 = por %p106, %p107
    %p109 = scmp.ne.s32.totalorder %s98, %s99
    %p110 = scmp.eq.s32.totalorder %s13, 0
    %p111 = por %p109, %p110
    %p112 = scmp.ne.s32.totalorder %s98, %s99
    %p113 = scmp.eq.s32.totalorder %s14, 1
    %p114 = por %p112, %p113
    %p116 = scmp.ne.s32.totalorder %s99, %s115
    %p117 = scmp.eq.s32.totalorder %s14, 0
    %p118 = por %p116, %p117
    %p119 = scmp.le.s32.totalorder 1, %s8
    %p120 = scmp.lt.s32.totalorder %s8, 3
    %p121 = pnand %p119, %p120
    %p122 = pneg %p121
    // Predicated region
    $region9: #{decoder_layer_forward.8} parent=5 // pred_check
      _
    $region10: #{decoder_layer_forward.8} parent=5 // pred_check_branch
      %124 = sbr.rel (%p121) target = $region12
    $region11: #{decoder_layer_forward.8} parent=5 // pred_region
      %s125 = ssub.s32 %s8, 1
    $region12: #{decoder_layer_forward.8} parent=5 // pred_fallthru
      _
    %p126 = scmp.lt.s32.totalorder %s8, 2
    // Predicated region
    $region13: #{decoder_layer_forward.8} parent=5 // pred_check
      %p127 = pneg %p126
    $region14: #{decoder_layer_forward.8} parent=5 // pred_check_branch
      %129 = sbr.rel (%p127) target = $region16
    $region15: #{decoder_layer_forward.8} parent=5 // pred_region
      // Predicated region
      $region17: #{decoder_layer_forward.8} parent=15 // pred_check
        %p130 = pneg %p49
      $region18: #{decoder_layer_forward.8} parent=15 // pred_check_branch
        %132 = sbr.rel (%p130) target = $region20
      $region19: #{decoder_layer_forward.8} parent=15 // pred_region
        %p133 = scmp.lt.s32.totalorder %s15, 1
        %s134 = scalar_select %p133, %s15, 1
        %p135 = scmp.lt.s32.totalorder %s16, 0
        %s136 = scalar_select %p135, %s16, 0
        %s137 = sadd.s32 %s136, %s134
        %s138 = smul.addr %s137, 8
        %s139 = scalar_lea.vmem %s0, %s138
      $region20: #{decoder_layer_forward.8} parent=15 // pred_fallthru
        _
      // Predicated region
      $region21: #{decoder_layer_forward.8} parent=15 // pred_check
        %p140 = pneg %p77
      $region22: #{decoder_layer_forward.8} parent=15 // pred_check_branch
        %142 = sbr.rel (%p140) target = $region24
      $region23: #{decoder_layer_forward.8} parent=15 // pred_region
        %p143 = scmp.lt.s32.totalorder %s15, 1
        %s144 = scalar_select %p143, %s15, 1
        %p145 = scmp.lt.s32.totalorder %s17, 0
        %s146 = scalar_select %p145, %s17, 0
        %s147 = sadd.s32 %s146, %s144
        %s148 = smul.addr %s147, 8
        %s149 = scalar_lea.vmem %s1, %s148
      $region24: #{decoder_layer_forward.8} parent=15 // pred_fallthru
        _
    $region16: #{decoder_layer_forward.8} parent=5 // pred_fallthru
      _
    %p150 = scmp.le.s32.totalorder 1, %s8
    %p151 = scmp.lt.s32.totalorder %s8, 3
    %p152 = pnand %p150, %p151
    %p153 = pneg %p152
    // Predicated region
    $region25: #{decoder_layer_forward.8} parent=5 // pred_check
      _
    $region26: #{decoder_layer_forward.8} parent=5 // pred_check_branch
      %155 = sbr.rel (%p152) target = $region28
    $region27: #{decoder_layer_forward.8} parent=5 // pred_region
      %s156 = ssub.s32 %s8, 1
      %p157 = scmp.lt.s32.totalorder %s18, 1
      %s158 = scalar_select %p157, %s18, 1
      %p159 = scmp.lt.s32.totalorder %s19, 0
      %s160 = scalar_select %p159, %s19, 0
      %s161 = sadd.s32 %s160, %s158
      %s162 = smul.addr %s161, 8
      %s163 = scalar_lea.vmem %s0, %s162
      %p164 = pneg %p55
      %p165 = pneg %p52
      %p166 = scmp.lt.s32.totalorder %s18, 1
      %s167 = scalar_select %p166, %s18, 1
      %p168 = scmp.lt.s32.totalorder %s20, 0
      %s169 = scalar_select %p168, %s20, 0
      %s170 = sadd.s32 %s169, %s167
      %s171 = smul.addr %s170, 8
      %s172 = scalar_lea.vmem %s1, %s171
      %p173 = pneg %p83
      %p174 = pneg %p80
      %p175 = pneg %p111
      %p176 = pneg %p108
      %p177 = scmp.lt.s32.totalorder %s18, 1
      %s178 = scalar_select %p177, %s18, 1
      %p179 = scmp.lt.s32.totalorder %s19, 0
      %s180 = scalar_select %p179, %s19, 0
      %s181 = sadd.s32 %s180, %s178
      %s182 = smul.addr %s181, 8
      %s183 = scalar_lea.vmem %s2, %s182
      %p184 = scmp.lt.s32.totalorder %s18, 1
      %s185 = scalar_select %p184, %s18, 1
      %p186 = scmp.lt.s32.totalorder %s19, 0
      %s187 = scalar_select %p186, %s19, 0
      %s188 = sadd.s32 %s187, %s185
      %s189 = smul.addr %s188, 8
      %s190 = scalar_lea.vmem %s0, %s189
      %p191 = scmp.lt.s32.totalorder %s18, 1
      %s192 = scalar_select %p191, %s18, 1
      %p193 = scmp.lt.s32.totalorder %s20, 0
      %s194 = scalar_select %p193, %s20, 0
      %s195 = sadd.s32 %s194, %s192
      %s196 = smul.addr %s195, 8
      %s197 = scalar_lea.vmem %s1, %s196
      %p198 = scmp.lt.s32.totalorder %s18, 1
      %s199 = scalar_select %p198, %s18, 1
      %p200 = scmp.lt.s32.totalorder %s19, 0
      %s201 = scalar_select %p200, %s19, 0
      %s202 = sadd.s32 %s201, %s199
      %s203 = smul.addr %s202, 8
      %s204 = scalar_lea.vmem %s2, %s203
      %p206 = scmp.eq.s32.totalorder %s20, 0
      // Predicated region
      $region29: #{decoder_layer_forward.8} parent=27 // pred_check
        %p207 = pneg %p206
      $region30: #{decoder_layer_forward.8} parent=27 // pred_check_branch
        %209 = sbr.rel (%p207) target = $region32
      $region31: #{decoder_layer_forward.8} parent=27 // pred_region
        %vm210 = vcmask 7168
        %211 = vst.msk [vmem:[#allocation2] sm:$0xff] %vm210, -inf
        %212 = vst.msk [vmem:[#allocation2 + $0x8] sm:$0xff] %vm210, -inf
        %213 = vst.msk [vmem:[#allocation2 + $0x10] sm:$0xff] %vm210, -inf
        %214 = vst.msk [vmem:[#allocation2 + $0x18] sm:$0xff] %vm210, -inf
        %215 = vst.msk [vmem:[#allocation3] sm:$0xff] %vm210, 0.0
        %216 = vst.msk [vmem:[#allocation3 + $0x8] sm:$0xff] %vm210, 0.0
        %217 = vst.msk [vmem:[#allocation3 + $0x10] sm:$0xff] %vm210, 0.0
        %218 = vst.msk [vmem:[#allocation3 + $0x18] sm:$0xff] %vm210, 0.0
        %vm219 = vcmask 64512
        %220 = vst.msk [vmem:[#allocation4] sm:$0xff] %vm219, 0.0
        %221 = vst.msk [vmem:[#allocation4 + $0x8] sm:$0xff] %vm219, 0.0
        %222 = vst.msk [vmem:[#allocation4 + $0x10] sm:$0xff] %vm219, 0.0
        %223 = vst.msk [vmem:[#allocation4 + $0x18] sm:$0xff] %vm219, 0.0
      $region32: #{decoder_layer_forward.8} parent=27 // pred_fallthru
        _
      %v224 = vld [vmem:[%s190] sm:$0xff]
      %226 = vrot.lane.b32.xlu0 %v224, 120
      %v227 = vpop.permute.xlu0 %226
      %229 = vrot.lane.b32.xlu0 %v224, 112
      %v230 = vpop.permute.xlu0 %229
      %232 = vrot.lane.b32.xlu0 %v224, 104
      %v233 = vpop.permute.xlu0 %232
      %v235 = vcombine.low %v224, %v230
      %v236 = vcombine.high %v224, %v230
      %v238 = vunpack.c.l.s4 1983009808
      %v239 = vunpack.c.0.s8 %v238
      %v240 = vlaneseq
      %v241 = vshrl.u32 %v240, 7
      %v242 = vsub.s32 %v239, %v241
      %v243 = vrot.slane %v235, %v242
      %v245 = vunpack.c.l.s4 1983009808
      %v246 = vunpack.c.0.s8 %v245
      %v247 = vlaneseq
      %v248 = vshrl.u32 %v247, 7
      %v249 = vsub.s32 %v246, %v248
      %v250 = vrot.slane %v236, %v249
      %v251 = vcombine.low %v227, %v233
      %v252 = vcombine.high %v227, %v233
      %v254 = vunpack.c.l.s4 1983009808
      %v255 = vunpack.c.0.s8 %v254
      %v256 = vlaneseq
      %v257 = vshrl.u32 %v256, 7
      %v258 = vsub.s32 %v255, %v257
      %v259 = vrot.slane %v251, %v258
      %v261 = vunpack.c.l.s4 1983009808
      %v262 = vunpack.c.0.s8 %v261
      %v263 = vlaneseq
      %v264 = vshrl.u32 %v263, 7
      %v265 = vsub.s32 %v262, %v264
      %v266 = vrot.slane %v252, %v265
      %v267 = vcombine.low %v243, %v259
      %v268 = vcombine.high %v243, %v259
      %v270 = vunpack.c.l.s4 1934713408
      %v271 = vunpack.c.0.s8 %v270
      %v272 = vlaneseq
      %v273 = vshrl.u32 %v272, 7
      %v274 = vsub.s32 %v271, %v273
      %v275 = vrot.slane %v267, %v274
      %v277 = vunpack.c.l.s4 1934713408
      %v278 = vunpack.c.0.s8 %v277
      %v279 = vlaneseq
      %v280 = vshrl.u32 %v279, 7
      %v281 = vsub.s32 %v278, %v280
      %v282 = vrot.slane %v268, %v281
      %v283 = vcombine.low %v250, %v266
      %v284 = vcombine.high %v250, %v266
      %v286 = vunpack.c.l.s4 1934713408
      %v287 = vunpack.c.0.s8 %v286
      %v288 = vlaneseq
      %v289 = vshrl.u32 %v288, 7
      %v290 = vsub.s32 %v287, %v289
      %v291 = vrot.slane %v283, %v290
      %v293 = vunpack.c.l.s4 1934713408
      %v294 = vunpack.c.0.s8 %v293
      %v295 = vlaneseq
      %v296 = vshrl.u32 %v295, 7
      %v297 = vsub.s32 %v294, %v296
      %v298 = vrot.slane %v284, %v297
      %v299 = vcombine.high %v275, 0.0
      %v300 = vcombine.high %v282, 0.0
      %v301 = vcombine.high %v291, 0.0
      %v302 = vcombine.high %v298, 0.0
      %v303 = vcombine.low %v275, %v282
      %v305 = vunpack.c.l.s4 1983009808
      %v306 = vunpack.c.0.s8 %v305
      %v307 = vlaneseq
      %v308 = vshrl.u32 %v307, 7
      %v309 = vsub.s32 %v306, %v308
      %v310 = vrot.slane %v303, %v309
      %v311 = vcombine.low %v299, %v300
      %v313 = vunpack.c.l.s4 1983009808
      %v314 = vunpack.c.0.s8 %v313
      %v315 = vlaneseq
      %v316 = vshrl.u32 %v315, 7
      %v317 = vsub.s32 %v314, %v316
      %v318 = vrot.slane %v311, %v317
      %v319 = vcombine.low %v291, %v298
      %v321 = vunpack.c.l.s4 1983009808
      %v322 = vunpack.c.0.s8 %v321
      %v323 = vlaneseq
      %v324 = vshrl.u32 %v323, 7
      %v325 = vsub.s32 %v322, %v324
      %v326 = vrot.slane %v319, %v325
      %v327 = vcombine.low %v301, %v302
      %v329 = vunpack.c.l.s4 1983009808
      %v330 = vunpack.c.0.s8 %v329
      %v331 = vlaneseq
      %v332 = vshrl.u32 %v331, 7
      %v333 = vsub.s32 %v330, %v332
      %v334 = vrot.slane %v327, %v333
      %v335 = vcombine.low %v310, %v318
      %v336 = vcombine.high %v310, %v318
      %v338 = vunpack.c.l.s4 1934713408
      %v339 = vunpack.c.0.s8 %v338
      %v340 = vlaneseq
      %v341 = vshrl.u32 %v340, 7
      %v342 = vsub.s32 %v339, %v341
      %v343 = vrot.slane %v335, %v342
      %v345 = vunpack.c.l.s4 1934713408
      %v346 = vunpack.c.0.s8 %v345
      %v347 = vlaneseq
      %v348 = vshrl.u32 %v347, 7
      %v349 = vsub.s32 %v346, %v348
      %v350 = vrot.slane %v336, %v349
      %v351 = vcombine.low %v326, %v334
      %v352 = vcombine.high %v326, %v334
      %v354 = vunpack.c.l.s4 1934713408
      %v355 = vunpack.c.0.s8 %v354
      %v356 = vlaneseq
      %v357 = vshrl.u32 %v356, 7
      %v358 = vsub.s32 %v355, %v357
      %v359 = vrot.slane %v351, %v358
      %v361 = vunpack.c.l.s4 1934713408
      %v362 = vunpack.c.0.s8 %v361
      %v363 = vlaneseq
      %v364 = vshrl.u32 %v363, 7
      %v365 = vsub.s32 %v362, %v364
      %v366 = vrot.slane %v352, %v365
      %v367 = vcombine.low %v343, %v359
      %v368 = vcombine.high %v343, %v359
      %v369 = vcombine.low %v350, %v366
      %v370 = vcombine.high %v350, %v366
      %v371 = vpack.c.bf16 %v367, %v367
      %v372 = vpack.c.bf16 %v368, %v368
      %v373 = vpack.c.bf16 %v369, %v369
      %v374 = vpack.c.bf16 %v370, %v370
      %v375 = vld [vmem:[%s197] sm:$0xff]
      %377 = vrot.lane.b32.xlu0 %v375, 120
      %v378 = vpop.permute.xlu0 %377
      %379 = vrot.lane.b32.xlu0 %v375, 112
      %v380 = vpop.permute.xlu0 %379
      %381 = vrot.lane.b32.xlu0 %v375, 104
      %v382 = vpop.permute.xlu0 %381
      %383 = vrot.lane.b32.xlu0 %v375, 96
      %v384 = vpop.permute.xlu0 %383
      %385 = vrot.lane.b32.xlu0 %v378, 96
      %v386 = vpop.permute.xlu0 %385
      %387 = vrot.lane.b32.xlu0 %v380, 96
      %v388 = vpop.permute.xlu0 %387
      %389 = vrot.lane.b32.xlu0 %v382, 96
      %v390 = vpop.permute.xlu0 %389
      %v395 = vcombine.low %v384, %v388
      %v396 = vcombine.high %v384, %v388
      %v398 = vunpack.c.l.s4 1983009808
      %v399 = vunpack.c.0.s8 %v398
      %v400 = vlaneseq
      %v401 = vshrl.u32 %v400, 7
      %v402 = vsub.s32 %v399, %v401
      %v403 = vrot.slane %v395, %v402
      %v405 = vunpack.c.l.s4 1983009808
      %v406 = vunpack.c.0.s8 %v405
      %v407 = vlaneseq
      %v408 = vshrl.u32 %v407, 7
      %v409 = vsub.s32 %v406, %v408
      %v410 = vrot.slane %v396, %v409
      %v411 = vcombine.low %v386, %v390
      %v412 = vcombine.high %v386, %v390
      %v414 = vunpack.c.l.s4 1983009808
      %v415 = vunpack.c.0.s8 %v414
      %v416 = vlaneseq
      %v417 = vshrl.u32 %v416, 7
      %v418 = vsub.s32 %v415, %v417
      %v419 = vrot.slane %v411, %v418
      %v421 = vunpack.c.l.s4 1983009808
      %v422 = vunpack.c.0.s8 %v421
      %v423 = vlaneseq
      %v424 = vshrl.u32 %v423, 7
      %v425 = vsub.s32 %v422, %v424
      %v426 = vrot.slane %v412, %v425
      %v427 = vcombine.low %v403, %v419
      %v428 = vcombine.high %v403, %v419
      %v430 = vunpack.c.l.s4 1934713408
      %v431 = vunpack.c.0.s8 %v430
      %v432 = vlaneseq
      %v433 = vshrl.u32 %v432, 7
      %v434 = vsub.s32 %v431, %v433
      %v435 = vrot.slane %v427, %v434
      %v437 = vunpack.c.l.s4 1934713408
      %v438 = vunpack.c.0.s8 %v437
      %v439 = vlaneseq
      %v440 = vshrl.u32 %v439, 7
      %v441 = vsub.s32 %v438, %v440
      %v442 = vrot.slane %v428, %v441
      %v443 = vcombine.low %v410, %v426
      %v444 = vcombine.high %v410, %v426
      %v446 = vunpack.c.l.s4 1934713408
      %v447 = vunpack.c.0.s8 %v446
      %v448 = vlaneseq
      %v449 = vshrl.u32 %v448, 7
      %v450 = vsub.s32 %v447, %v449
      %v451 = vrot.slane %v443, %v450
      %v453 = vunpack.c.l.s4 1934713408
      %v454 = vunpack.c.0.s8 %v453
      %v455 = vlaneseq
      %v456 = vshrl.u32 %v455, 7
      %v457 = vsub.s32 %v454, %v456
      %v458 = vrot.slane %v444, %v457
      %v459 = vcombine.high %v435, 0.0
      %v460 = vcombine.high %v442, 0.0
      %v461 = vcombine.high %v451, 0.0
      %v462 = vcombine.high %v458, 0.0
      %v463 = vcombine.low %v435, %v442
      %v465 = vunpack.c.l.s4 1983009808
      %v466 = vunpack.c.0.s8 %v465
      %v467 = vlaneseq
      %v468 = vshrl.u32 %v467, 7
      %v469 = vsub.s32 %v466, %v468
      %v470 = vrot.slane %v463, %v469
      %v471 = vcombine.low %v459, %v460
      %v473 = vunpack.c.l.s4 1983009808
      %v474 = vunpack.c.0.s8 %v473
      %v475 = vlaneseq
      %v476 = vshrl.u32 %v475, 7
      %v477 = vsub.s32 %v474, %v476
      %v478 = vrot.slane %v471, %v477
      %v479 = vcombine.low %v451, %v458
      %v481 = vunpack.c.l.s4 1983009808
      %v482 = vunpack.c.0.s8 %v481
      %v483 = vlaneseq
      %v484 = vshrl.u32 %v483, 7
      %v485 = vsub.s32 %v482, %v484
      %v486 = vrot.slane %v479, %v485
      %v487 = vcombine.low %v461, %v462
      %v489 = vunpack.c.l.s4 1983009808
      %v490 = vunpack.c.0.s8 %v489
      %v491 = vlaneseq
      %v492 = vshrl.u32 %v491, 7
      %v493 = vsub.s32 %v490, %v492
      %v494 = vrot.slane %v487, %v493
      %v495 = vcombine.low %v470, %v478
      %v496 = vcombine.high %v470, %v478
      %v498 = vunpack.c.l.s4 1934713408
      %v499 = vunpack.c.0.s8 %v498
      %v500 = vlaneseq
      %v501 = vshrl.u32 %v500, 7
      %v502 = vsub.s32 %v499, %v501
      %v503 = vrot.slane %v495, %v502
      %v505 = vunpack.c.l.s4 1934713408
      %v506 = vunpack.c.0.s8 %v505
      %v507 = vlaneseq
      %v508 = vshrl.u32 %v507, 7
      %v509 = vsub.s32 %v506, %v508
      %v510 = vrot.slane %v496, %v509
      %v511 = vcombine.low %v486, %v494
      %v512 = vcombine.high %v486, %v494
      %v514 = vunpack.c.l.s4 1934713408
      %v515 = vunpack.c.0.s8 %v514
      %v516 = vlaneseq
      %v517 = vshrl.u32 %v516, 7
      %v518 = vsub.s32 %v515, %v517
      %v519 = vrot.slane %v511, %v518
      %v521 = vunpack.c.l.s4 1934713408
      %v522 = vunpack.c.0.s8 %v521
      %v523 = vlaneseq
      %v524 = vshrl.u32 %v523, 7
      %v525 = vsub.s32 %v522, %v524
      %v526 = vrot.slane %v512, %v525
      %v527 = vcombine.low %v503, %v519
      %v528 = vcombine.high %v503, %v519
      %v529 = vcombine.low %v510, %v526
      %v530 = vcombine.high %v510, %v526
      %v531 = vpack.c.bf16 %v527, %v527
      %v532 = vpack.c.bf16 %v528, %v528
      %v533 = vpack.c.bf16 %v529, %v529
      %v534 = vpack.c.bf16 %v530, %v530
      %535 = vrot.lane.b32.xlu0 %v375, 64
      %v536 = vpop.permute.xlu0 %535
      %537 = vrot.lane.b32.xlu0 %v378, 64
      %v538 = vpop.permute.xlu0 %537
      %539 = vrot.lane.b32.xlu0 %v380, 64
      %v540 = vpop.permute.xlu0 %539
      %541 = vrot.lane.b32.xlu0 %v382, 64
      %v542 = vpop.permute.xlu0 %541
      %v547 = vcombine.low %v536, %v540
      %v548 = vcombine.high %v536, %v540
      %v550 = vunpack.c.l.s4 1983009808
      %v551 = vunpack.c.0.s8 %v550
      %v552 = vlaneseq
      %v553 = vshrl.u32 %v552, 7
      %v554 = vsub.s32 %v551, %v553
      %v555 = vrot.slane %v547, %v554
      %v557 = vunpack.c.l.s4 1983009808
      %v558 = vunpack.c.0.s8 %v557
      %v559 = vlaneseq
      %v560 = vshrl.u32 %v559, 7
      %v561 = vsub.s32 %v558, %v560
      %v562 = vrot.slane %v548, %v561
      %v563 = vcombine.low %v538, %v542
      %v564 = vcombine.high %v538, %v542
      %v566 = vunpack.c.l.s4 1983009808
      %v567 = vunpack.c.0.s8 %v566
      %v568 = vlaneseq
      %v569 = vshrl.u32 %v568, 7
      %v570 = vsub.s32 %v567, %v569
      %v571 = vrot.slane %v563, %v570
      %v573 = vunpack.c.l.s4 1983009808
      %v574 = vunpack.c.0.s8 %v573
      %v575 = vlaneseq
      %v576 = vshrl.u32 %v575, 7
      %v577 = vsub.s32 %v574, %v576
      %v578 = vrot.slane %v564, %v577
      %v579 = vcombine.low %v555, %v571
      %v580 = vcombine.high %v555, %v571
      %v582 = vunpack.c.l.s4 1934713408
      %v583 = vunpack.c.0.s8 %v582
      %v584 = vlaneseq
      %v585 = vshrl.u32 %v584, 7
      %v586 = vsub.s32 %v583, %v585
      %v587 = vrot.slane %v579, %v586
      %v589 = vunpack.c.l.s4 1934713408
      %v590 = vunpack.c.0.s8 %v589
      %v591 = vlaneseq
      %v592 = vshrl.u32 %v591, 7
      %v593 = vsub.s32 %v590, %v592
      %v594 = vrot.slane %v580, %v593
      %v595 = vcombine.low %v562, %v578
      %v596 = vcombine.high %v562, %v578
      %v598 = vunpack.c.l.s4 1934713408
      %v599 = vunpack.c.0.s8 %v598
      %v600 = vlaneseq
      %v601 = vshrl.u32 %v600, 7
      %v602 = vsub.s32 %v599, %v601
      %v603 = vrot.slane %v595, %v602
      %v605 = vunpack.c.l.s4 1934713408
      %v606 = vunpack.c.0.s8 %v605
      %v607 = vlaneseq
      %v608 = vshrl.u32 %v607, 7
      %v609 = vsub.s32 %v606, %v608
      %v610 = vrot.slane %v596, %v609
      %v611 = vcombine.high %v587, 0.0
      %v612 = vcombine.high %v594, 0.0
      %v613 = vcombine.high %v603, 0.0
      %v614 = vcombine.high %v610, 0.0
      %v615 = vcombine.low %v587, %v594
      %v617 = vunpack.c.l.s4 1983009808
      %v618 = vunpack.c.0.s8 %v617
      %v619 = vlaneseq
      %v620 = vshrl.u32 %v619, 7
      %v621 = vsub.s32 %v618, %v620
      %v622 = vrot.slane %v615, %v621
      %v623 = vcombine.low %v611, %v612
      %v625 = vunpack.c.l.s4 1983009808
      %v626 = vunpack.c.0.s8 %v625
      %v627 = vlaneseq
      %v628 = vshrl.u32 %v627, 7
      %v629 = vsub.s32 %v626, %v628
      %v630 = vrot.slane %v623, %v629
      %v631 = vcombine.low %v603, %v610
      %v633 = vunpack.c.l.s4 1983009808
      %v634 = vunpack.c.0.s8 %v633
      %v635 = vlaneseq
      %v636 = vshrl.u32 %v635, 7
      %v637 = vsub.s32 %v634, %v636
      %v638 = vrot.slane %v631, %v637
      %v639 = vcombine.low %v613, %v614
      %v641 = vunpack.c.l.s4 1983009808
      %v642 = vunpack.c.0.s8 %v641
      %v643 = vlaneseq
      %v644 = vshrl.u32 %v643, 7
      %v645 = vsub.s32 %v642, %v644
      %v646 = vrot.slane %v639, %v645
      %v647 = vcombine.low %v622, %v630
      %v648 = vcombine.high %v622, %v630
      %v650 = vunpack.c.l.s4 1934713408
      %v651 = vunpack.c.0.s8 %v650
      %v652 = vlaneseq
      %v653 = vshrl.u32 %v652, 7
      %v654 = vsub.s32 %v651, %v653
      %v655 = vrot.slane %v647, %v654
      %v657 = vunpack.c.l.s4 1934713408
      %v658 = vunpack.c.0.s8 %v657
      %v659 = vlaneseq
      %v660 = vshrl.u32 %v659, 7
      %v661 = vsub.s32 %v658, %v660
      %v662 = vrot.slane %v648, %v661
      %v663 = vcombine.low %v638, %v646
      %v664 = vcombine.high %v638, %v646
      %v666 = vunpack.c.l.s4 1934713408
      %v667 = vunpack.c.0.s8 %v666
      %v668 = vlaneseq
      %v669 = vshrl.u32 %v668, 7
      %v670 = vsub.s32 %v667, %v669
      %v671 = vrot.slane %v663, %v670
      %v673 = vunpack.c.l.s4 1934713408
      %v674 = vunpack.c.0.s8 %v673
      %v675 = vlaneseq
      %v676 = vshrl.u32 %v675, 7
      %v677 = vsub.s32 %v674, %v676
      %v678 = vrot.slane %v664, %v677
      %v679 = vcombine.low %v655, %v671
      %v680 = vcombine.high %v655, %v671
      %v681 = vcombine.low %v662, %v678
      %v682 = vcombine.high %v662, %v678
      %v683 = vpack.c.bf16 %v679, %v679
      %v684 = vpack.c.bf16 %v680, %v680
      %v685 = vpack.c.bf16 %v681, %v681
      %v686 = vpack.c.bf16 %v682, %v682
      %vm687 = vcmask 64512
      %v689 = vsel %vm687, %v371, 0
      %v692 = vsel %vm687, %v531, 0
      %694 = vmatprep.subr.bf16.mxu0 0
      %695 = vmatpush1.bf16.xpose.msra.mxu0 0
      %696 = vmatprep.subr.bf16.mxu0 0
      %697 = vmatpush1.bf16.xpose.msra.mxu0 0
      %698 = vmatprep.subr.bf16.mxu0 0
      %699 = vmatpush1.bf16.xpose.msra.mxu0 0
      %700 = vmatprep.subr.bf16.mxu0 0
      %701 = vmatpush1.bf16.xpose.msra.mxu0 0
      %702 = vmatprep.subr.bf16.mxu0 0
      %703 = vmatpush1.bf16.xpose.msra.mxu0 0
      %704 = vmatprep.subr.bf16.mxu0 0
      %705 = vmatpush1.bf16.xpose.msra.mxu0 0
      %706 = vmatprep.subr.bf16.mxu0 0
      %707 = vmatpush1.bf16.xpose.msra.mxu0 0
      %708 = vmatprep.subr.bf16.mxu0 0
      %709 = vmatpush1.bf16.xpose.msra.mxu0 %v692
      %710 = vmatprep.subr.bf16.mxu0 0
      %711 = vmatpush2.bf16.xpose.msra.mxu0 0
      %712 = vmatprep.subr.bf16.mxu0 0
      %713 = vmatpush2.bf16.xpose.msra.mxu0 0
      %714 = vmatprep.subr.bf16.mxu0 0
      %715 = vmatpush2.bf16.xpose.msra.mxu0 0
      %716 = vmatprep.subr.bf16.mxu0 0
      %717 = vmatpush2.bf16.xpose.msra.mxu0 0
      %718 = vmatprep.subr.bf16.mxu0 0
      %719 = vmatpush2.bf16.xpose.msra.mxu0 0
      %720 = vmatprep.subr.bf16.mxu0 0
      %721 = vmatpush2.bf16.xpose.msra.mxu0 0
      %722 = vmatprep.subr.bf16.mxu0 0
      %723 = vmatpush2.bf16.xpose.msra.mxu0 0
      %724 = vmatprep.subr.bf16.mxu0 0
      %725 = vmatpush2.bf16.xpose.msra.mxu0 0
      %726 = vmatprep.mubr.bf16.mxu0 0
      %727 = vmatmul.mubr.bf16.gmra.mxu0 %v689
      %v728 = vpop.f32.mrf.mxu0
      %v729 = vadd.f32 0.0, %v728
      %v730 = vpop.f32.mrf.mxu0
      %v731 = vpop.f32.mrf.mxu0
      %v732 = vpop.f32.mrf.mxu0
      %733 = vdwg.mxu0
      %v735 = vsel %vm687, %v372, 0
      %v738 = vsel %vm687, %v532, 0
      %740 = vmatprep.subr.bf16.mxu0 0
      %741 = vmatpush1.bf16.xpose.msra.mxu0 0
      %742 = vmatprep.subr.bf16.mxu0 0
      %743 = vmatpush1.bf16.xpose.msra.mxu0 0
      %744 = vmatprep.subr.bf16.mxu0 0
      %745 = vmatpush1.bf16.xpose.msra.mxu0 0
      %746 = vmatprep.subr.bf16.mxu0 0
      %747 = vmatpush1.bf16.xpose.msra.mxu0 0
      %748 = vmatprep.subr.bf16.mxu0 0
      %749 = vmatpush1.bf16.xpose.msra.mxu0 0
      %750 = vmatprep.subr.bf16.mxu0 0
      %751 = vmatpush1.bf16.xpose.msra.mxu0 0
      %752 = vmatprep.subr.bf16.mxu0 0
      %753 = vmatpush1.bf16.xpose.msra.mxu0 0
      %754 = vmatprep.subr.bf16.mxu0 0
      %755 = vmatpush1.bf16.xpose.msra.mxu0 %v738
      %756 = vmatprep.subr.bf16.mxu0 0
      %757 = vmatpush2.bf16.xpose.msra.mxu0 0
      %758 = vmatprep.subr.bf16.mxu0 0
      %759 = vmatpush2.bf16.xpose.msra.mxu0 0
      %760 = vmatprep.subr.bf16.mxu0 0
      %761 = vmatpush2.bf16.xpose.msra.mxu0 0
      %762 = vmatprep.subr.bf16.mxu0 0
      %763 = vmatpush2.bf16.xpose.msra.mxu0 0
      %764 = vmatprep.subr.bf16.mxu0 0
      %765 = vmatpush2.bf16.xpose.msra.mxu0 0
      %766 = vmatprep.subr.bf16.mxu0 0
      %767 = vmatpush2.bf16.xpose.msra.mxu0 0
      %768 = vmatprep.subr.bf16.mxu0 0
      %769 = vmatpush2.bf16.xpose.msra.mxu0 0
      %770 = vmatprep.subr.bf16.mxu0 0
      %771 = vmatpush2.bf16.xpose.msra.mxu0 0
      %772 = vmatprep.mubr.bf16.mxu0 0
      %773 = vmatmul.mubr.bf16.gmra.mxu0 %v735
      %v774 = vpop.f32.mrf.mxu0
      %v775 = vadd.f32 0.0, %v774
      %v776 = vpop.f32.mrf.mxu0
      %v777 = vpop.f32.mrf.mxu0
      %v778 = vpop.f32.mrf.mxu0
      %779 = vdwg.mxu0
      %v781 = vsel %vm687, %v373, 0
      %v784 = vsel %vm687, %v533, 0
      %786 = vmatprep.subr.bf16.mxu0 0
      %787 = vmatpush1.bf16.xpose.msra.mxu0 0
      %788 = vmatprep.subr.bf16.mxu0 0
      %789 = vmatpush1.bf16.xpose.msra.mxu0 0
      %790 = vmatprep.subr.bf16.mxu0 0
      %791 = vmatpush1.bf16.xpose.msra.mxu0 0
      %792 = vmatprep.subr.bf16.mxu0 0
      %793 = vmatpush1.bf16.xpose.msra.mxu0 0
      %794 = vmatprep.subr.bf16.mxu0 0
      %795 = vmatpush1.bf16.xpose.msra.mxu0 0
      %796 = vmatprep.subr.bf16.mxu0 0
      %797 = vmatpush1.bf16.xpose.msra.mxu0 0
      %798 = vmatprep.subr.bf16.mxu0 0
      %799 = vmatpush1.bf16.xpose.msra.mxu0 0
      %800 = vmatprep.subr.bf16.mxu0 0
      %801 = vmatpush1.bf16.xpose.msra.mxu0 %v784
      %802 = vmatprep.subr.bf16.mxu0 0
      %803 = vmatpush2.bf16.xpose.msra.mxu0 0
      %804 = vmatprep.subr.bf16.mxu0 0
      %805 = vmatpush2.bf16.xpose.msra.mxu0 0
      %806 = vmatprep.subr.bf16.mxu0 0
      %807 = vmatpush2.bf16.xpose.msra.mxu0 0
      %808 = vmatprep.subr.bf16.mxu0 0
      %809 = vmatpush2.bf16.xpose.msra.mxu0 0
      %810 = vmatprep.subr.bf16.mxu0 0
      %811 = vmatpush2.bf16.xpose.msra.mxu0 0
      %812 = vmatprep.subr.bf16.mxu0 0
      %813 = vmatpush2.bf16.xpose.msra.mxu0 0
      %814 = vmatprep.subr.bf16.mxu0 0
      %815 = vmatpush2.bf16.xpose.msra.mxu0 0
      %816 = vmatprep.subr.bf16.mxu0 0
      %817 = vmatpush2.bf16.xpose.msra.mxu0 0
      %818 = vmatprep.mubr.bf16.mxu0 0
      %819 = vmatmul.mubr.bf16.gmra.mxu0 %v781
      %v820 = vpop.f32.mrf.mxu0
      %v821 = vadd.f32 0.0, %v820
      %v822 = vpop.f32.mrf.mxu0
      %v823 = vpop.f32.mrf.mxu0
      %v824 = vpop.f32.mrf.mxu0
      %825 = vdwg.mxu0
      %v827 = vsel %vm687, %v374, 0
      %v830 = vsel %vm687, %v534, 0
      %832 = vmatprep.subr.bf16.mxu0 0
      %833 = vmatpush1.bf16.xpose.msra.mxu0 0
      %834 = vmatprep.subr.bf16.mxu0 0
      %835 = vmatpush1.bf16.xpose.msra.mxu0 0
      %836 = vmatprep.subr.bf16.mxu0 0
      %837 = vmatpush1.bf16.xpose.msra.mxu0 0
      %838 = vmatprep.subr.bf16.mxu0 0
      %839 = vmatpush1.bf16.xpose.msra.mxu0 0
      %840 = vmatprep.subr.bf16.mxu0 0
      %841 = vmatpush1.bf16.xpose.msra.mxu0 0
      %842 = vmatprep.subr.bf16.mxu0 0
      %843 = vmatpush1.bf16.xpose.msra.mxu0 0
      %844 = vmatprep.subr.bf16.mxu0 0
      %845 = vmatpush1.bf16.xpose.msra.mxu0 0
      %846 = vmatprep.subr.bf16.mxu0 0
      %847 = vmatpush1.bf16.xpose.msra.mxu0 %v830
      %848 = vmatprep.subr.bf16.mxu0 0
      %849 = vmatpush2.bf16.xpose.msra.mxu0 0
      %850 = vmatprep.subr.bf16.mxu0 0
      %851 = vmatpush2.bf16.xpose.msra.mxu0 0
      %852 = vmatprep.subr.bf16.mxu0 0
      %853 = vmatpush2.bf16.xpose.msra.mxu0 0
      %854 = vmatprep.subr.bf16.mxu0 0
      %855 = vmatpush2.bf16.xpose.msra.mxu0 0
      %856 = vmatprep.subr.bf16.mxu0 0
      %857 = vmatpush2.bf16.xpose.msra.mxu0 0
      %858 = vmatprep.subr.bf16.mxu0 0
      %859 = vmatpush2.bf16.xpose.msra.mxu0 0
      %860 = vmatprep.subr.bf16.mxu0 0
      %861 = vmatpush2.bf16.xpose.msra.mxu0 0
      %862 = vmatprep.subr.bf16.mxu0 0
      %863 = vmatpush2.bf16.xpose.msra.mxu0 0
      %864 = vmatprep.mubr.bf16.mxu0 0
      %865 = vmatmul.mubr.bf16.gmra.mxu0 %v827
      %v866 = vpop.f32.mrf.mxu0
      %v867 = vadd.f32 0.0, %v866
      %v868 = vpop.f32.mrf.mxu0
      %v869 = vpop.f32.mrf.mxu0
      %v870 = vpop.f32.mrf.mxu0
      %871 = vdwg.mxu0
      %v872 = vld [vmem:[#allocation2] sm:$0xff]
      %v873 = vld [vmem:[#allocation2 + $0x8] sm:$0xff]
      %v874 = vld [vmem:[#allocation2 + $0x10] sm:$0xff]
      %v875 = vld [vmem:[#allocation2 + $0x18] sm:$0xff]
      %v876 = vsel %vm687, %v729, -inf
      %877 = vmax.xlane.f32.xlu0 %v876
      %v878 = vpop.xlane.xlu0 %877
      %v879 = vsel %vm687, %v775, -inf
      %880 = vmax.xlane.f32.xlu0 %v879
      %v881 = vpop.xlane.xlu0 %880
      %v882 = vsel %vm687, %v821, -inf
      %883 = vmax.xlane.f32.xlu0 %v882
      %v884 = vpop.xlane.xlu0 %883
      %v885 = vsel %vm687, %v867, -inf
      %886 = vmax.xlane.f32.xlu0 %v885
      %v887 = vpop.xlane.xlu0 %886
      %v888 = vmax.f32 %v872, %v878
      %v889 = vmax.f32 %v873, %v881
      %v890 = vmax.f32 %v874, %v884
      %v891 = vmax.f32 %v875, %v887
      %v892 = vsub.f32 %v872, %v888
      %v893 = vsub.f32 %v873, %v889
      %v894 = vsub.f32 %v874, %v890
      %v895 = vsub.f32 %v875, %v891
      %v896 = vmul.f32 %v892, 1.442695
      %v897 = vpow.pop %v896
      %v898 = vmul.f32 %v893, 1.442695
      %v899 = vpow.pop %v898
      %v900 = vmul.f32 %v894, 1.442695
      %v901 = vpow.pop %v900
      %v902 = vmul.f32 %v895, 1.442695
      %v903 = vpow.pop %v902
      %905 = vset.pattern.permute.xlu0 0
      %906 = vperm.xlu0 %905, %v888
      %v907 = vpop.permute.xlu0 %906
      %910 = vset.pattern.permute.xlu0 0
      %911 = vperm.xlu0 %910, %v889
      %v912 = vpop.permute.xlu0 %911
      %915 = vset.pattern.permute.xlu0 0
      %916 = vperm.xlu0 %915, %v890
      %v917 = vpop.permute.xlu0 %916
      %920 = vset.pattern.permute.xlu0 0
      %921 = vperm.xlu0 %920, %v891
      %v922 = vpop.permute.xlu0 %921
      %v924 = vsub.f32 %v729, %v907
      %v925 = vsub.f32 %v775, %v912
      %v926 = vsub.f32 %v821, %v917
      %v927 = vsub.f32 %v867, %v922
      %v928 = vmul.f32 %v924, 1.442695
      %v929 = vpow.pop %v928
      %v930 = vmul.f32 %v925, 1.442695
      %v931 = vpow.pop %v930
      %v932 = vmul.f32 %v926, 1.442695
      %v933 = vpow.pop %v932
      %v934 = vmul.f32 %v927, 1.442695
      %v935 = vpow.pop %v934
      %v936 = vld [vmem:[#allocation3] sm:$0xff]
      %v937 = vld [vmem:[#allocation3 + $0x8] sm:$0xff]
      %v938 = vld [vmem:[#allocation3 + $0x10] sm:$0xff]
      %v939 = vld [vmem:[#allocation3 + $0x18] sm:$0xff]
      %v940 = vmul.f32 %v897, %v936
      %v941 = vmul.f32 %v899, %v937
      %v942 = vmul.f32 %v901, %v938
      %v943 = vmul.f32 %v903, %v939
      %v944 = vsel %vm687, %v929, 0.0
      %945 = vadd.xlane.f32.xlu0 %v944
      %v946 = vpop.xlane.xlu0 %945
      %v947 = vsel %vm687, %v931, 0.0
      %948 = vadd.xlane.f32.xlu0 %v947
      %v949 = vpop.xlane.xlu0 %948
      %v950 = vsel %vm687, %v933, 0.0
      %951 = vadd.xlane.f32.xlu0 %v950
      %v952 = vpop.xlane.xlu0 %951
      %v953 = vsel %vm687, %v935, 0.0
      %954 = vadd.xlane.f32.xlu0 %v953
      %v955 = vpop.xlane.xlu0 %954
      %v956 = vadd.f32 %v940, %v946
      %v957 = vadd.f32 %v941, %v949
      %v958 = vadd.f32 %v942, %v952
      %v959 = vadd.f32 %v943, %v955
      %vm960 = vcmask 7168
      %961 = vst.msk [vmem:[#allocation3] sm:$0xff] %vm960, %v956
      %962 = vst.msk [vmem:[#allocation3 + $0x8] sm:$0xff] %vm960, %v957
      %963 = vst.msk [vmem:[#allocation3 + $0x10] sm:$0xff] %vm960, %v958
      %964 = vst.msk [vmem:[#allocation3 + $0x18] sm:$0xff] %vm960, %v959
      %v965 = vld [vmem:[#allocation4] sm:$0xff]
      %v966 = vld [vmem:[#allocation4 + $0x8] sm:$0xff]
      %v967 = vld [vmem:[#allocation4 + $0x10] sm:$0xff]
      %v968 = vld [vmem:[#allocation4 + $0x18] sm:$0xff]
      %970 = vset.pattern.permute.xlu0 0
      %971 = vperm.xlu0 %970, %v897
      %v972 = vpop.permute.xlu0 %971
      %975 = vset.pattern.permute.xlu0 0
      %976 = vperm.xlu0 %975, %v899
      %v977 = vpop.permute.xlu0 %976
      %980 = vset.pattern.permute.xlu0 0
      %981 = vperm.xlu0 %980, %v901
      %v982 = vpop.permute.xlu0 %981
      %985 = vset.pattern.permute.xlu0 0
      %986 = vperm.xlu0 %985, %v903
      %v987 = vpop.permute.xlu0 %986
      %v989 = vmul.f32 %v972, %v965
      %v990 = vmul.f32 %v977, %v966
      %v991 = vmul.f32 %v982, %v967
      %v992 = vmul.f32 %v987, %v968
      %v993 = vpack.c.bf16 %v929, %v929
      %v994 = vpack.c.bf16 %v931, %v931
      %v995 = vpack.c.bf16 %v933, %v933
      %v996 = vpack.c.bf16 %v935, %v935
      %v998 = vsel %vm687, %v993, 0
      %vm1000 = vcmask 1043456
      %v1002 = vsel %vm1000, %v683, 0
      %1004 = vmatprep.subr.bf16.mxu0 0
      %1005 = vmatpush1.bf16.msra.mxu0 0
      %1006 = vmatprep.subr.bf16.mxu0 0
      %1007 = vmatpush1.bf16.msra.mxu0 0
      %1008 = vmatprep.subr.bf16.mxu0 0
      %1009 = vmatpush1.bf16.msra.mxu0 0
      %1010 = vmatprep.subr.bf16.mxu0 0
      %1011 = vmatpush1.bf16.msra.mxu0 0
      %1012 = vmatprep.subr.bf16.mxu0 0
      %1013 = vmatpush1.bf16.msra.mxu0 0
      %1014 = vmatprep.subr.bf16.mxu0 0
      %1015 = vmatpush1.bf16.msra.mxu0 0
      %1016 = vmatprep.subr.bf16.mxu0 0
      %1017 = vmatpush1.bf16.msra.mxu0 0
      %1018 = vmatprep.subr.bf16.mxu0 0
      %1019 = vmatpush1.bf16.msra.mxu0 %v1002
      %1020 = vmatprep.subr.bf16.mxu0 0
      %1021 = vmatpush2.bf16.msra.mxu0 0
      %1022 = vmatprep.subr.bf16.mxu0 0
      %1023 = vmatpush2.bf16.msra.mxu0 0
      %1024 = vmatprep.subr.bf16.mxu0 0
      %1025 = vmatpush2.bf16.msra.mxu0 0
      %1026 = vmatprep.subr.bf16.mxu0 0
      %1027 = vmatpush2.bf16.msra.mxu0 0
      %1028 = vmatprep.subr.bf16.mxu0 0
      %1029 = vmatpush2.bf16.msra.mxu0 0
      %1030 = vmatprep.subr.bf16.mxu0 0
      %1031 = vmatpush2.bf16.msra.mxu0 0
      %1032 = vmatprep.subr.bf16.mxu0 0
      %1033 = vmatpush2.bf16.msra.mxu0 0
      %1034 = vmatprep.subr.bf16.mxu0 0
      %1035 = vmatpush2.bf16.msra.mxu0 0
      %1036 = vmatprep.mubr.bf16.mxu0 0
      %1037 = vmatmul.mubr.bf16.gmra.mxu0 %v998
      %v1038 = vpop.f32.mrf.mxu0
      %v1039 = vadd.f32 0.0, %v1038
      %v1040 = vpop.f32.mrf.mxu0
      %v1041 = vpop.f32.mrf.mxu0
      %v1042 = vpop.f32.mrf.mxu0
      %1043 = vdwg.mxu0
      %v1045 = vsel %vm687, %v994, 0
      %v1048 = vsel %vm1000, %v684, 0
      %1050 = vmatprep.subr.bf16.mxu0 0
      %1051 = vmatpush1.bf16.msra.mxu0 0
      %1052 = vmatprep.subr.bf16.mxu0 0
      %1053 = vmatpush1.bf16.msra.mxu0 0
      %1054 = vmatprep.subr.bf16.mxu0 0
      %1055 = vmatpush1.bf16.msra.mxu0 0
      %1056 = vmatprep.subr.bf16.mxu0 0
      %1057 = vmatpush1.bf16.msra.mxu0 0
      %1058 = vmatprep.subr.bf16.mxu0 0
      %1059 = vmatpush1.bf16.msra.mxu0 0
      %1060 = vmatprep.subr.bf16.mxu0 0
      %1061 = vmatpush1.bf16.msra.mxu0 0
      %1062 = vmatprep.subr.bf16.mxu0 0
      %1063 = vmatpush1.bf16.msra.mxu0 0
      %1064 = vmatprep.subr.bf16.mxu0 0
      %1065 = vmatpush1.bf16.msra.mxu0 %v1048
      %1066 = vmatprep.subr.bf16.mxu0 0
      %1067 = vmatpush2.bf16.msra.mxu0 0
      %1068 = vmatprep.subr.bf16.mxu0 0
      %1069 = vmatpush2.bf16.msra.mxu0 0
      %1070 = vmatprep.subr.bf16.mxu0 0
      %1071 = vmatpush2.bf16.msra.mxu0 0
      %1072 = vmatprep.subr.bf16.mxu0 0
      %1073 = vmatpush2.bf16.msra.mxu0 0
      %1074 = vmatprep.subr.bf16.mxu0 0
      %1075 = vmatpush2.bf16.msra.mxu0 0
      %1076 = vmatprep.subr.bf16.mxu0 0
      %1077 = vmatpush2.bf16.msra.mxu0 0
      %1078 = vmatprep.subr.bf16.mxu0 0
      %1079 = vmatpush2.bf16.msra.mxu0 0
      %1080 = vmatprep.subr.bf16.mxu0 0
      %1081 = vmatpush2.bf16.msra.mxu0 0
      %1082 = vmatprep.mubr.bf16.mxu0 0
      %1083 = vmatmul.mubr.bf16.gmra.mxu0 %v1045
      %v1084 = vpop.f32.mrf.mxu0
      %v1085 = vadd.f32 0.0, %v1084
      %v1086 = vpop.f32.mrf.mxu0
      %v1087 = vpop.f32.mrf.mxu0
      %v1088 = vpop.f32.mrf.mxu0
      %1089 = vdwg.mxu0
      %v1091 = vsel %vm687, %v995, 0
      %v1094 = vsel %vm1000, %v685, 0
      %1096 = vmatprep.subr.bf16.mxu0 0
      %1097 = vmatpush1.bf16.msra.mxu0 0
      %1098 = vmatprep.subr.bf16.mxu0 0
      %1099 = vmatpush1.bf16.msra.mxu0 0
      %1100 = vmatprep.subr.bf16.mxu0 0
      %1101 = vmatpush1.bf16.msra.mxu0 0
      %1102 = vmatprep.subr.bf16.mxu0 0
      %1103 = vmatpush1.bf16.msra.mxu0 0
      %1104 = vmatprep.subr.bf16.mxu0 0
      %1105 = vmatpush1.bf16.msra.mxu0 0
      %1106 = vmatprep.subr.bf16.mxu0 0
      %1107 = vmatpush1.bf16.msra.mxu0 0
      %1108 = vmatprep.subr.bf16.mxu0 0
      %1109 = vmatpush1.bf16.msra.mxu0 0
      %1110 = vmatprep.subr.bf16.mxu0 0
      %1111 = vmatpush1.bf16.msra.mxu0 %v1094
      %1112 = vmatprep.subr.bf16.mxu0 0
      %1113 = vmatpush2.bf16.msra.mxu0 0
      %1114 = vmatprep.subr.bf16.mxu0 0
      %1115 = vmatpush2.bf16.msra.mxu0 0
      %1116 = vmatprep.subr.bf16.mxu0 0
      %1117 = vmatpush2.bf16.msra.mxu0 0
      %1118 = vmatprep.subr.bf16.mxu0 0
      %1119 = vmatpush2.bf16.msra.mxu0 0
      %1120 = vmatprep.subr.bf16.mxu0 0
      %1121 = vmatpush2.bf16.msra.mxu0 0
      %1122 = vmatprep.subr.bf16.mxu0 0
      %1123 = vmatpush2.bf16.msra.mxu0 0
      %1124 = vmatprep.subr.bf16.mxu0 0
      %1125 = vmatpush2.bf16.msra.mxu0 0
      %1126 = vmatprep.subr.bf16.mxu0 0
      %1127 = vmatpush2.bf16.msra.mxu0 0
      %1128 = vmatprep.mubr.bf16.mxu0 0
      %1129 = vmatmul.mubr.bf16.gmra.mxu0 %v1091
      %v1130 = vpop.f32.mrf.mxu0
      %v1131 = vadd.f32 0.0, %v1130
      %v1132 = vpop.f32.mrf.mxu0
      %v1133 = vpop.f32.mrf.mxu0
      %v1134 = vpop.f32.mrf.mxu0
      %1135 = vdwg.mxu0
      %v1137 = vsel %vm687, %v996, 0
      %v1140 = vsel %vm1000, %v686, 0
      %1142 = vmatprep.subr.bf16.mxu0 0
      %1143 = vmatpush1.bf16.msra.mxu0 0
      %1144 = vmatprep.subr.bf16.mxu0 0
      %1145 = vmatpush1.bf16.msra.mxu0 0
      %1146 = vmatprep.subr.bf16.mxu0 0
      %1147 = vmatpush1.bf16.msra.mxu0 0
      %1148 = vmatprep.subr.bf16.mxu0 0
      %1149 = vmatpush1.bf16.msra.mxu0 0
      %1150 = vmatprep.subr.bf16.mxu0 0
      %1151 = vmatpush1.bf16.msra.mxu0 0
      %1152 = vmatprep.subr.bf16.mxu0 0
      %1153 = vmatpush1.bf16.msra.mxu0 0
      %1154 = vmatprep.subr.bf16.mxu0 0
      %1155 = vmatpush1.bf16.msra.mxu0 0
      %1156 = vmatprep.subr.bf16.mxu0 0
      %1157 = vmatpush1.bf16.msra.mxu0 %v1140
      %1158 = vmatprep.subr.bf16.mxu0 0
      %1159 = vmatpush2.bf16.msra.mxu0 0
      %1160 = vmatprep.subr.bf16.mxu0 0
      %1161 = vmatpush2.bf16.msra.mxu0 0
      %1162 = vmatprep.subr.bf16.mxu0 0
      %1163 = vmatpush2.bf16.msra.mxu0 0
      %1164 = vmatprep.subr.bf16.mxu0 0
      %1165 = vmatpush2.bf16.msra.mxu0 0
      %1166 = vmatprep.subr.bf16.mxu0 0
      %1167 = vmatpush2.bf16.msra.mxu0 0
      %1168 = vmatprep.subr.bf16.mxu0 0
      %1169 = vmatpush2.bf16.msra.mxu0 0
      %1170 = vmatprep.subr.bf16.mxu0 0
      %1171 = vmatpush2.bf16.msra.mxu0 0
      %1172 = vmatprep.subr.bf16.mxu0 0
      %1173 = vmatpush2.bf16.msra.mxu0 0
      %1174 = vmatprep.mubr.bf16.mxu0 0
      %1175 = vmatmul.mubr.bf16.gmra.mxu0 %v1137
      %v1176 = vpop.f32.mrf.mxu0
      %v1177 = vadd.f32 0.0, %v1176
      %v1178 = vpop.f32.mrf.mxu0
      %v1179 = vpop.f32.mrf.mxu0
      %v1180 = vpop.f32.mrf.mxu0
      %1181 = vdwg.mxu0
      %v1182 = vadd.f32 %v989, %v1039
      %v1183 = vadd.f32 %v990, %v1085
      %v1184 = vadd.f32 %v991, %v1131
      %v1185 = vadd.f32 %v992, %v1177
      %1186 = vst.msk [vmem:[#allocation4] sm:$0xff] %vm687, %v1182
      %1187 = vst.msk [vmem:[#allocation4 + $0x8] sm:$0xff] %vm687, %v1183
      %1188 = vst.msk [vmem:[#allocation4 + $0x10] sm:$0xff] %vm687, %v1184
      %1189 = vst.msk [vmem:[#allocation4 + $0x18] sm:$0xff] %vm687, %v1185
      %1190 = vst.msk [vmem:[#allocation2] sm:$0xff] %vm960, %v888
      %1191 = vst.msk [vmem:[#allocation2 + $0x8] sm:$0xff] %vm960, %v889
      %1192 = vst.msk [vmem:[#allocation2 + $0x10] sm:$0xff] %vm960, %v890
      %1193 = vst.msk [vmem:[#allocation2 + $0x18] sm:$0xff] %vm960, %v891
      // Predicated region
      $region33: #{decoder_layer_forward.8} parent=27 // pred_check
        %p1194 = pneg %p206
      $region34: #{decoder_layer_forward.8} parent=27 // pred_check_branch
        %1196 = sbr.rel (%p1194) target = $region36
      $region35: #{decoder_layer_forward.8} parent=27 // pred_region
        %v1197 = vld [vmem:[#allocation4] sm:$0xff]
        %v1198 = vld [vmem:[#allocation4 + $0x8] sm:$0xff]
        %v1199 = vld [vmem:[#allocation4 + $0x10] sm:$0xff]
        %v1200 = vld [vmem:[#allocation4 + $0x18] sm:$0xff]
        %v1201 = vld [vmem:[#allocation3] sm:$0xff]
        %v1202 = vld [vmem:[#allocation3 + $0x8] sm:$0xff]
        %v1203 = vld [vmem:[#allocation3 + $0x10] sm:$0xff]
        %v1204 = vld [vmem:[#allocation3 + $0x18] sm:$0xff]
        %1206 = vset.pattern.permute.xlu0 0
        %1207 = vperm.xlu0 %1206, %v1201
        %v1208 = vpop.permute.xlu0 %1207
        %1211 = vset.pattern.permute.xlu0 0
        %1212 = vperm.xlu0 %1211, %v1202
        %v1213 = vpop.permute.xlu0 %1212
        %1216 = vset.pattern.permute.xlu0 0
        %1217 = vperm.xlu0 %1216, %v1203
        %v1218 = vpop.permute.xlu0 %1217
        %1221 = vset.pattern.permute.xlu0 0
        %1222 = vperm.xlu0 %1221, %v1204
        %v1223 = vpop.permute.xlu0 %1222
        %v1225 = vrcp.pop %v1208
        %v1226 = vmul.f32 %v1197, %v1225
        %v1227 = vrcp.pop %v1213
        %v1228 = vmul.f32 %v1198, %v1227
        %v1229 = vrcp.pop %v1218
        %v1230 = vmul.f32 %v1199, %v1229
        %v1231 = vrcp.pop %v1223
        %v1232 = vmul.f32 %v1200, %v1231
        %v1233 = vcombine.low %v1226, %v1230
        %v1234 = vcombine.high %v1226, %v1230
        %v1236 = vunpack.c.l.s4 1983009808
        %v1237 = vunpack.c.0.s8 %v1236
        %v1238 = vlaneseq
        %v1239 = vshrl.u32 %v1238, 7
        %v1240 = vsub.s32 %v1237, %v1239
        %v1241 = vrot.slane %v1233, %v1240
        %v1243 = vunpack.c.l.s4 1983009808
        %v1244 = vunpack.c.0.s8 %v1243
        %v1245 = vlaneseq
        %v1246 = vshrl.u32 %v1245, 7
        %v1247 = vsub.s32 %v1244, %v1246
        %v1248 = vrot.slane %v1234, %v1247
        %v1249 = vcombine.low %v1228, %v1232
        %v1250 = vcombine.high %v1228, %v1232
        %v1252 = vunpack.c.l.s4 1983009808
        %v1253 = vunpack.c.0.s8 %v1252
        %v1254 = vlaneseq
        %v1255 = vshrl.u32 %v1254, 7
        %v1256 = vsub.s32 %v1253, %v1255
        %v1257 = vrot.slane %v1249, %v1256
        %v1259 = vunpack.c.l.s4 1983009808
        %v1260 = vunpack.c.0.s8 %v1259
        %v1261 = vlaneseq
        %v1262 = vshrl.u32 %v1261, 7
        %v1263 = vsub.s32 %v1260, %v1262
        %v1264 = vrot.slane %v1250, %v1263
        %v1265 = vcombine.low %v1241, %v1257
        %v1266 = vcombine.high %v1241, %v1257
        %v1268 = vunpack.c.l.s4 1934713408
        %v1269 = vunpack.c.0.s8 %v1268
        %v1270 = vlaneseq
        %v1271 = vshrl.u32 %v1270, 7
        %v1272 = vsub.s32 %v1269, %v1271
        %v1273 = vrot.slane %v1265, %v1272
        %v1275 = vunpack.c.l.s4 1934713408
        %v1276 = vunpack.c.0.s8 %v1275
        %v1277 = vlaneseq
        %v1278 = vshrl.u32 %v1277, 7
        %v1279 = vsub.s32 %v1276, %v1278
        %v1280 = vrot.slane %v1266, %v1279
        %v1281 = vcombine.low %v1248, %v1264
        %v1282 = vcombine.high %v1248, %v1264
        %v1284 = vunpack.c.l.s4 1934713408
        %v1285 = vunpack.c.0.s8 %v1284
        %v1286 = vlaneseq
        %v1287 = vshrl.u32 %v1286, 7
        %v1288 = vsub.s32 %v1285, %v1287
        %v1289 = vrot.slane %v1281, %v1288
        %v1291 = vunpack.c.l.s4 1934713408
        %v1292 = vunpack.c.0.s8 %v1291
        %v1293 = vlaneseq
        %v1294 = vshrl.u32 %v1293, 7
        %v1295 = vsub.s32 %v1292, %v1294
        %v1296 = vrot.slane %v1282, %v1295
        %v1297 = vcombine.high %v1273, 0.0
        %v1298 = vcombine.high %v1280, 0.0
        %v1299 = vcombine.high %v1289, 0.0
        %v1300 = vcombine.high %v1296, 0.0
        %v1301 = vcombine.low %v1273, %v1280
        %v1303 = vunpack.c.l.s4 1983009808
        %v1304 = vunpack.c.0.s8 %v1303
        %v1305 = vlaneseq
        %v1306 = vshrl.u32 %v1305, 7
        %v1307 = vsub.s32 %v1304, %v1306
        %v1308 = vrot.slane %v1301, %v1307
        %v1309 = vcombine.low %v1297, %v1298
        %v1311 = vunpack.c.l.s4 1983009808
        %v1312 = vunpack.c.0.s8 %v1311
        %v1313 = vlaneseq
        %v1314 = vshrl.u32 %v1313, 7
        %v1315 = vsub.s32 %v1312, %v1314
        %v1316 = vrot.slane %v1309, %v1315
        %v1317 = vcombine.low %v1289, %v1296
        %v1319 = vunpack.c.l.s4 1983009808
        %v1320 = vunpack.c.0.s8 %v1319
        %v1321 = vlaneseq
        %v1322 = vshrl.u32 %v1321, 7
        %v1323 = vsub.s32 %v1320, %v1322
        %v1324 = vrot.slane %v1317, %v1323
        %v1325 = vcombine.low %v1299, %v1300
        %v1327 = vunpack.c.l.s4 1983009808
        %v1328 = vunpack.c.0.s8 %v1327
        %v1329 = vlaneseq
        %v1330 = vshrl.u32 %v1329, 7
        %v1331 = vsub.s32 %v1328, %v1330
        %v1332 = vrot.slane %v1325, %v1331
        %v1333 = vcombine.low %v1308, %v1316
        %v1334 = vcombine.high %v1308, %v1316
        %v1336 = vunpack.c.l.s4 1934713408
        %v1337 = vunpack.c.0.s8 %v1336
        %v1338 = vlaneseq
        %v1339 = vshrl.u32 %v1338, 7
        %v1340 = vsub.s32 %v1337, %v1339
        %v1341 = vrot.slane %v1333, %v1340
        %v1343 = vunpack.c.l.s4 1934713408
        %v1344 = vunpack.c.0.s8 %v1343
        %v1345 = vlaneseq
        %v1346 = vshrl.u32 %v1345, 7
        %v1347 = vsub.s32 %v1344, %v1346
        %v1348 = vrot.slane %v1334, %v1347
        %v1349 = vcombine.low %v1324, %v1332
        %v1350 = vcombine.high %v1324, %v1332
        %v1352 = vunpack.c.l.s4 1934713408
        %v1353 = vunpack.c.0.s8 %v1352
        %v1354 = vlaneseq
        %v1355 = vshrl.u32 %v1354, 7
        %v1356 = vsub.s32 %v1353, %v1355
        %v1357 = vrot.slane %v1349, %v1356
        %v1359 = vunpack.c.l.s4 1934713408
        %v1360 = vunpack.c.0.s8 %v1359
        %v1361 = vlaneseq
        %v1362 = vshrl.u32 %v1361, 7
        %v1363 = vsub.s32 %v1360, %v1362
        %v1364 = vrot.slane %v1350, %v1363
        %v1365 = vcombine.low %v1341, %v1357
        %v1366 = vcombine.high %v1341, %v1357
        %v1367 = vcombine.low %v1348, %v1364
        %v1368 = vcombine.high %v1348, %v1364
        %1370 = vrot.lane.b32.xlu0 %v1366, 8
        %v1371 = vpop.permute.xlu0 %1370
        %1374 = vrot.lane.b32.xlu0 %v1367, 16
        %v1375 = vpop.permute.xlu0 %1374
        %1378 = vrot.lane.b32.xlu0 %v1368, 24
        %v1379 = vpop.permute.xlu0 %1378
        %v1381 = vsel %vm687, %v1365, %v1371
        %vm1382 = vcmask 130048
        %v1383 = vsel %vm1382, %v1381, %v1375
        %vm1384 = vcmask 195584
        %v1385 = vsel %vm1384, %v1383, %v1379
        %vm1386 = vcmask 261120
        %1387 = vst.msk [vmem:[%s204] sm:$0xff] %vm1386, %v1385
      $region36: #{decoder_layer_forward.8} parent=27 // pred_fallthru
        _
      %p1388 = scmp.lt.s32.totalorder %s18, 1
      %s1389 = scalar_select %p1388, %s18, 1
      %p1390 = scmp.lt.s32.totalorder %s19, 0
      %s1391 = scalar_select %p1390, %s19, 0
      %s1392 = sadd.s32 %s1391, %s1389
      %s1393 = smul.addr %s1392, 8
      %s1394 = scalar_lea.vmem %s2, %s1393
      // Predicated region
      $region37: #{decoder_layer_forward.8} parent=27 // pred_check
        %p1395 = pneg %p108
      $region38: #{decoder_layer_forward.8} parent=27 // pred_check_branch
        %1397 = sbr.rel (%p1395) target = $region40
      $region39: #{decoder_layer_forward.8} parent=27 // pred_region
        _
      $region40: #{decoder_layer_forward.8} parent=27 // pred_fallthru
        _
    $region28: #{decoder_layer_forward.8} parent=5 // pred_fallthru
      _
    %p1398 = scmp.le.s32.totalorder 2, %s8
    // Predicated region
    $region41: #{decoder_layer_forward.8} parent=5 // pred_check
      %p1399 = pneg %p1398
    $region42: #{decoder_layer_forward.8} parent=5 // pred_check_branch
      %1401 = sbr.rel (%p1399) target = $region44
    $region43: #{decoder_layer_forward.8} parent=5 // pred_region
      %s1402 = ssub.s32 %s8, 2
      // Predicated region
      $region45: #{decoder_layer_forward.8} parent=43 // pred_check
        %p1403 = pneg %p114
      $region46: #{decoder_layer_forward.8} parent=43 // pred_check_branch
        %1405 = sbr.rel (%p1403) target = $region48
      $region47: #{decoder_layer_forward.8} parent=43 // pred_region
        %p1406 = scmp.lt.s32.totalorder %s21, 1
        %s1407 = scalar_select %p1406, %s21, 1
        %p1408 = scmp.lt.s32.totalorder %s22, 0
        %s1409 = scalar_select %p1408, %s22, 0
        %s1410 = sadd.s32 %s1409, %s1407
        %s1411 = smul.addr %s1410, 8
        %s1412 = scalar_lea.vmem %s2, %s1411
      $region48: #{decoder_layer_forward.8} parent=43 // pred_fallthru
        _
    $region44: #{decoder_layer_forward.8} parent=5 // pred_fallthru
      _
  $region6: #{decoder_layer_forward.8} parent=0 // loop_footer
    %s12 = sadd.s32 1, %s8
  $region7: #{decoder_layer_forward.8} parent=0 // loop_footer_branch
    %7 = sbr.rel target = $region3
  $region8: #{decoder_layer_forward.8} parent=0 // loop_exit
    _

// kernel: decoder_layer_forward.12
$region0: #{decoder_layer_forward.12}
  #allocation0 [shape = 'u32[]', space=smem, size = 0x4, offset = 0x4, fixed_abs, tag = 'smem constant byte address 0x4 - core index']
  #allocation1 [shape = 'u32[144,128]{1,0:T(1,128)}', space=vmem, size = 0x12000, scoped, tag = 'internal scratch']
  %s0 = inlined_call_operand.vmem [shape: f32[16,32], index: 0, kind: input, shape index: {}]
  %s1 = inlined_call_operand.vmem [shape: f32[16,32], index: 1, kind: input, shape index: {}]
  %s2 = inlined_call_operand.vmem [shape: bf16[32,32], index: 2, kind: input, shape index: {}]
  %s3 = inlined_call_operand.vmem [shape: f32[1,32], index: 3, kind: input, shape index: {}]
  %s4 = inlined_call_operand.vmem [shape: f32[1,32], index: 4, kind: input, shape index: {}]
  %s5 = inlined_call_operand.vmem [shape: f32[1,32], index: 5, kind: input, shape index: {}]
  %s6 = inlined_call_operand.vmem [shape: f32[16,32], index: 6, kind: output, shape index: {}]
  %s7 = sld [smem:[#allocation0]]
  $region34: #{decoder_layer_forward.12} parent=0
    _
  %s9 = ssub.s32 1, %s7
  %s10 = scalar_select 0, %s9, %s7
  // Predicated region
  $region2: #{decoder_layer_forward.12} parent=0 // pred_check
    _
  $region3: #{decoder_layer_forward.12} parent=0 // pred_check_branch
    %12 = sbr.rel (0) target = $region5
  $region4: #{decoder_layer_forward.12} parent=0 // pred_region
    _
  $region5: #{decoder_layer_forward.12} parent=0 // pred_fallthru
    _
  // Predicated region
  $region6: #{decoder_layer_forward.12} parent=0 // pred_check
    _
  $region7: #{decoder_layer_forward.12} parent=0 // pred_check_branch
    %14 = sbr.rel (0) target = $region9
  $region8: #{decoder_layer_forward.12} parent=0 // pred_region
    _
  $region9: #{decoder_layer_forward.12} parent=0 // pred_fallthru
    _
  // Predicated region
  $region10: #{decoder_layer_forward.12} parent=0 // pred_check
    _
  $region11: #{decoder_layer_forward.12} parent=0 // pred_check_branch
    %16 = sbr.rel (0) target = $region13
  $region12: #{decoder_layer_forward.12} parent=0 // pred_region
    _
  $region13: #{decoder_layer_forward.12} parent=0 // pred_fallthru
    _
  // Predicated region
  $region14: #{decoder_layer_forward.12} parent=0 // pred_check
    _
  $region15: #{decoder_layer_forward.12} parent=0 // pred_check_branch
    %18 = sbr.rel (0) target = $region17
  $region16: #{decoder_layer_forward.12} parent=0 // pred_region
    _
  $region17: #{decoder_layer_forward.12} parent=0 // pred_fallthru
    _
  // Predicated region
  $region18: #{decoder_layer_forward.12} parent=0 // pred_check
    _
  $region19: #{decoder_layer_forward.12} parent=0 // pred_check_branch
    %20 = sbr.rel (0) target = $region21
  $region20: #{decoder_layer_forward.12} parent=0 // pred_region
    _
  $region21: #{decoder_layer_forward.12} parent=0 // pred_fallthru
    _
  // Predicated region
  $region22: #{decoder_layer_forward.12} parent=0 // pred_check
    _
  $region23: #{decoder_layer_forward.12} parent=0 // pred_check_branch
    %22 = sbr.rel (0) target = $region25
  $region24: #{decoder_layer_forward.12} parent=0 // pred_region
    _
  $region25: #{decoder_layer_forward.12} parent=0 // pred_fallthru
    _
  %v24 = vld [vmem:[%s0] sm:$0xff]
  %v25 = vld [vmem:[%s0 + $0x8] sm:$0xff]
  %v26 = vpack.c.bf16 %v25, %v24
  %v27 = vld [vmem:[%s2] sm:$0xf]
  %v28 = vld [vmem:[%s2 + $0x4] sm:$0xf]
  %v29 = vld [vmem:[%s2 + $0x8] sm:$0xf]
  %v30 = vld [vmem:[%s2 + $0xc] sm:$0xf]
  %v31 = vld [vmem:[%s3] sm:$0x1]
  %v33 = vlaneseq
  %v34 = vshrl.u32 %v33, 7
  %v35 = vsub.s32 0, %v34
  %v36 = vrot.slane %v31, %v35
  %v42 = vunpack.c.l.b16 %v27
  %v43 = vunpack.c.l.b16 %v28
  %v44 = vunpack.c.l.b16 %v29
  %v45 = vunpack.c.l.b16 %v30
  %v46 = vpack.c.b16 %v43, %v42
  %v47 = vpack.c.b16 %v45, %v44
  %vm50 = vcmask 261120
  %v52 = vsel %vm50, %v26, 0
  %54 = vmatprep.subr.bf16.mxu0 0
  %55 = vmatpush1.bf16.msra.mxu0 0
  %56 = vmatprep.subr.bf16.mxu0 0
  %57 = vmatpush1.bf16.msra.mxu0 0
  %58 = vmatprep.subr.bf16.mxu0 0
  %59 = vmatpush1.bf16.msra.mxu0 0
  %60 = vmatprep.subr.bf16.mxu0 0
  %61 = vmatpush1.bf16.msra.mxu0 0
  %62 = vmatprep.subr.bf16.mxu0 0
  %63 = vmatpush1.bf16.msra.mxu0 0
  %64 = vmatprep.subr.bf16.mxu0 0
  %65 = vmatpush1.bf16.msra.mxu0 0
  %66 = vmatprep.subr.bf16.mxu0 0
  %67 = vmatpush1.bf16.msra.mxu0 %v47
  %68 = vmatprep.subr.bf16.mxu0 0
  %69 = vmatpush1.bf16.msra.mxu0 %v46
  %70 = vmatprep.subr.bf16.mxu0 0
  %71 = vmatpush2.bf16.msra.mxu0 0
  %72 = vmatprep.subr.bf16.mxu0 0
  %73 = vmatpush2.bf16.msra.mxu0 0
  %74 = vmatprep.subr.bf16.mxu0 0
  %75 = vmatpush2.bf16.msra.mxu0 0
  %76 = vmatprep.subr.bf16.mxu0 0
  %77 = vmatpush2.bf16.msra.mxu0 0
  %78 = vmatprep.subr.bf16.mxu0 0
  %79 = vmatpush2.bf16.msra.mxu0 0
  %80 = vmatprep.subr.bf16.mxu0 0
  %81 = vmatpush2.bf16.msra.mxu0 0
  %82 = vmatprep.subr.bf16.mxu0 0
  %83 = vmatpush2.bf16.msra.mxu0 0
  %84 = vmatprep.subr.bf16.mxu0 0
  %85 = vmatpush2.bf16.msra.mxu0 0
  %86 = vmatprep.mubr.bf16.mxu0 0
  %87 = vmatmul.mubr.bf16.gmra.mxu0 %v52
  %v88 = vpop.f32.mrf.mxu0
  %v89 = vadd.f32 %v36, %v88
  %v90 = vpop.f32.mrf.mxu0
  %v91 = vpop.f32.mrf.mxu0
  %v92 = vadd.f32 %v36, %v91
  %v93 = vpop.f32.mrf.mxu0
  %94 = vdwg.mxu0
  %v95 = vld [vmem:[%s1] sm:$0xff]
  %v96 = vld [vmem:[%s1 + $0x8] sm:$0xff]
  %v97 = vadd.f32 %v89, %v95
  %v98 = vadd.f32 %v92, %v96
  %v99 = vsel %vm50, %v97, 0.0
  %100 = vadd.xlane.f32.xlu0 %v99
  %v101 = vpop.xlane.xlu0 %100
  %v102 = vsel %vm50, %v98, 0.0
  %103 = vadd.xlane.f32.xlu0 %v102
  %v104 = vpop.xlane.xlu0 %103
  %v105 = vrcp.pop 32.0
  %v106 = vmul.f32 %v101, %v105
  %v107 = vmul.f32 %v104, %v105
  %v108 = vsub.f32 %v97, %v106
  %v109 = vsub.f32 %v98, %v107
  %v110 = vmul.f32 %v108, %v108
  %v111 = vmul.f32 %v109, %v109
  %v112 = vsel %vm50, %v110, 0.0
  %113 = vadd.xlane.f32.xlu0 %v112
  %v114 = vpop.xlane.xlu0 %113
  %v115 = vsel %vm50, %v111, 0.0
  %116 = vadd.xlane.f32.xlu0 %v115
  %v117 = vpop.xlane.xlu0 %116
  %v118 = vmul.f32 %v114, %v105
  %v119 = vmul.f32 %v117, %v105
  %v120 = vadd.f32 %v118, 1e-05
  %v121 = vadd.f32 %v119, 1e-05
  %v122 = vrsqrt.pop %v120
  %v123 = vrsqrt.pop %v121
  %v124 = vmul.f32 %v108, %v122
  %v125 = vmul.f32 %v109, %v123
  %v126 = vld [vmem:[%s4] sm:$0x1]
  %v128 = vlaneseq
  %v129 = vshrl.u32 %v128, 7
  %v130 = vsub.s32 0, %v129
  %v131 = vrot.slane %v126, %v130
  %v133 = vmul.f32 %v124, %v131
  %v134 = vmul.f32 %v125, %v131
  %v135 = vld [vmem:[%s5] sm:$0x1]
  %v137 = vlaneseq
  %v138 = vshrl.u32 %v137, 7
  %v139 = vsub.s32 0, %v138
  %v140 = vrot.slane %v135, %v139
  %v142 = vadd.f32 %v133, %v140
  %v143 = vadd.f32 %v134, %v140
  %144 = vst.msk [vmem:[%s6] sm:$0xff] %vm50, %v142
  %145 = vst.msk [vmem:[%s6 + $0x8] sm:$0xff] %vm50, %v143
  // Predicated region
  $region26: #{decoder_layer_forward.12} parent=0 // pred_check
    _
  $region27: #{decoder_layer_forward.12} parent=0 // pred_check_branch
    %147 = sbr.rel (0) target = $region29
  $region28: #{decoder_layer_forward.12} parent=0 // pred_region
    _
  $region29: #{decoder_layer_forward.12} parent=0 // pred_fallthru
    _
  // Predicated region
  $region30: #{decoder_layer_forward.12} parent=0 // pred_check
    _
  $region31: #{decoder_layer_forward.12} parent=0 // pred_check_branch
    %149 = sbr.rel (0) target = $region33
  $region32: #{decoder_layer_forward.12} parent=0 // pred_region
    _
  $region33: #{decoder_layer_forward.12} parent=0 // pred_fallthru
    _

// kernel: decoder_layer_forward.13
$region0: #{decoder_layer_forward.13}
  #allocation0 [shape = 'u32[]', space=smem, size = 0x4, offset = 0x4, fixed_abs, tag = 'smem constant byte address 0x4 - core index']
  #allocation1 [shape = 'u32[144,128]{1,0:T(1,128)}', space=vmem, size = 0x12000, scoped, tag = 'internal scratch']
  #allocation2 [shape = 'f32[16,32]{1,0:T(8,128)}', space=vmem, size = 0x2000, scoped, tag = 'scratch operand']
  %s0 = inlined_call_operand.vmem [shape: f32[16,32], index: 0, kind: input, shape index: {}]
  %s1 = inlined_call_operand.vmem [shape: bf16[32,64], index: 1, kind: input, shape index: {}]
  %s2 = inlined_call_operand.vmem [shape: f32[1,64], index: 2, kind: input, shape index: {}]
  %s3 = inlined_call_operand.vmem [shape: bf16[64,32], index: 3, kind: input, shape index: {}]
  %s4 = inlined_call_operand.vmem [shape: f32[1,32], index: 4, kind: input, shape index: {}]
  %s5 = inlined_call_operand.vmem [shape: f32[1,32], index: 5, kind: input, shape index: {}]
  %s6 = inlined_call_operand.vmem [shape: f32[1,32], index: 6, kind: input, shape index: {}]
  %s7 = inlined_call_operand.vmem [shape: f32[16,32], index: 7, kind: output, shape index: {}]
  %s8 = sld [smem:[#allocation0]]
  $region46: #{decoder_layer_forward.13} parent=0
    _
  %s10 = ssub.s32 1, %s8
  %s11 = scalar_select 0, %s10, %s8
  // Predicated region
  $region2: #{decoder_layer_forward.13} parent=0 // pred_check
    _
  $region3: #{decoder_layer_forward.13} parent=0 // pred_check_branch
    %13 = sbr.rel (0) target = $region5
  $region4: #{decoder_layer_forward.13} parent=0 // pred_region
    _
  $region5: #{decoder_layer_forward.13} parent=0 // pred_fallthru
    _
  // Predicated region
  $region6: #{decoder_layer_forward.13} parent=0 // pred_check
    _
  $region7: #{decoder_layer_forward.13} parent=0 // pred_check_branch
    %15 = sbr.rel (0) target = $region9
  $region8: #{decoder_layer_forward.13} parent=0 // pred_region
    _
  $region9: #{decoder_layer_forward.13} parent=0 // pred_fallthru
    _
  // Predicated region
  $region10: #{decoder_layer_forward.13} parent=0 // pred_check
    _
  $region11: #{decoder_layer_forward.13} parent=0 // pred_check_branch
    %17 = sbr.rel (0) target = $region13
  $region12: #{decoder_layer_forward.13} parent=0 // pred_region
    _
  $region13: #{decoder_layer_forward.13} parent=0 // pred_fallthru
    _
  // Predicated region
  $region14: #{decoder_layer_forward.13} parent=0 // pred_check
    _
  $region15: #{decoder_layer_forward.13} parent=0 // pred_check_branch
    %19 = sbr.rel (0) target = $region17
  $region16: #{decoder_layer_forward.13} parent=0 // pred_region
    _
  $region17: #{decoder_layer_forward.13} parent=0 // pred_fallthru
    _
  // Predicated region
  $region18: #{decoder_layer_forward.13} parent=0 // pred_check
    _
  $region19: #{decoder_layer_forward.13} parent=0 // pred_check_branch
    %21 = sbr.rel (0) target = $region21
  $region20: #{decoder_layer_forward.13} parent=0 // pred_region
    _
  $region21: #{decoder_layer_forward.13} parent=0 // pred_fallthru
    _
  // Predicated region
  $region22: #{decoder_layer_forward.13} parent=0 // pred_check
    _
  $region23: #{decoder_layer_forward.13} parent=0 // pred_check_branch
    %23 = sbr.rel (0) target = $region25
  $region24: #{decoder_layer_forward.13} parent=0 // pred_region
    _
  $region25: #{decoder_layer_forward.13} parent=0 // pred_fallthru
    _
  // Predicated region
  $region26: #{decoder_layer_forward.13} parent=0 // pred_check
    _
  $region27: #{decoder_layer_forward.13} parent=0 // pred_check_branch
    %25 = sbr.rel (0) target = $region29
  $region28: #{decoder_layer_forward.13} parent=0 // pred_region
    _
  $region29: #{decoder_layer_forward.13} parent=0 // pred_fallthru
    _
  %p27 = scmp.eq.s32.totalorder 0, 0
  // Predicated region
  $region30: #{decoder_layer_forward.13} parent=0 // pred_check
    %p28 = pneg %p27
  $region31: #{decoder_layer_forward.13} parent=0 // pred_check_branch
    %30 = sbr.rel (%p28) target = $region33
  $region32: #{decoder_layer_forward.13} parent=0 // pred_region
    %vm31 = vcmask 261120
    %32 = vst.msk [vmem:[#allocation2] sm:$0xff] %vm31, 0.0
    %33 = vst.msk [vmem:[#allocation2 + $0x8] sm:$0xff] %vm31, 0.0
  $region33: #{decoder_layer_forward.13} parent=0 // pred_fallthru
    _
  %v34 = vld [vmem:[%s0] sm:$0xff]
  %v35 = vld [vmem:[%s0 + $0x8] sm:$0xff]
  %v36 = vpack.c.bf16 %v35, %v34
  %v37 = vld [vmem:[%s1] sm:$0xf]
  %v38 = vld [vmem:[%s1 + $0x4] sm:$0xf]
  %v39 = vld [vmem:[%s1 + $0x8] sm:$0xf]
  %v40 = vld [vmem:[%s1 + $0xc] sm:$0xf]
  %v41 = vld [vmem:[%s2] sm:$0x1]
  %v43 = vlaneseq
  %v44 = vshrl.u32 %v43, 7
  %v45 = vsub.s32 0, %v44
  %v46 = vrot.slane %v41, %v45
  %v52 = vunpack.c.l.b16 %v37
  %v53 = vunpack.c.l.b16 %v38
  %v54 = vunpack.c.l.b16 %v39
  %v55 = vunpack.c.l.b16 %v40
  %v56 = vpack.c.b16 %v53, %v52
  %v57 = vpack.c.b16 %v55, %v54
  %vm60 = vcmask 261120
  %v62 = vsel %vm60, %v36, 0
  %64 = vmatprep.subr.bf16.mxu0 0
  %65 = vmatpush1.bf16.msra.mxu0 0
  %66 = vmatprep.subr.bf16.mxu0 0
  %67 = vmatpush1.bf16.msra.mxu0 0
  %68 = vmatprep.subr.bf16.mxu0 0
  %69 = vmatpush1.bf16.msra.mxu0 0
  %70 = vmatprep.subr.bf16.mxu0 0
  %71 = vmatpush1.bf16.msra.mxu0 0
  %72 = vmatprep.subr.bf16.mxu0 0
  %73 = vmatpush1.bf16.msra.mxu0 0
  %74 = vmatprep.subr.bf16.mxu0 0
  %75 = vmatpush1.bf16.msra.mxu0 0
  %76 = vmatprep.subr.bf16.mxu0 0
  %77 = vmatpush1.bf16.msra.mxu0 %v57
  %78 = vmatprep.subr.bf16.mxu0 0
  %79 = vmatpush1.bf16.msra.mxu0 %v56
  %80 = vmatprep.subr.bf16.mxu0 0
  %81 = vmatpush2.bf16.msra.mxu0 0
  %82 = vmatprep.subr.bf16.mxu0 0
  %83 = vmatpush2.bf16.msra.mxu0 0
  %84 = vmatprep.subr.bf16.mxu0 0
  %85 = vmatpush2.bf16.msra.mxu0 0
  %86 = vmatprep.subr.bf16.mxu0 0
  %87 = vmatpush2.bf16.msra.mxu0 0
  %88 = vmatprep.subr.bf16.mxu0 0
  %89 = vmatpush2.bf16.msra.mxu0 0
  %90 = vmatprep.subr.bf16.mxu0 0
  %91 = vmatpush2.bf16.msra.mxu0 0
  %92 = vmatprep.subr.bf16.mxu0 0
  %93 = vmatpush2.bf16.msra.mxu0 0
  %94 = vmatprep.subr.bf16.mxu0 0
  %95 = vmatpush2.bf16.msra.mxu0 0
  %96 = vmatprep.mubr.bf16.mxu0 0
  %97 = vmatmul.mubr.bf16.gmra.mxu0 %v62
  %v98 = vpop.f32.mrf.mxu0
  %v99 = vadd.f32 %v46, %v98
  %v100 = vpop.f32.mrf.mxu0
  %v101 = vpop.f32.mrf.mxu0
  %v102 = vadd.f32 %v46, %v101
  %v103 = vpop.f32.mrf.mxu0
  %104 = vdwg.mxu0
  %v105 = vmax.f32 %v99, 0.0
  %v106 = vmax.f32 %v102, 0.0
  %v107 = vld [vmem:[#allocation2] sm:$0xff]
  %v108 = vld [vmem:[#allocation2 + $0x8] sm:$0xff]
  %v109 = vpack.c.bf16 %v106, %v105
  %v110 = vld [vmem:[%s3] sm:$0xf]
  %v111 = vld [vmem:[%s3 + $0x4] sm:$0xf]
  %v112 = vld [vmem:[%s3 + $0x8] sm:$0xf]
  %v113 = vld [vmem:[%s3 + $0xc] sm:$0xf]
  %v114 = vld [vmem:[%s3 + $0x10] sm:$0xf]
  %v115 = vld [vmem:[%s3 + $0x14] sm:$0xf]
  %v116 = vld [vmem:[%s3 + $0x18] sm:$0xf]
  %v117 = vld [vmem:[%s3 + $0x1c] sm:$0xf]
  %v126 = vunpack.c.l.b16 %v110
  %v127 = vunpack.c.l.b16 %v111
  %v128 = vunpack.c.l.b16 %v112
  %v129 = vunpack.c.l.b16 %v113
  %v130 = vunpack.c.l.b16 %v114
  %v131 = vunpack.c.l.b16 %v115
  %v132 = vunpack.c.l.b16 %v116
  %v133 = vunpack.c.l.b16 %v117
  %v134 = vpack.c.b16 %v127, %v126
  %v135 = vpack.c.b16 %v129, %v128
  %v136 = vpack.c.b16 %v131, %v130
  %v137 = vpack.c.b16 %v133, %v132
  %vm142 = vcmask 523264
  %v144 = vsel %vm142, %v109, 0
  %146 = vmatprep.subr.bf16.mxu0 0
  %147 = vmatpush1.bf16.msra.mxu0 0
  %148 = vmatprep.subr.bf16.mxu0 0
  %149 = vmatpush1.bf16.msra.mxu0 0
  %150 = vmatprep.subr.bf16.mxu0 0
  %151 = vmatpush1.bf16.msra.mxu0 0
  %152 = vmatprep.subr.bf16.mxu0 0
  %153 = vmatpush1.bf16.msra.mxu0 0
  %154 = vmatprep.subr.bf16.mxu0 0
  %155 = vmatpush1.bf16.msra.mxu0 %v137
  %156 = vmatprep.subr.bf16.mxu0 0
  %157 = vmatpush1.bf16.msra.mxu0 %v136
  %158 = vmatprep.subr.bf16.mxu0 0
  %159 = vmatpush1.bf16.msra.mxu0 %v135
  %160 = vmatprep.subr.bf16.mxu0 0
  %161 = vmatpush1.bf16.msra.mxu0 %v134
  %162 = vmatprep.subr.bf16.mxu0 0
  %163 = vmatpush2.bf16.msra.mxu0 0
  %164 = vmatprep.subr.bf16.mxu0 0
  %165 = vmatpush2.bf16.msra.mxu0 0
  %166 = vmatprep.subr.bf16.mxu0 0
  %167 = vmatpush2.bf16.msra.mxu0 0
  %168 = vmatprep.subr.bf16.mxu0 0
  %169 = vmatpush2.bf16.msra.mxu0 0
  %170 = vmatprep.subr.bf16.mxu0 0
  %171 = vmatpush2.bf16.msra.mxu0 0
  %172 = vmatprep.subr.bf16.mxu0 0
  %173 = vmatpush2.bf16.msra.mxu0 0
  %174 = vmatprep.subr.bf16.mxu0 0
  %175 = vmatpush2.bf16.msra.mxu0 0
  %176 = vmatprep.subr.bf16.mxu0 0
  %177 = vmatpush2.bf16.msra.mxu0 0
  %178 = vmatprep.mubr.bf16.mxu0 0
  %179 = vmatmul.mubr.bf16.gmra.mxu0 %v144
  %v180 = vpop.f32.mrf.mxu0
  %v181 = vadd.f32 0.0, %v180
  %v182 = vpop.f32.mrf.mxu0
  %v183 = vpop.f32.mrf.mxu0
  %v184 = vadd.f32 0.0, %v183
  %v185 = vpop.f32.mrf.mxu0
  %186 = vdwg.mxu0
  %v187 = vadd.f32 %v107, %v181
  %v188 = vadd.f32 %v108, %v184
  %189 = vst.msk [vmem:[#allocation2] sm:$0xff] %vm60, %v187
  %190 = vst.msk [vmem:[#allocation2 + $0x8] sm:$0xff] %vm60, %v188
  // Predicated region
  $region34: #{decoder_layer_forward.13} parent=0 // pred_check
    %p191 = pneg %p27
  $region35: #{decoder_layer_forward.13} parent=0 // pred_check_branch
    %193 = sbr.rel (%p191) target = $region37
  $region36: #{decoder_layer_forward.13} parent=0 // pred_region
    %v194 = vld [vmem:[#allocation2] sm:$0xff]
    %v195 = vld [vmem:[#allocation2 + $0x8] sm:$0xff]
    %v196 = vld [vmem:[%s4] sm:$0x1]
    %v198 = vlaneseq
    %v199 = vshrl.u32 %v198, 7
    %v200 = vsub.s32 0, %v199
    %v201 = vrot.slane %v196, %v200
    %v203 = vadd.f32 %v194, %v201
    %v204 = vadd.f32 %v195, %v201
    %v205 = vld [vmem:[%s0] sm:$0xff]
    %v206 = vld [vmem:[%s0 + $0x8] sm:$0xff]
    %v207 = vadd.f32 %v203, %v205
    %v208 = vadd.f32 %v204, %v206
    %v209 = vsel %vm60, %v207, 0.0
    %210 = vadd.xlane.f32.xlu0 %v209
    %v211 = vpop.xlane.xlu0 %210
    %v212 = vsel %vm60, %v208, 0.0
    %213 = vadd.xlane.f32.xlu0 %v212
    %v214 = vpop.xlane.xlu0 %213
    %v215 = vrcp.pop 32.0
    %v216 = vmul.f32 %v211, %v215
    %v217 = vmul.f32 %v214, %v215
    %v218 = vsub.f32 %v207, %v216
    %v219 = vsub.f32 %v208, %v217
    %v220 = vmul.f32 %v218, %v218
    %v221 = vmul.f32 %v219, %v219
    %v222 = vsel %vm60, %v220, 0.0
    %223 = vadd.xlane.f32.xlu0 %v222
    %v224 = vpop.xlane.xlu0 %223
    %v225 = vsel %vm60, %v221, 0.0
    %226 = vadd.xlane.f32.xlu0 %v225
    %v227 = vpop.xlane.xlu0 %226
    %v228 = vmul.f32 %v224, %v215
    %v229 = vmul.f32 %v227, %v215
    %v230 = vadd.f32 %v228, 1e-05
    %v231 = vadd.f32 %v229, 1e-05
    %v232 = vrsqrt.pop %v230
    %v233 = vrsqrt.pop %v231
    %v234 = vmul.f32 %v218, %v232
    %v235 = vmul.f32 %v219, %v233
    %v236 = vld [vmem:[%s5] sm:$0x1]
    %v238 = vlaneseq
    %v239 = vshrl.u32 %v238, 7
    %v240 = vsub.s32 0, %v239
    %v241 = vrot.slane %v236, %v240
    %v243 = vmul.f32 %v234, %v241
    %v244 = vmul.f32 %v235, %v241
    %v245 = vld [vmem:[%s6] sm:$0x1]
    %v247 = vlaneseq
    %v248 = vshrl.u32 %v247, 7
    %v249 = vsub.s32 0, %v248
    %v250 = vrot.slane %v245, %v249
    %v252 = vadd.f32 %v243, %v250
    %v253 = vadd.f32 %v244, %v250
    %254 = vst.msk [vmem:[%s7] sm:$0xff] %vm60, %v252
    %255 = vst.msk [vmem:[%s7 + $0x8] sm:$0xff] %vm60, %v253
  $region37: #{decoder_layer_forward.13} parent=0 // pred_fallthru
    _
  // Predicated region
  $region38: #{decoder_layer_forward.13} parent=0 // pred_check
    _
  $region39: #{decoder_layer_forward.13} parent=0 // pred_check_branch
    %257 = sbr.rel (0) target = $region41
  $region40: #{decoder_layer_forward.13} parent=0 // pred_region
    _
  $region41: #{decoder_layer_forward.13} parent=0 // pred_fallthru
    _
  // Predicated region
  $region42: #{decoder_layer_forward.13} parent=0 // pred_check
    _
  $region43: #{decoder_layer_forward.13} parent=0 // pred_check_branch
    %259 = sbr.rel (0) target = $region45
  $region44: #{decoder_layer_forward.13} parent=0 // pred_region
    _
  $region45: #{decoder_layer_forward.13} parent=0 // pred_fallthru
    _

// kernel: decoder_layer_forward.11
$region0: #{decoder_layer_forward.11}
  #allocation0 [shape = 'u32[]', space=smem, size = 0x4, offset = 0x4, fixed_abs, tag = 'smem constant byte address 0x4 - core index']
  #allocation1 [shape = 'u32[144,128]{1,0:T(1,128)}', space=vmem, size = 0x12000, scoped, tag = 'internal scratch']
  #allocation2 [shape = 'f32[4,8,1]{2,1,0:T(8,128)}', space=vmem, size = 0x4000, scoped, tag = 'scratch operand']
  #allocation3 [shape = 'f32[4,8,1]{2,1,0:T(8,128)}', space=vmem, size = 0x4000, scoped, tag = 'scratch operand']
  #allocation4 [shape = 'f32[4,8,8]{2,1,0:T(8,128)}', space=vmem, size = 0x4000, scoped, tag = 'scratch operand']
  %s0 = inlined_call_operand.vmem [shape: f32[2,8,32], index: 0, kind: input, shape index: {}]
  %s1 = inlined_call_operand.vmem [shape: f32[2,12,64], index: 1, kind: input, shape index: {}]
  %s2 = inlined_call_operand.vmem [shape: f32[2,8,32], index: 2, kind: output, shape index: {}]
  %s3 = sld [smem:[#allocation0]]
  $region49: #{decoder_layer_forward.11} parent=0
    _
  %s5 = ssub.s32 1, %s3
  %s6 = scalar_select 0, %s5, %s3
  loop: start=0, step=1, limit=4
  $region2: #{decoder_layer_forward.11} parent=0 // loop_pre_header
    _
  $region3: #{decoder_layer_forward.11} parent=0 // loop_header
    %s8 = sphi 0, %s12
    %p9 = scmp.ge.s32.totalorder %s8, 4
    %s15 = sphi 0, %s34
    %s16 = sphi 0, %s30
    %s17 = sphi 0, %s26
    %s18 = sphi 0, %s15
    %s19 = sphi 0, %s16
    %s20 = sphi 0, %s17
    %s21 = sphi 0, %s18
    %s22 = sphi 0, %s19
    %s23 = sphi 0, %s20
    %s39 = sphi 0, %s41
    %s42 = sphi 0, %s39
    %s43 = sphi 0, %s42
    %s59 = sphi 0, %s43
    %s67 = sphi 0, %s69
    %s70 = sphi 0, %s67
    %s71 = sphi 0, %s70
    %s87 = sphi 0, %s71
    %s95 = sphi 0, %s97
    %s98 = sphi 0, %s95
    %s99 = sphi 0, %s98
    %s115 = sphi 0, %s99
  $region4: #{decoder_layer_forward.11} parent=0 // loop_header_branch
    %11 = sbr.rel (%p9) target = $region8
  $region5: #{decoder_layer_forward.11} parent=0 // loop_body
    %s13 = ssub.s32 %s8, 1
    %s14 = ssub.s32 %s8, 2
    %s24 = sadd.s32 1, %s17
    %p25 = scmp.ge.s32.totalorder %s24, 1
    %s26 = scalar_select %p25, 0, %s24
    %s27 = sadd.s32 1, %s16
    %s28 = scalar_select %p25, %s27, %s16
    %p29 = scmp.ge.s32.totalorder %s28, 1
    %s30 = scalar_select %p29, 0, %s28
    %s31 = sadd.s32 1, %s15
    %s32 = scalar_select %p29, %s31, %s15
    %p33 = scmp.ge.s32.totalorder %s32, 2
    %s34 = scalar_select %p33, 0, %s32
    %s35 = ssub.s32 %s15, %s34
    %s36 = ssub.s32 %s16, %s30
    %s37 = sor.u32 %s35, %s36
    %p38 = scmp.eq.s32.totalorder %s37, 0
    %s40 = sadd.s32 %s39, 1
    %s41 = scalar_select %p38, %s39, %s40
    %p44 = pneg %p38
    %p45 = scmp.eq.s32.totalorder %s8, 1
    %p46 = por %p44, %p45
    %p47 = scmp.ne.s32.totalorder %s39, %s42
    %p48 = scmp.eq.s32.totalorder %s8, 0
    %p49 = por %p47, %p48
    %p50 = scmp.ne.s32.totalorder %s39, %s42
    %p51 = scmp.eq.s32.totalorder %s13, 1
    %p52 = por %p50, %p51
    %p53 = scmp.ne.s32.totalorder %s42, %s43
    %p54 = scmp.eq.s32.totalorder %s13, 0
    %p55 = por %p53, %p54
    %p56 = scmp.ne.s32.totalorder %s42, %s43
    %p57 = scmp.eq.s32.totalorder %s14, 1
    %p58 = por %p56, %p57
    %p60 = scmp.ne.s32.totalorder %s43, %s59
    %p61 = scmp.eq.s32.totalorder %s14, 0
    %p62 = por %p60, %p61
    %s63 = ssub.s32 %s15, %s34
    %s64 = ssub.s32 %s17, %s26
    %s65 = sor.u32 %s63, %s64
    %p66 = scmp.eq.s32.totalorder %s65, 0
    %s68 = sadd.s32 %s67, 1
    %s69 = scalar_select %p66, %s67, %s68
    %p72 = pneg %p66
    %p73 = scmp.eq.s32.totalorder %s8, 1
    %p74 = por %p72, %p73
    %p75 = scmp.ne.s32.totalorder %s67, %s70
    %p76 = scmp.eq.s32.totalorder %s8, 0
    %p77 = por %p75, %p76
    %p78 = scmp.ne.s32.totalorder %s67, %s70
    %p79 = scmp.eq.s32.totalorder %s13, 1
    %p80 = por %p78, %p79
    %p81 = scmp.ne.s32.totalorder %s70, %s71
    %p82 = scmp.eq.s32.totalorder %s13, 0
    %p83 = por %p81, %p82
    %p84 = scmp.ne.s32.totalorder %s70, %s71
    %p85 = scmp.eq.s32.totalorder %s14, 1
    %p86 = por %p84, %p85
    %p88 = scmp.ne.s32.totalorder %s71, %s87
    %p89 = scmp.eq.s32.totalorder %s14, 0
    %p90 = por %p88, %p89
    %s91 = ssub.s32 %s15, %s34
    %s92 = ssub.s32 %s16, %s30
    %s93 = sor.u32 %s91, %s92
    %p94 = scmp.eq.s32.totalorder %s93, 0
    %s96 = sadd.s32 %s95, 1
    %s97 = scalar_select %p94, %s95, %s96
    %p100 = pneg %p94
    %p101 = scmp.eq.s32.totalorder %s8, 1
    %p102 = por %p100, %p101
    %p103 = scmp.ne.s32.totalorder %s95, %s98
    %p104 = scmp.eq.s32.totalorder %s8, 0
    %p105 = por %p103, %p104
    %p106 = scmp.ne.s32.totalorder %s95, %s98
    %p107 = scmp.eq.s32.totalorder %s13, 1
    %p108 = por %p106, %p107
    %p109 = scmp.ne.s32.totalorder %s98, %s99
    %p110 = scmp.eq.s32.totalorder %s13, 0
    %p111 = por %p109, %p110
    %p112 = scmp.ne.s32.totalorder %s98, %s99
    %p113 = scmp.eq.s32.totalorder %s14, 1
    %p114 = por %p112, %p113
    %p116 = scmp.ne.s32.totalorder %s99, %s115
    %p117 = scmp.eq.s32.totalorder %s14, 0
    %p118 = por %p116, %p117
    %p119 = scmp.le.s32.totalorder 1, %s8
    %p120 = scmp.lt.s32.totalorder %s8, 3
    %p121 = pnand %p119, %p120
    %p122 = pneg %p121
    // Predicated region
    $region9: #{decoder_layer_forward.11} parent=5 // pred_check
      _
    $region10: #{decoder_layer_forward.11} parent=5 // pred_check_branch
      %124 = sbr.rel (%p121) target = $region12
    $region11: #{decoder_layer_forward.11} parent=5 // pred_region
      %s125 = ssub.s32 %s8, 1
    $region12: #{decoder_layer_forward.11} parent=5 // pred_fallthru
      _
    %p126 = scmp.lt.s32.totalorder %s8, 2
    // Predicated region
    $region13: #{decoder_layer_forward.11} parent=5 // pred_check
      %p127 = pneg %p126
    $region14: #{decoder_layer_forward.11} parent=5 // pred_check_branch
      %129 = sbr.rel (%p127) target = $region16
    $region15: #{decoder_layer_forward.11} parent=5 // pred_region
      // Predicated region
      $region17: #{decoder_layer_forward.11} parent=15 // pred_check
        %p130 = pneg %p49
      $region18: #{decoder_layer_forward.11} parent=15 // pred_check_branch
        %132 = sbr.rel (%p130) target = $region20
      $region19: #{decoder_layer_forward.11} parent=15 // pred_region
        %p133 = scmp.lt.s32.totalorder %s15, 1
        %s134 = scalar_select %p133, %s15, 1
        %p135 = scmp.lt.s32.totalorder %s16, 0
        %s136 = scalar_select %p135, %s16, 0
        %s137 = sadd.s32 %s136, %s134
        %s138 = smul.addr %s137, 8
        %s139 = scalar_lea.vmem %s0, %s138
      $region20: #{decoder_layer_forward.11} parent=15 // pred_fallthru
        _
      // Predicated region
      $region21: #{decoder_layer_forward.11} parent=15 // pred_check
        %p140 = pneg %p77
      $region22: #{decoder_layer_forward.11} parent=15 // pred_check_branch
        %142 = sbr.rel (%p140) target = $region24
      $region23: #{decoder_layer_forward.11} parent=15 // pred_region
        %s143 = smul.u32 2, %s17
        %p144 = scmp.lt.s32.totalorder %s15, 1
        %s145 = scalar_select %p144, %s15, 1
        %p146 = scmp.lt.s32.totalorder %s143, 1
        %s147 = scalar_select %p146, %s143, 1
        %s148 = smul.addr %s145, 2
        %s149 = sadd.s32 %s147, %s148
        %s150 = smul.addr %s149, 8
        %s151 = scalar_lea.vmem %s1, %s150
        %s152 = smul.u32 2, %s17
      $region24: #{decoder_layer_forward.11} parent=15 // pred_fallthru
        _
    $region16: #{decoder_layer_forward.11} parent=5 // pred_fallthru
      _
    %p153 = scmp.le.s32.totalorder 1, %s8
    %p154 = scmp.lt.s32.totalorder %s8, 3
    %p155 = pnand %p153, %p154
    %p156 = pneg %p155
    // Predicated region
    $region25: #{decoder_layer_forward.11} parent=5 // pred_check
      _
    $region26: #{decoder_layer_forward.11} parent=5 // pred_check_branch
      %158 = sbr.rel (%p155) target = $region28
    $region27: #{decoder_layer_forward.11} parent=5 // pred_region
      %s159 = ssub.s32 %s8, 1
      %p160 = scmp.lt.s32.totalorder %s18, 1
      %s161 = scalar_select %p160, %s18, 1
      %p162 = scmp.lt.s32.totalorder %s19, 0
      %s163 = scalar_select %p162, %s19, 0
      %s164 = sadd.s32 %s163, %s161
      %s165 = smul.addr %s164, 8
      %s166 = scalar_lea.vmem %s0, %s165
      %p167 = pneg %p55
      %p168 = pneg %p52
      %s169 = smul.u32 2, %s20
      %p170 = scmp.lt.s32.totalorder %s18, 1
      %s171 = scalar_select %p170, %s18, 1
      %p172 = scmp.lt.s32.totalorder %s169, 1
      %s173 = scalar_select %p172, %s169, 1
      %s174 = smul.addr %s171, 2
      %s175 = sadd.s32 %s173, %s174
      %s176 = smul.addr %s175, 8
      %s177 = scalar_lea.vmem %s1, %s176
      %p178 = pneg %p83
      %p179 = pneg %p80
      %p180 = pneg %p111
      %p181 = pneg %p108
      %p182 = scmp.lt.s32.totalorder %s18, 1
      %s183 = scalar_select %p182, %s18, 1
      %p184 = scmp.lt.s32.totalorder %s19, 0
      %s185 = scalar_select %p184, %s19, 0
      %s186 = sadd.s32 %s185, %s183
      %s187 = smul.addr %s186, 8
      %s188 = scalar_lea.vmem %s2, %s187
      %p189 = scmp.lt.s32.totalorder %s18, 1
      %s190 = scalar_select %p189, %s18, 1
      %p191 = scmp.lt.s32.totalorder %s19, 0
      %s192 = scalar_select %p191, %s19, 0
      %s193 = sadd.s32 %s192, %s190
      %s194 = smul.addr %s193, 8
      %s195 = scalar_lea.vmem %s0, %s194
      %s196 = smul.u32 2, %s20
      %p197 = scmp.lt.s32.totalorder %s18, 1
      %s198 = scalar_select %p197, %s18, 1
      %p199 = scmp.lt.s32.totalorder %s196, 1
      %s200 = scalar_select %p199, %s196, 1
      %s201 = smul.addr %s198, 2
      %s202 = sadd.s32 %s200, %s201
      %s203 = smul.addr %s202, 8
      %s204 = scalar_lea.vmem %s1, %s203
      %s205 = smul.u32 2, %s20
      %p206 = scmp.lt.s32.totalorder %s18, 1
      %s207 = scalar_select %p206, %s18, 1
      %p208 = scmp.lt.s32.totalorder %s19, 0
      %s209 = scalar_select %p208, %s19, 0
      %s210 = sadd.s32 %s209, %s207
      %s211 = smul.addr %s210, 8
      %s212 = scalar_lea.vmem %s2, %s211
      %p214 = scmp.eq.s32.totalorder %s20, 0
      // Predicated region
      $region29: #{decoder_layer_forward.11} parent=27 // pred_check
        %p215 = pneg %p214
      $region30: #{decoder_layer_forward.11} parent=27 // pred_check_branch
        %217 = sbr.rel (%p215) target = $region32
      $region31: #{decoder_layer_forward.11} parent=27 // pred_region
        %vm218 = vcmask 7168
        %219 = vst.msk [vmem:[#allocation2] sm:$0xff] %vm218, -inf
        %220 = vst.msk [vmem:[#allocation2 + $0x8] sm:$0xff] %vm218, -inf
        %221 = vst.msk [vmem:[#allocation2 + $0x10] sm:$0xff] %vm218, -inf
        %222 = vst.msk [vmem:[#allocation2 + $0x18] sm:$0xff] %vm218, -inf
        %223 = vst.msk [vmem:[#allocation3] sm:$0xff] %vm218, 0.0
        %224 = vst.msk [vmem:[#allocation3 + $0x8] sm:$0xff] %vm218, 0.0
        %225 = vst.msk [vmem:[#allocation3 + $0x10] sm:$0xff] %vm218, 0.0
        %226 = vst.msk [vmem:[#allocation3 + $0x18] sm:$0xff] %vm218, 0.0
        %vm227 = vcmask 64512
        %228 = vst.msk [vmem:[#allocation4] sm:$0xff] %vm227, 0.0
        %229 = vst.msk [vmem:[#allocation4 + $0x8] sm:$0xff] %vm227, 0.0
        %230 = vst.msk [vmem:[#allocation4 + $0x10] sm:$0xff] %vm227, 0.0
        %231 = vst.msk [vmem:[#allocation4 + $0x18] sm:$0xff] %vm227, 0.0
      $region32: #{decoder_layer_forward.11} parent=27 // pred_fallthru
        _
      %v232 = vld [vmem:[%s195] sm:$0xff]
      %234 = vrot.lane.b32.xlu0 %v232, 120
      %v235 = vpop.permute.xlu0 %234
      %237 = vrot.lane.b32.xlu0 %v232, 112
      %v238 = vpop.permute.xlu0 %237
      %240 = vrot.lane.b32.xlu0 %v232, 104
      %v241 = vpop.permute.xlu0 %240
      %v243 = vcombine.low %v232, %v238
      %v244 = vcombine.high %v232, %v238
      %v246 = vunpack.c.l.s4 1983009808
      %v247 = vunpack.c.0.s8 %v246
      %v248 = vlaneseq
      %v249 = vshrl.u32 %v248, 7
      %v250 = vsub.s32 %v247, %v249
      %v251 = vrot.slane %v243, %v250
      %v253 = vunpack.c.l.s4 1983009808
      %v254 = vunpack.c.0.s8 %v253
      %v255 = vlaneseq
      %v256 = vshrl.u32 %v255, 7
      %v257 = vsub.s32 %v254, %v256
      %v258 = vrot.slane %v244, %v257
      %v259 = vcombine.low %v235, %v241
      %v260 = vcombine.high %v235, %v241
      %v262 = vunpack.c.l.s4 1983009808
      %v263 = vunpack.c.0.s8 %v262
      %v264 = vlaneseq
      %v265 = vshrl.u32 %v264, 7
      %v266 = vsub.s32 %v263, %v265
      %v267 = vrot.slane %v259, %v266
      %v269 = vunpack.c.l.s4 1983009808
      %v270 = vunpack.c.0.s8 %v269
      %v271 = vlaneseq
      %v272 = vshrl.u32 %v271, 7
      %v273 = vsub.s32 %v270, %v272
      %v274 = vrot.slane %v260, %v273
      %v275 = vcombine.low %v251, %v267
      %v276 = vcombine.high %v251, %v267
      %v278 = vunpack.c.l.s4 1934713408
      %v279 = vunpack.c.0.s8 %v278
      %v280 = vlaneseq
      %v281 = vshrl.u32 %v280, 7
      %v282 = vsub.s32 %v279, %v281
      %v283 = vrot.slane %v275, %v282
      %v285 = vunpack.c.l.s4 1934713408
      %v286 = vunpack.c.0.s8 %v285
      %v287 = vlaneseq
      %v288 = vshrl.u32 %v287, 7
      %v289 = vsub.s32 %v286, %v288
      %v290 = vrot.slane %v276, %v289
      %v291 = vcombine.low %v258, %v274
      %v292 = vcombine.high %v258, %v274
      %v294 = vunpack.c.l.s4 1934713408
      %v295 = vunpack.c.0.s8 %v294
      %v296 = vlaneseq
      %v297 = vshrl.u32 %v296, 7
      %v298 = vsub.s32 %v295, %v297
      %v299 = vrot.slane %v291, %v298
      %v301 = vunpack.c.l.s4 1934713408
      %v302 = vunpack.c.0.s8 %v301
      %v303 = vlaneseq
      %v304 = vshrl.u32 %v303, 7
      %v305 = vsub.s32 %v302, %v304
      %v306 = vrot.slane %v292, %v305
      %v307 = vcombine.high %v283, 0.0
      %v308 = vcombine.high %v290, 0.0
      %v309 = vcombine.high %v299, 0.0
      %v310 = vcombine.high %v306, 0.0
      %v311 = vcombine.low %v283, %v290
      %v313 = vunpack.c.l.s4 1983009808
      %v314 = vunpack.c.0.s8 %v313
      %v315 = vlaneseq
      %v316 = vshrl.u32 %v315, 7
      %v317 = vsub.s32 %v314, %v316
      %v318 = vrot.slane %v311, %v317
      %v319 = vcombine.low %v307, %v308
      %v321 = vunpack.c.l.s4 1983009808
      %v322 = vunpack.c.0.s8 %v321
      %v323 = vlaneseq
      %v324 = vshrl.u32 %v323, 7
      %v325 = vsub.s32 %v322, %v324
      %v326 = vrot.slane %v319, %v325
      %v327 = vcombine.low %v299, %v306
      %v329 = vunpack.c.l.s4 1983009808
      %v330 = vunpack.c.0.s8 %v329
      %v331 = vlaneseq
      %v332 = vshrl.u32 %v331, 7
      %v333 = vsub.s32 %v330, %v332
      %v334 = vrot.slane %v327, %v333
      %v335 = vcombine.low %v309, %v310
      %v337 = vunpack.c.l.s4 1983009808
      %v338 = vunpack.c.0.s8 %v337
      %v339 = vlaneseq
      %v340 = vshrl.u32 %v339, 7
      %v341 = vsub.s32 %v338, %v340
      %v342 = vrot.slane %v335, %v341
      %v343 = vcombine.low %v318, %v326
      %v344 = vcombine.high %v318, %v326
      %v346 = vunpack.c.l.s4 1934713408
      %v347 = vunpack.c.0.s8 %v346
      %v348 = vlaneseq
      %v349 = vshrl.u32 %v348, 7
      %v350 = vsub.s32 %v347, %v349
      %v351 = vrot.slane %v343, %v350
      %v353 = vunpack.c.l.s4 1934713408
      %v354 = vunpack.c.0.s8 %v353
      %v355 = vlaneseq
      %v356 = vshrl.u32 %v355, 7
      %v357 = vsub.s32 %v354, %v356
      %v358 = vrot.slane %v344, %v357
      %v359 = vcombine.low %v334, %v342
      %v360 = vcombine.high %v334, %v342
      %v362 = vunpack.c.l.s4 1934713408
      %v363 = vunpack.c.0.s8 %v362
      %v364 = vlaneseq
      %v365 = vshrl.u32 %v364, 7
      %v366 = vsub.s32 %v363, %v365
      %v367 = vrot.slane %v359, %v366
      %v369 = vunpack.c.l.s4 1934713408
      %v370 = vunpack.c.0.s8 %v369
      %v371 = vlaneseq
      %v372 = vshrl.u32 %v371, 7
      %v373 = vsub.s32 %v370, %v372
      %v374 = vrot.slane %v360, %v373
      %v375 = vcombine.low %v351, %v367
      %v376 = vcombine.high %v351, %v367
      %v377 = vcombine.low %v358, %v374
      %v378 = vcombine.high %v358, %v374
      %v379 = vpack.c.bf16 %v375, %v375
      %v380 = vpack.c.bf16 %v376, %v376
      %v381 = vpack.c.bf16 %v377, %v377
      %v382 = vpack.c.bf16 %v378, %v378
      %v383 = vld [vmem:[%s204] sm:$0xff]
      %v384 = vld [vmem:[%s204 + $0x8] sm:$0xf]
      %387 = vrot.lane.b32.xlu0 %v383, 120
      %v388 = vpop.permute.xlu0 %387
      %389 = vrot.lane.b32.xlu0 %v384, 120
      %v390 = vpop.permute.xlu0 %389
      %393 = vrot.lane.b32.xlu0 %v383, 112
      %v394 = vpop.permute.xlu0 %393
      %395 = vrot.lane.b32.xlu0 %v384, 112
      %v396 = vpop.permute.xlu0 %395
      %399 = vrot.lane.b32.xlu0 %v383, 104
      %v400 = vpop.permute.xlu0 %399
      %401 = vrot.lane.b32.xlu0 %v384, 104
      %v402 = vpop.permute.xlu0 %401
      %v405 = vcombine.low %v383, %v394
      %v406 = vcombine.high %v383, %v394
      %v408 = vunpack.c.l.s4 1983009808
      %v409 = vunpack.c.0.s8 %v408
      %v410 = vlaneseq
      %v411 = vshrl.u32 %v410, 7
      %v412 = vsub.s32 %v409, %v411
      %v413 = vrot.slane %v405, %v412
      %v415 = vunpack.c.l.s4 1983009808
      %v416 = vunpack.c.0.s8 %v415
      %v417 = vlaneseq
      %v418 = vshrl.u32 %v417, 7
      %v419 = vsub.s32 %v416, %v418
      %v420 = vrot.slane %v406, %v419
      %v421 = vcombine.low %v388, %v400
      %v422 = vcombine.high %v388, %v400
      %v424 = vunpack.c.l.s4 1983009808
      %v425 = vunpack.c.0.s8 %v424
      %v426 = vlaneseq
      %v427 = vshrl.u32 %v426, 7
      %v428 = vsub.s32 %v425, %v427
      %v429 = vrot.slane %v421, %v428
      %v431 = vunpack.c.l.s4 1983009808
      %v432 = vunpack.c.0.s8 %v431
      %v433 = vlaneseq
      %v434 = vshrl.u32 %v433, 7
      %v435 = vsub.s32 %v432, %v434
      %v436 = vrot.slane %v422, %v435
      %v437 = vcombine.low %v413, %v429
      %v438 = vcombine.high %v413, %v429
      %v440 = vunpack.c.l.s4 1934713408
      %v441 = vunpack.c.0.s8 %v440
      %v442 = vlaneseq
      %v443 = vshrl.u32 %v442, 7
      %v444 = vsub.s32 %v441, %v443
      %v445 = vrot.slane %v437, %v444
      %v447 = vunpack.c.l.s4 1934713408
      %v448 = vunpack.c.0.s8 %v447
      %v449 = vlaneseq
      %v450 = vshrl.u32 %v449, 7
      %v451 = vsub.s32 %v448, %v450
      %v452 = vrot.slane %v438, %v451
      %v453 = vcombine.low %v420, %v436
      %v454 = vcombine.high %v420, %v436
      %v456 = vunpack.c.l.s4 1934713408
      %v457 = vunpack.c.0.s8 %v456
      %v458 = vlaneseq
      %v459 = vshrl.u32 %v458, 7
      %v460 = vsub.s32 %v457, %v459
      %v461 = vrot.slane %v453, %v460
      %v463 = vunpack.c.l.s4 1934713408
      %v464 = vunpack.c.0.s8 %v463
      %v465 = vlaneseq
      %v466 = vshrl.u32 %v465, 7
      %v467 = vsub.s32 %v464, %v466
      %v468 = vrot.slane %v454, %v467
      %v469 = vcombine.high %v445, 0.0
      %v470 = vcombine.high %v452, 0.0
      %v471 = vcombine.high %v461, 0.0
      %v472 = vcombine.high %v468, 0.0
      %v473 = vcombine.low %v384, %v396
      %v475 = vunpack.c.l.s4 1983009808
      %v476 = vunpack.c.0.s8 %v475
      %v477 = vlaneseq
      %v478 = vshrl.u32 %v477, 7
      %v479 = vsub.s32 %v476, %v478
      %v480 = vrot.slane %v473, %v479
      %v481 = vcombine.low %v390, %v402
      %v483 = vunpack.c.l.s4 1983009808
      %v484 = vunpack.c.0.s8 %v483
      %v485 = vlaneseq
      %v486 = vshrl.u32 %v485, 7
      %v487 = vsub.s32 %v484, %v486
      %v488 = vrot.slane %v481, %v487
      %v489 = vcombine.low %v480, %v488
      %v490 = vcombine.high %v480, %v488
      %v492 = vunpack.c.l.s4 1934713408
      %v493 = vunpack.c.0.s8 %v492
      %v494 = vlaneseq
      %v495 = vshrl.u32 %v494, 7
      %v496 = vsub.s32 %v493, %v495
      %v497 = vrot.slane %v489, %v496
      %v499 = vunpack.c.l.s4 1934713408
      %v500 = vunpack.c.0.s8 %v499
      %v501 = vlaneseq
      %v502 = vshrl.u32 %v501, 7
      %v503 = vsub.s32 %v500, %v502
      %v504 = vrot.slane %v490, %v503
      %v505 = vcombine.high %v497, 0.0
      %v506 = vcombine.high %v504, 0.0
      %v507 = vcombine.low %v445, %v452
      %v509 = vunpack.c.l.s4 1983009808
      %v510 = vunpack.c.0.s8 %v509
      %v511 = vlaneseq
      %v512 = vshrl.u32 %v511, 7
      %v513 = vsub.s32 %v510, %v512
      %v514 = vrot.slane %v507, %v513
      %v515 = vcombine.low %v469, %v470
      %v517 = vunpack.c.l.s4 1983009808
      %v518 = vunpack.c.0.s8 %v517
      %v519 = vlaneseq
      %v520 = vshrl.u32 %v519, 7
      %v521 = vsub.s32 %v518, %v520
      %v522 = vrot.slane %v515, %v521
      %v523 = vcombine.low %v461, %v468
      %v525 = vunpack.c.l.s4 1983009808
      %v526 = vunpack.c.0.s8 %v525
      %v527 = vlaneseq
      %v528 = vshrl.u32 %v527, 7
      %v529 = vsub.s32 %v526, %v528
      %v530 = vrot.slane %v523, %v529
      %v531 = vcombine.low %v471, %v472
      %v533 = vunpack.c.l.s4 1983009808
      %v534 = vunpack.c.0.s8 %v533
      %v535 = vlaneseq
      %v536 = vshrl.u32 %v535, 7
      %v537 = vsub.s32 %v534, %v536
      %v538 = vrot.slane %v531, %v537
      %v539 = vcombine.low %v514, %v522
      %v540 = vcombine.high %v514, %v522
      %v542 = vunpack.c.l.s4 1934713408
      %v543 = vunpack.c.0.s8 %v542
      %v544 = vlaneseq
      %v545 = vshrl.u32 %v544, 7
      %v546 = vsub.s32 %v543, %v545
      %v547 = vrot.slane %v539, %v546
      %v549 = vunpack.c.l.s4 1934713408
      %v550 = vunpack.c.0.s8 %v549
      %v551 = vlaneseq
      %v552 = vshrl.u32 %v551, 7
      %v553 = vsub.s32 %v550, %v552
      %v554 = vrot.slane %v540, %v553
      %v555 = vcombine.low %v530, %v538
      %v556 = vcombine.high %v530, %v538
      %v558 = vunpack.c.l.s4 1934713408
      %v559 = vunpack.c.0.s8 %v558
      %v560 = vlaneseq
      %v561 = vshrl.u32 %v560, 7
      %v562 = vsub.s32 %v559, %v561
      %v563 = vrot.slane %v555, %v562
      %v565 = vunpack.c.l.s4 1934713408
      %v566 = vunpack.c.0.s8 %v565
      %v567 = vlaneseq
      %v568 = vshrl.u32 %v567, 7
      %v569 = vsub.s32 %v566, %v568
      %v570 = vrot.slane %v556, %v569
      %v571 = vcombine.low %v547, %v563
      %v572 = vcombine.high %v547, %v563
      %v573 = vcombine.low %v554, %v570
      %v574 = vcombine.high %v554, %v570
      %v575 = vcombine.low %v497, %v504
      %v577 = vunpack.c.l.s4 1983009808
      %v578 = vunpack.c.0.s8 %v577
      %v579 = vlaneseq
      %v580 = vshrl.u32 %v579, 7
      %v581 = vsub.s32 %v578, %v580
      %v582 = vrot.slane %v575, %v581
      %v583 = vcombine.low %v505, %v506
      %v585 = vunpack.c.l.s4 1983009808
      %v586 = vunpack.c.0.s8 %v585
      %v587 = vlaneseq
      %v588 = vshrl.u32 %v587, 7
      %v589 = vsub.s32 %v586, %v588
      %v590 = vrot.slane %v583, %v589
      %v591 = vcombine.low %v582, %v590
      %v592 = vcombine.high %v582, %v590
      %v594 = vunpack.c.l.s4 1934713408
      %v595 = vunpack.c.0.s8 %v594
      %v596 = vlaneseq
      %v597 = vshrl.u32 %v596, 7
      %v598 = vsub.s32 %v595, %v597
      %v599 = vrot.slane %v591, %v598
      %v601 = vunpack.c.l.s4 1934713408
      %v602 = vunpack.c.0.s8 %v601
      %v603 = vlaneseq
      %v604 = vshrl.u32 %v603, 7
      %v605 = vsub.s32 %v602, %v604
      %v606 = vrot.slane %v592, %v605
      %v607 = vcombine.high %v599, 0.0
      %v608 = vcombine.high %v606, 0.0
      %v609 = vpack.c.bf16 %v599, %v571
      %v610 = vpack.c.bf16 %v607, %v572
      %v611 = vpack.c.bf16 %v606, %v573
      %v612 = vpack.c.bf16 %v608, %v574
      %613 = vrot.lane.b32.xlu0 %v383, 96
      %v614 = vpop.permute.xlu0 %613
      %615 = vrot.lane.b32.xlu0 %v384, 96
      %v616 = vpop.permute.xlu0 %615
      %617 = vrot.lane.b32.xlu0 %v388, 96
      %v618 = vpop.permute.xlu0 %617
      %619 = vrot.lane.b32.xlu0 %v390, 96
      %v620 = vpop.permute.xlu0 %619
      %621 = vrot.lane.b32.xlu0 %v394, 96
      %v622 = vpop.permute.xlu0 %621
      %623 = vrot.lane.b32.xlu0 %v396, 96
      %v624 = vpop.permute.xlu0 %623
      %625 = vrot.lane.b32.xlu0 %v400, 96
      %v626 = vpop.permute.xlu0 %625
      %627 = vrot.lane.b32.xlu0 %v402, 96
      %v628 = vpop.permute.xlu0 %627
      %v637 = vcombine.low %v614, %v622
      %v638 = vcombine.high %v614, %v622
      %v640 = vunpack.c.l.s4 1983009808
      %v641 = vunpack.c.0.s8 %v640
      %v642 = vlaneseq
      %v643 = vshrl.u32 %v642, 7
      %v644 = vsub.s32 %v641, %v643
      %v645 = vrot.slane %v637, %v644
      %v647 = vunpack.c.l.s4 1983009808
      %v648 = vunpack.c.0.s8 %v647
      %v649 = vlaneseq
      %v650 = vshrl.u32 %v649, 7
      %v651 = vsub.s32 %v648, %v650
      %v652 = vrot.slane %v638, %v651
      %v653 = vcombine.low %v618, %v626
      %v654 = vcombine.high %v618, %v626
      %v656 = vunpack.c.l.s4 1983009808
      %v657 = vunpack.c.0.s8 %v656
      %v658 = vlaneseq
      %v659 = vshrl.u32 %v658, 7
      %v660 = vsub.s32 %v657, %v659
      %v661 = vrot.slane %v653, %v660
      %v663 = vunpack.c.l.s4 1983009808
      %v664 = vunpack.c.0.s8 %v663
      %v665 = vlaneseq
      %v666 = vshrl.u32 %v665, 7
      %v667 = vsub.s32 %v664, %v666
      %v668 = vrot.slane %v654, %v667
      %v669 = vcombine.low %v645, %v661
      %v670 = vcombine.high %v645, %v661
      %v672 = vunpack.c.l.s4 1934713408
      %v673 = vunpack.c.0.s8 %v672
      %v674 = vlaneseq
      %v675 = vshrl.u32 %v674, 7
      %v676 = vsub.s32 %v673, %v675
      %v677 = vrot.slane %v669, %v676
      %v679 = vunpack.c.l.s4 1934713408
      %v680 = vunpack.c.0.s8 %v679
      %v681 = vlaneseq
      %v682 = vshrl.u32 %v681, 7
      %v683 = vsub.s32 %v680, %v682
      %v684 = vrot.slane %v670, %v683
      %v685 = vcombine.low %v652, %v668
      %v686 = vcombine.high %v652, %v668
      %v688 = vunpack.c.l.s4 1934713408
      %v689 = vunpack.c.0.s8 %v688
      %v690 = vlaneseq
      %v691 = vshrl.u32 %v690, 7
      %v692 = vsub.s32 %v689, %v691
      %v693 = vrot.slane %v685, %v692
      %v695 = vunpack.c.l.s4 1934713408
      %v696 = vunpack.c.0.s8 %v695
      %v697 = vlaneseq
      %v698 = vshrl.u32 %v697, 7
      %v699 = vsub.s32 %v696, %v698
      %v700 = vrot.slane %v686, %v699
      %v701 = vcombine.high %v677, 0.0
      %v702 = vcombine.high %v684, 0.0
      %v703 = vcombine.high %v693, 0.0
      %v704 = vcombine.high %v700, 0.0
      %v705 = vcombine.low %v616, %v624
      %v707 = vunpack.c.l.s4 1983009808
      %v708 = vunpack.c.0.s8 %v707
      %v709 = vlaneseq
      %v710 = vshrl.u32 %v709, 7
      %v711 = vsub.s32 %v708, %v710
      %v712 = vrot.slane %v705, %v711
      %v713 = vcombine.low %v620, %v628
      %v715 = vunpack.c.l.s4 1983009808
      %v716 = vunpack.c.0.s8 %v715
      %v717 = vlaneseq
      %v718 = vshrl.u32 %v717, 7
      %v719 = vsub.s32 %v716, %v718
      %v720 = vrot.slane %v713, %v719
      %v721 = vcombine.low %v712, %v720
      %v722 = vcombine.high %v712, %v720
      %v724 = vunpack.c.l.s4 1934713408
      %v725 = vunpack.c.0.s8 %v724
      %v726 = vlaneseq
      %v727 = vshrl.u32 %v726, 7
      %v728 = vsub.s32 %v725, %v727
      %v729 = vrot.slane %v721, %v728
      %v731 = vunpack.c.l.s4 1934713408
      %v732 = vunpack.c.0.s8 %v731
      %v733 = vlaneseq
      %v734 = vshrl.u32 %v733, 7
      %v735 = vsub.s32 %v732, %v734
      %v736 = vrot.slane %v722, %v735
      %v737 = vcombine.high %v729, 0.0
      %v738 = vcombine.high %v736, 0.0
      %v739 = vcombine.low %v677, %v684
      %v741 = vunpack.c.l.s4 1983009808
      %v742 = vunpack.c.0.s8 %v741
      %v743 = vlaneseq
      %v744 = vshrl.u32 %v743, 7
      %v745 = vsub.s32 %v742, %v744
      %v746 = vrot.slane %v739, %v745
      %v747 = vcombine.low %v701, %v702
      %v749 = vunpack.c.l.s4 1983009808
      %v750 = vunpack.c.0.s8 %v749
      %v751 = vlaneseq
      %v752 = vshrl.u32 %v751, 7
      %v753 = vsub.s32 %v750, %v752
      %v754 = vrot.slane %v747, %v753
      %v755 = vcombine.low %v693, %v700
      %v757 = vunpack.c.l.s4 1983009808
      %v758 = vunpack.c.0.s8 %v757
      %v759 = vlaneseq
      %v760 = vshrl.u32 %v759, 7
      %v761 = vsub.s32 %v758, %v760
      %v762 = vrot.slane %v755, %v761
      %v763 = vcombine.low %v703, %v704
      %v765 = vunpack.c.l.s4 1983009808
      %v766 = vunpack.c.0.s8 %v765
      %v767 = vlaneseq
      %v768 = vshrl.u32 %v767, 7
      %v769 = vsub.s32 %v766, %v768
      %v770 = vrot.slane %v763, %v769
      %v771 = vcombine.low %v746, %v754
      %v772 = vcombine.high %v746, %v754
      %v774 = vunpack.c.l.s4 1934713408
      %v775 = vunpack.c.0.s8 %v774
      %v776 = vlaneseq
      %v777 = vshrl.u32 %v776, 7
      %v778 = vsub.s32 %v775, %v777
      %v779 = vrot.slane %v771, %v778
      %v781 = vunpack.c.l.s4 1934713408
      %v782 = vunpack.c.0.s8 %v781
      %v783 = vlaneseq
      %v784 = vshrl.u32 %v783, 7
      %v785 = vsub.s32 %v782, %v784
      %v786 = vrot.slane %v772, %v785
      %v787 = vcombine.low %v762, %v770
      %v788 = vcombine.high %v762, %v770
      %v790 = vunpack.c.l.s4 1934713408
      %v791 = vunpack.c.0.s8 %v790
      %v792 = vlaneseq
      %v793 = vshrl.u32 %v792, 7
      %v794 = vsub.s32 %v791, %v793
      %v795 = vrot.slane %v787, %v794
      %v797 = vunpack.c.l.s4 1934713408
      %v798 = vunpack.c.0.s8 %v797
      %v799 = vlaneseq
      %v800 = vshrl.u32 %v799, 7
      %v801 = vsub.s32 %v798, %v800
      %v802 = vrot.slane %v788, %v801
      %v803 = vcombine.low %v779, %v795
      %v804 = vcombine.high %v779, %v795
      %v805 = vcombine.low %v786, %v802
      %v806 = vcombine.high %v786, %v802
      %v807 = vcombine.low %v729, %v736
      %v809 = vunpack.c.l.s4 1983009808
      %v810 = vunpack.c.0.s8 %v809
      %v811 = vlaneseq
      %v812 = vshrl.u32 %v811, 7
      %v813 = vsub.s32 %v810, %v812
      %v814 = vrot.slane %v807, %v813
      %v815 = vcombine.low %v737, %v738
      %v817 = vunpack.c.l.s4 1983009808
      %v818 = vunpack.c.0.s8 %v817
      %v819 = vlaneseq
      %v820 = vshrl.u32 %v819, 7
      %v821 = vsub.s32 %v818, %v820
      %v822 = vrot.slane %v815, %v821
      %v823 = vcombine.low %v814, %v822
      %v824 = vcombine.high %v814, %v822
      %v826 = vunpack.c.l.s4 1934713408
      %v827 = vunpack.c.0.s8 %v826
      %v828 = vlaneseq
      %v829 = vshrl.u32 %v828, 7
      %v830 = vsub.s32 %v827, %v829
      %v831 = vrot.slane %v823, %v830
      %v833 = vunpack.c.l.s4 1934713408
      %v834 = vunpack.c.0.s8 %v833
      %v835 = vlaneseq
      %v836 = vshrl.u32 %v835, 7
      %v837 = vsub.s32 %v834, %v836
      %v838 = vrot.slane %v824, %v837
      %v839 = vcombine.high %v831, 0.0
      %v840 = vcombine.high %v838, 0.0
      %v841 = vpack.c.bf16 %v831, %v803
      %v842 = vpack.c.bf16 %v839, %v804
      %v843 = vpack.c.bf16 %v838, %v805
      %v844 = vpack.c.bf16 %v840, %v806
      %vm845 = vcmask 64512
      %v847 = vsel %vm845, %v379, 0
      %v850 = vsel %vm845, %v609, 0
      %852 = vmatprep.subr.bf16.mxu0 0
      %853 = vmatpush1.bf16.xpose.msra.mxu0 0
      %854 = vmatprep.subr.bf16.mxu0 0
      %855 = vmatpush1.bf16.xpose.msra.mxu0 0
      %856 = vmatprep.subr.bf16.mxu0 0
      %857 = vmatpush1.bf16.xpose.msra.mxu0 0
      %858 = vmatprep.subr.bf16.mxu0 0
      %859 = vmatpush1.bf16.xpose.msra.mxu0 0
      %860 = vmatprep.subr.bf16.mxu0 0
      %861 = vmatpush1.bf16.xpose.msra.mxu0 0
      %862 = vmatprep.subr.bf16.mxu0 0
      %863 = vmatpush1.bf16.xpose.msra.mxu0 0
      %864 = vmatprep.subr.bf16.mxu0 0
      %865 = vmatpush1.bf16.xpose.msra.mxu0 0
      %866 = vmatprep.subr.bf16.mxu0 0
      %867 = vmatpush1.bf16.xpose.msra.mxu0 %v850
      %868 = vmatprep.subr.bf16.mxu0 0
      %869 = vmatpush2.bf16.xpose.msra.mxu0 0
      %870 = vmatprep.subr.bf16.mxu0 0
      %871 = vmatpush2.bf16.xpose.msra.mxu0 0
      %872 = vmatprep.subr.bf16.mxu0 0
      %873 = vmatpush2.bf16.xpose.msra.mxu0 0
      %874 = vmatprep.subr.bf16.mxu0 0
      %875 = vmatpush2.bf16.xpose.msra.mxu0 0
      %876 = vmatprep.subr.bf16.mxu0 0
      %877 = vmatpush2.bf16.xpose.msra.mxu0 0
      %878 = vmatprep.subr.bf16.mxu0 0
      %879 = vmatpush2.bf16.xpose.msra.mxu0 0
      %880 = vmatprep.subr.bf16.mxu0 0
      %881 = vmatpush2.bf16.xpose.msra.mxu0 0
      %882 = vmatprep.subr.bf16.mxu0 0
      %883 = vmatpush2.bf16.xpose.msra.mxu0 0
      %884 = vmatprep.mubr.bf16.mxu0 0
      %885 = vmatmul.mubr.bf16.gmra.mxu0 %v847
      %v886 = vpop.f32.mrf.mxu0
      %v887 = vadd.f32 0.0, %v886
      %v888 = vpop.f32.mrf.mxu0
      %v889 = vpop.f32.mrf.mxu0
      %v890 = vpop.f32.mrf.mxu0
      %891 = vdwg.mxu0
      %v893 = vsel %vm845, %v380, 0
      %v896 = vsel %vm845, %v610, 0
      %898 = vmatprep.subr.bf16.mxu0 0
      %899 = vmatpush1.bf16.xpose.msra.mxu0 0
      %900 = vmatprep.subr.bf16.mxu0 0
      %901 = vmatpush1.bf16.xpose.msra.mxu0 0
      %902 = vmatprep.subr.bf16.mxu0 0
      %903 = vmatpush1.bf16.xpose.msra.mxu0 0
      %904 = vmatprep.subr.bf16.mxu0 0
      %905 = vmatpush1.bf16.xpose.msra.mxu0 0
      %906 = vmatprep.subr.bf16.mxu0 0
      %907 = vmatpush1.bf16.xpose.msra.mxu0 0
      %908 = vmatprep.subr.bf16.mxu0 0
      %909 = vmatpush1.bf16.xpose.msra.mxu0 0
      %910 = vmatprep.subr.bf16.mxu0 0
      %911 = vmatpush1.bf16.xpose.msra.mxu0 0
      %912 = vmatprep.subr.bf16.mxu0 0
      %913 = vmatpush1.bf16.xpose.msra.mxu0 %v896
      %914 = vmatprep.subr.bf16.mxu0 0
      %915 = vmatpush2.bf16.xpose.msra.mxu0 0
      %916 = vmatprep.subr.bf16.mxu0 0
      %917 = vmatpush2.bf16.xpose.msra.mxu0 0
      %918 = vmatprep.subr.bf16.mxu0 0
      %919 = vmatpush2.bf16.xpose.msra.mxu0 0
      %920 = vmatprep.subr.bf16.mxu0 0
      %921 = vmatpush2.bf16.xpose.msra.mxu0 0
      %922 = vmatprep.subr.bf16.mxu0 0
      %923 = vmatpush2.bf16.xpose.msra.mxu0 0
      %924 = vmatprep.subr.bf16.mxu0 0
      %925 = vmatpush2.bf16.xpose.msra.mxu0 0
      %926 = vmatprep.subr.bf16.mxu0 0
      %927 = vmatpush2.bf16.xpose.msra.mxu0 0
      %928 = vmatprep.subr.bf16.mxu0 0
      %929 = vmatpush2.bf16.xpose.msra.mxu0 0
      %930 = vmatprep.mubr.bf16.mxu0 0
      %931 = vmatmul.mubr.bf16.gmra.mxu0 %v893
      %v932 = vpop.f32.mrf.mxu0
      %v933 = vadd.f32 0.0, %v932
      %v934 = vpop.f32.mrf.mxu0
      %v935 = vpop.f32.mrf.mxu0
      %v936 = vpop.f32.mrf.mxu0
      %937 = vdwg.mxu0
      %v939 = vsel %vm845, %v381, 0
      %v942 = vsel %vm845, %v611, 0
      %944 = vmatprep.subr.bf16.mxu0 0
      %945 = vmatpush1.bf16.xpose.msra.mxu0 0
      %946 = vmatprep.subr.bf16.mxu0 0
      %947 = vmatpush1.bf16.xpose.msra.mxu0 0
      %948 = vmatprep.subr.bf16.mxu0 0
      %949 = vmatpush1.bf16.xpose.msra.mxu0 0
      %950 = vmatprep.subr.bf16.mxu0 0
      %951 = vmatpush1.bf16.xpose.msra.mxu0 0
      %952 = vmatprep.subr.bf16.mxu0 0
      %953 = vmatpush1.bf16.xpose.msra.mxu0 0
      %954 = vmatprep.subr.bf16.mxu0 0
      %955 = vmatpush1.bf16.xpose.msra.mxu0 0
      %956 = vmatprep.subr.bf16.mxu0 0
      %957 = vmatpush1.bf16.xpose.msra.mxu0 0
      %958 = vmatprep.subr.bf16.mxu0 0
      %959 = vmatpush1.bf16.xpose.msra.mxu0 %v942
      %960 = vmatprep.subr.bf16.mxu0 0
      %961 = vmatpush2.bf16.xpose.msra.mxu0 0
      %962 = vmatprep.subr.bf16.mxu0 0
      %963 = vmatpush2.bf16.xpose.msra.mxu0 0
      %964 = vmatprep.subr.bf16.mxu0 0
      %965 = vmatpush2.bf16.xpose.msra.mxu0 0
      %966 = vmatprep.subr.bf16.mxu0 0
      %967 = vmatpush2.bf16.xpose.msra.mxu0 0
      %968 = vmatprep.subr.bf16.mxu0 0
      %969 = vmatpush2.bf16.xpose.msra.mxu0 0
      %970 = vmatprep.subr.bf16.mxu0 0
      %971 = vmatpush2.bf16.xpose.msra.mxu0 0
      %972 = vmatprep.subr.bf16.mxu0 0
      %973 = vmatpush2.bf16.xpose.msra.mxu0 0
      %974 = vmatprep.subr.bf16.mxu0 0
      %975 = vmatpush2.bf16.xpose.msra.mxu0 0
      %976 = vmatprep.mubr.bf16.mxu0 0
      %977 = vmatmul.mubr.bf16.gmra.mxu0 %v939
      %v978 = vpop.f32.mrf.mxu0
      %v979 = vadd.f32 0.0, %v978
      %v980 = vpop.f32.mrf.mxu0
      %v981 = vpop.f32.mrf.mxu0
      %v982 = vpop.f32.mrf.mxu0
      %983 = vdwg.mxu0
      %v985 = vsel %vm845, %v382, 0
      %v988 = vsel %vm845, %v612, 0
      %990 = vmatprep.subr.bf16.mxu0 0
      %991 = vmatpush1.bf16.xpose.msra.mxu0 0
      %992 = vmatprep.subr.bf16.mxu0 0
      %993 = vmatpush1.bf16.xpose.msra.mxu0 0
      %994 = vmatprep.subr.bf16.mxu0 0
      %995 = vmatpush1.bf16.xpose.msra.mxu0 0
      %996 = vmatprep.subr.bf16.mxu0 0
      %997 = vmatpush1.bf16.xpose.msra.mxu0 0
      %998 = vmatprep.subr.bf16.mxu0 0
      %999 = vmatpush1.bf16.xpose.msra.mxu0 0
      %1000 = vmatprep.subr.bf16.mxu0 0
      %1001 = vmatpush1.bf16.xpose.msra.mxu0 0
      %1002 = vmatprep.subr.bf16.mxu0 0
      %1003 = vmatpush1.bf16.xpose.msra.mxu0 0
      %1004 = vmatprep.subr.bf16.mxu0 0
      %1005 = vmatpush1.bf16.xpose.msra.mxu0 %v988
      %1006 = vmatprep.subr.bf16.mxu0 0
      %1007 = vmatpush2.bf16.xpose.msra.mxu0 0
      %1008 = vmatprep.subr.bf16.mxu0 0
      %1009 = vmatpush2.bf16.xpose.msra.mxu0 0
      %1010 = vmatprep.subr.bf16.mxu0 0
      %1011 = vmatpush2.bf16.xpose.msra.mxu0 0
      %1012 = vmatprep.subr.bf16.mxu0 0
      %1013 = vmatpush2.bf16.xpose.msra.mxu0 0
      %1014 = vmatprep.subr.bf16.mxu0 0
      %1015 = vmatpush2.bf16.xpose.msra.mxu0 0
      %1016 = vmatprep.subr.bf16.mxu0 0
      %1017 = vmatpush2.bf16.xpose.msra.mxu0 0
      %1018 = vmatprep.subr.bf16.mxu0 0
      %1019 = vmatpush2.bf16.xpose.msra.mxu0 0
      %1020 = vmatprep.subr.bf16.mxu0 0
      %1021 = vmatpush2.bf16.xpose.msra.mxu0 0
      %1022 = vmatprep.mubr.bf16.mxu0 0
      %1023 = vmatmul.mubr.bf16.gmra.mxu0 %v985
      %v1024 = vpop.f32.mrf.mxu0
      %v1025 = vadd.f32 0.0, %v1024
      %v1026 = vpop.f32.mrf.mxu0
      %v1027 = vpop.f32.mrf.mxu0
      %v1028 = vpop.f32.mrf.mxu0
      %1029 = vdwg.mxu0
      %v1030 = vld [vmem:[#allocation2] sm:$0xff]
      %v1031 = vld [vmem:[#allocation2 + $0x8] sm:$0xff]
      %v1032 = vld [vmem:[#allocation2 + $0x10] sm:$0xff]
      %v1033 = vld [vmem:[#allocation2 + $0x18] sm:$0xff]
      %vm1034 = vcmask 97280
      %v1035 = vsel %vm1034, %v887, -inf
      %1036 = vmax.xlane.f32.xlu0 %v1035
      %v1037 = vpop.xlane.xlu0 %1036
      %v1038 = vsel %vm1034, %v933, -inf
      %1039 = vmax.xlane.f32.xlu0 %v1038
      %v1040 = vpop.xlane.xlu0 %1039
      %v1041 = vsel %vm1034, %v979, -inf
      %1042 = vmax.xlane.f32.xlu0 %v1041
      %v1043 = vpop.xlane.xlu0 %1042
      %v1044 = vsel %vm1034, %v1025, -inf
      %1045 = vmax.xlane.f32.xlu0 %v1044
      %v1046 = vpop.xlane.xlu0 %1045
      %v1047 = vmax.f32 %v1030, %v1037
      %v1048 = vmax.f32 %v1031, %v1040
      %v1049 = vmax.f32 %v1032, %v1043
      %v1050 = vmax.f32 %v1033, %v1046
      %v1051 = vsub.f32 %v1030, %v1047
      %v1052 = vsub.f32 %v1031, %v1048
      %v1053 = vsub.f32 %v1032, %v1049
      %v1054 = vsub.f32 %v1033, %v1050
      %v1055 = vmul.f32 %v1051, 1.442695
      %v1056 = vpow.pop %v1055
      %v1057 = vmul.f32 %v1052, 1.442695
      %v1058 = vpow.pop %v1057
      %v1059 = vmul.f32 %v1053, 1.442695
      %v1060 = vpow.pop %v1059
      %v1061 = vmul.f32 %v1054, 1.442695
      %v1062 = vpow.pop %v1061
      %1064 = vset.pattern.permute.xlu0 0
      %1065 = vperm.xlu0 %1064, %v1047
      %v1066 = vpop.permute.xlu0 %1065
      %1069 = vset.pattern.permute.xlu0 0
      %1070 = vperm.xlu0 %1069, %v1048
      %v1071 = vpop.permute.xlu0 %1070
      %1074 = vset.pattern.permute.xlu0 0
      %1075 = vperm.xlu0 %1074, %v1049
      %v1076 = vpop.permute.xlu0 %1075
      %1079 = vset.pattern.permute.xlu0 0
      %1080 = vperm.xlu0 %1079, %v1050
      %v1081 = vpop.permute.xlu0 %1080
      %v1083 = vsub.f32 %v887, %v1066
      %v1084 = vsub.f32 %v933, %v1071
      %v1085 = vsub.f32 %v979, %v1076
      %v1086 = vsub.f32 %v1025, %v1081
      %v1087 = vmul.f32 %v1083, 1.442695
      %v1088 = vpow.pop %v1087
      %v1089 = vmul.f32 %v1084, 1.442695
      %v1090 = vpow.pop %v1089
      %v1091 = vmul.f32 %v1085, 1.442695
      %v1092 = vpow.pop %v1091
      %v1093 = vmul.f32 %v1086, 1.442695
      %v1094 = vpow.pop %v1093
      %v1095 = vld [vmem:[#allocation3] sm:$0xff]
      %v1096 = vld [vmem:[#allocation3 + $0x8] sm:$0xff]
      %v1097 = vld [vmem:[#allocation3 + $0x10] sm:$0xff]
      %v1098 = vld [vmem:[#allocation3 + $0x18] sm:$0xff]
      %v1099 = vmul.f32 %v1056, %v1095
      %v1100 = vmul.f32 %v1058, %v1096
      %v1101 = vmul.f32 %v1060, %v1097
      %v1102 = vmul.f32 %v1062, %v1098
      %v1103 = vsel %vm1034, %v1088, 0.0
      %1104 = vadd.xlane.f32.xlu0 %v1103
      %v1105 = vpop.xlane.xlu0 %1104
      %v1106 = vsel %vm1034, %v1090, 0.0
      %1107 = vadd.xlane.f32.xlu0 %v1106
      %v1108 = vpop.xlane.xlu0 %1107
      %v1109 = vsel %vm1034, %v1092, 0.0
      %1110 = vadd.xlane.f32.xlu0 %v1109
      %v1111 = vpop.xlane.xlu0 %1110
      %v1112 = vsel %vm1034, %v1094, 0.0
      %1113 = vadd.xlane.f32.xlu0 %v1112
      %v1114 = vpop.xlane.xlu0 %1113
      %v1115 = vadd.f32 %v1099, %v1105
      %v1116 = vadd.f32 %v1100, %v1108
      %v1117 = vadd.f32 %v1101, %v1111
      %v1118 = vadd.f32 %v1102, %v1114
      %vm1119 = vcmask 7168
      %1120 = vst.msk [vmem:[#allocation3] sm:$0xff] %vm1119, %v1115
      %1121 = vst.msk [vmem:[#allocation3 + $0x8] sm:$0xff] %vm1119, %v1116
      %1122 = vst.msk [vmem:[#allocation3 + $0x10] sm:$0xff] %vm1119, %v1117
      %1123 = vst.msk [vmem:[#allocation3 + $0x18] sm:$0xff] %vm1119, %v1118
      %v1124 = vld [vmem:[#allocation4] sm:$0xff]
      %v1125 = vld [vmem:[#allocation4 + $0x8] sm:$0xff]
      %v1126 = vld [vmem:[#allocation4 + $0x10] sm:$0xff]
      %v1127 = vld [vmem:[#allocation4 + $0x18] sm:$0xff]
      %1129 = vset.pattern.permute.xlu0 0
      %1130 = vperm.xlu0 %1129, %v1056
      %v1131 = vpop.permute.xlu0 %1130
      %1134 = vset.pattern.permute.xlu0 0
      %1135 = vperm.xlu0 %1134, %v1058
      %v1136 = vpop.permute.xlu0 %1135
      %1139 = vset.pattern.permute.xlu0 0
      %1140 = vperm.xlu0 %1139, %v1060
      %v1141 = vpop.permute.xlu0 %1140
      %1144 = vset.pattern.permute.xlu0 0
      %1145 = vperm.xlu0 %1144, %v1062
      %v1146 = vpop.permute.xlu0 %1145
      %v1148 = vmul.f32 %v1131, %v1124
      %v1149 = vmul.f32 %v1136, %v1125
      %v1150 = vmul.f32 %v1141, %v1126
      %v1151 = vmul.f32 %v1146, %v1127
      %v1152 = vpack.c.bf16 %v1088, %v1088
      %v1153 = vpack.c.bf16 %v1090, %v1090
      %v1154 = vpack.c.bf16 %v1092, %v1092
      %v1155 = vpack.c.bf16 %v1094, %v1094
      %v1157 = vsel %vm1034, %v1152, 0
      %vm1159 = vcmask 1045504
      %v1161 = vsel %vm1159, %v841, 0
      %1163 = vmatprep.subr.bf16.mxu0 0
      %1164 = vmatpush1.bf16.msra.mxu0 0
      %1165 = vmatprep.subr.bf16.mxu0 0
      %1166 = vmatpush1.bf16.msra.mxu0 0
      %1167 = vmatprep.subr.bf16.mxu0 0
      %1168 = vmatpush1.bf16.msra.mxu0 0
      %1169 = vmatprep.subr.bf16.mxu0 0
      %1170 = vmatpush1.bf16.msra.mxu0 0
      %1171 = vmatprep.subr.bf16.mxu0 0
      %1172 = vmatpush1.bf16.msra.mxu0 0
      %1173 = vmatprep.subr.bf16.mxu0 0
      %1174 = vmatpush1.bf16.msra.mxu0 0
      %1175 = vmatprep.subr.bf16.mxu0 0
      %1176 = vmatpush1.bf16.msra.mxu0 0
      %1177 = vmatprep.subr.bf16.mxu0 0
      %1178 = vmatpush1.bf16.msra.mxu0 %v1161
      %1179 = vmatprep.subr.bf16.mxu0 0
      %1180 = vmatpush2.bf16.msra.mxu0 0
      %1181 = vmatprep.subr.bf16.mxu0 0
      %1182 = vmatpush2.bf16.msra.mxu0 0
      %1183 = vmatprep.subr.bf16.mxu0 0
      %1184 = vmatpush2.bf16.msra.mxu0 0
      %1185 = vmatprep.subr.bf16.mxu0 0
      %1186 = vmatpush2.bf16.msra.mxu0 0
      %1187 = vmatprep.subr.bf16.mxu0 0
      %1188 = vmatpush2.bf16.msra.mxu0 0
      %1189 = vmatprep.subr.bf16.mxu0 0
      %1190 = vmatpush2.bf16.msra.mxu0 0
      %1191 = vmatprep.subr.bf16.mxu0 0
      %1192 = vmatpush2.bf16.msra.mxu0 0
      %1193 = vmatprep.subr.bf16.mxu0 0
      %1194 = vmatpush2.bf16.msra.mxu0 0
      %1195 = vmatprep.mubr.bf16.mxu0 0
      %1196 = vmatmul.mubr.bf16.gmra.mxu0 %v1157
      %v1197 = vpop.f32.mrf.mxu0
      %v1198 = vadd.f32 0.0, %v1197
      %v1199 = vpop.f32.mrf.mxu0
      %v1200 = vpop.f32.mrf.mxu0
      %v1201 = vpop.f32.mrf.mxu0
      %1202 = vdwg.mxu0
      %v1204 = vsel %vm1034, %v1153, 0
      %v1207 = vsel %vm1159, %v842, 0
      %1209 = vmatprep.subr.bf16.mxu0 0
      %1210 = vmatpush1.bf16.msra.mxu0 0
      %1211 = vmatprep.subr.bf16.mxu0 0
      %1212 = vmatpush1.bf16.msra.mxu0 0
      %1213 = vmatprep.subr.bf16.mxu0 0
      %1214 = vmatpush1.bf16.msra.mxu0 0
      %1215 = vmatprep.subr.bf16.mxu0 0
      %1216 = vmatpush1.bf16.msra.mxu0 0
      %1217 = vmatprep.subr.bf16.mxu0 0
      %1218 = vmatpush1.bf16.msra.mxu0 0
      %1219 = vmatprep.subr.bf16.mxu0 0
      %1220 = vmatpush1.bf16.msra.mxu0 0
      %1221 = vmatprep.subr.bf16.mxu0 0
      %1222 = vmatpush1.bf16.msra.mxu0 0
      %1223 = vmatprep.subr.bf16.mxu0 0
      %1224 = vmatpush1.bf16.msra.mxu0 %v1207
      %1225 = vmatprep.subr.bf16.mxu0 0
      %1226 = vmatpush2.bf16.msra.mxu0 0
      %1227 = vmatprep.subr.bf16.mxu0 0
      %1228 = vmatpush2.bf16.msra.mxu0 0
      %1229 = vmatprep.subr.bf16.mxu0 0
      %1230 = vmatpush2.bf16.msra.mxu0 0
      %1231 = vmatprep.subr.bf16.mxu0 0
      %1232 = vmatpush2.bf16.msra.mxu0 0
      %1233 = vmatprep.subr.bf16.mxu0 0
      %1234 = vmatpush2.bf16.msra.mxu0 0
      %1235 = vmatprep.subr.bf16.mxu0 0
      %1236 = vmatpush2.bf16.msra.mxu0 0
      %1237 = vmatprep.subr.bf16.mxu0 0
      %1238 = vmatpush2.bf16.msra.mxu0 0
      %1239 = vmatprep.subr.bf16.mxu0 0
      %1240 = vmatpush2.bf16.msra.mxu0 0
      %1241 = vmatprep.mubr.bf16.mxu0 0
      %1242 = vmatmul.mubr.bf16.gmra.mxu0 %v1204
      %v1243 = vpop.f32.mrf.mxu0
      %v1244 = vadd.f32 0.0, %v1243
      %v1245 = vpop.f32.mrf.mxu0
      %v1246 = vpop.f32.mrf.mxu0
      %v1247 = vpop.f32.mrf.mxu0
      %1248 = vdwg.mxu0
      %v1250 = vsel %vm1034, %v1154, 0
      %v1253 = vsel %vm1159, %v843, 0
      %1255 = vmatprep.subr.bf16.mxu0 0
      %1256 = vmatpush1.bf16.msra.mxu0 0
      %1257 = vmatprep.subr.bf16.mxu0 0
      %1258 = vmatpush1.bf16.msra.mxu0 0
      %1259 = vmatprep.subr.bf16.mxu0 0
      %1260 = vmatpush1.bf16.msra.mxu0 0
      %1261 = vmatprep.subr.bf16.mxu0 0
      %1262 = vmatpush1.bf16.msra.mxu0 0
      %1263 = vmatprep.subr.bf16.mxu0 0
      %1264 = vmatpush1.bf16.msra.mxu0 0
      %1265 = vmatprep.subr.bf16.mxu0 0
      %1266 = vmatpush1.bf16.msra.mxu0 0
      %1267 = vmatprep.subr.bf16.mxu0 0
      %1268 = vmatpush1.bf16.msra.mxu0 0
      %1269 = vmatprep.subr.bf16.mxu0 0
      %1270 = vmatpush1.bf16.msra.mxu0 %v1253
      %1271 = vmatprep.subr.bf16.mxu0 0
      %1272 = vmatpush2.bf16.msra.mxu0 0
      %1273 = vmatprep.subr.bf16.mxu0 0
      %1274 = vmatpush2.bf16.msra.mxu0 0
      %1275 = vmatprep.subr.bf16.mxu0 0
      %1276 = vmatpush2.bf16.msra.mxu0 0
      %1277 = vmatprep.subr.bf16.mxu0 0
      %1278 = vmatpush2.bf16.msra.mxu0 0
      %1279 = vmatprep.subr.bf16.mxu0 0
      %1280 = vmatpush2.bf16.msra.mxu0 0
      %1281 = vmatprep.subr.bf16.mxu0 0
      %1282 = vmatpush2.bf16.msra.mxu0 0
      %1283 = vmatprep.subr.bf16.mxu0 0
      %1284 = vmatpush2.bf16.msra.mxu0 0
      %1285 = vmatprep.subr.bf16.mxu0 0
      %1286 = vmatpush2.bf16.msra.mxu0 0
      %1287 = vmatprep.mubr.bf16.mxu0 0
      %1288 = vmatmul.mubr.bf16.gmra.mxu0 %v1250
      %v1289 = vpop.f32.mrf.mxu0
      %v1290 = vadd.f32 0.0, %v1289
      %v1291 = vpop.f32.mrf.mxu0
      %v1292 = vpop.f32.mrf.mxu0
      %v1293 = vpop.f32.mrf.mxu0
      %1294 = vdwg.mxu0
      %v1296 = vsel %vm1034, %v1155, 0
      %v1299 = vsel %vm1159, %v844, 0
      %1301 = vmatprep.subr.bf16.mxu0 0
      %1302 = vmatpush1.bf16.msra.mxu0 0
      %1303 = vmatprep.subr.bf16.mxu0 0
      %1304 = vmatpush1.bf16.msra.mxu0 0
      %1305 = vmatprep.subr.bf16.mxu0 0
      %1306 = vmatpush1.bf16.msra.mxu0 0
      %1307 = vmatprep.subr.bf16.mxu0 0
      %1308 = vmatpush1.bf16.msra.mxu0 0
      %1309 = vmatprep.subr.bf16.mxu0 0
      %1310 = vmatpush1.bf16.msra.mxu0 0
      %1311 = vmatprep.subr.bf16.mxu0 0
      %1312 = vmatpush1.bf16.msra.mxu0 0
      %1313 = vmatprep.subr.bf16.mxu0 0
      %1314 = vmatpush1.bf16.msra.mxu0 0
      %1315 = vmatprep.subr.bf16.mxu0 0
      %1316 = vmatpush1.bf16.msra.mxu0 %v1299
      %1317 = vmatprep.subr.bf16.mxu0 0
      %1318 = vmatpush2.bf16.msra.mxu0 0
      %1319 = vmatprep.subr.bf16.mxu0 0
      %1320 = vmatpush2.bf16.msra.mxu0 0
      %1321 = vmatprep.subr.bf16.mxu0 0
      %1322 = vmatpush2.bf16.msra.mxu0 0
      %1323 = vmatprep.subr.bf16.mxu0 0
      %1324 = vmatpush2.bf16.msra.mxu0 0
      %1325 = vmatprep.subr.bf16.mxu0 0
      %1326 = vmatpush2.bf16.msra.mxu0 0
      %1327 = vmatprep.subr.bf16.mxu0 0
      %1328 = vmatpush2.bf16.msra.mxu0 0
      %1329 = vmatprep.subr.bf16.mxu0 0
      %1330 = vmatpush2.bf16.msra.mxu0 0
      %1331 = vmatprep.subr.bf16.mxu0 0
      %1332 = vmatpush2.bf16.msra.mxu0 0
      %1333 = vmatprep.mubr.bf16.mxu0 0
      %1334 = vmatmul.mubr.bf16.gmra.mxu0 %v1296
      %v1335 = vpop.f32.mrf.mxu0
      %v1336 = vadd.f32 0.0, %v1335
      %v1337 = vpop.f32.mrf.mxu0
      %v1338 = vpop.f32.mrf.mxu0
      %v1339 = vpop.f32.mrf.mxu0
      %1340 = vdwg.mxu0
      %v1341 = vadd.f32 %v1148, %v1198
      %v1342 = vadd.f32 %v1149, %v1244
      %v1343 = vadd.f32 %v1150, %v1290
      %v1344 = vadd.f32 %v1151, %v1336
      %1345 = vst.msk [vmem:[#allocation4] sm:$0xff] %vm845, %v1341
      %1346 = vst.msk [vmem:[#allocation4 + $0x8] sm:$0xff] %vm845, %v1342
      %1347 = vst.msk [vmem:[#allocation4 + $0x10] sm:$0xff] %vm845, %v1343
      %1348 = vst.msk [vmem:[#allocation4 + $0x18] sm:$0xff] %vm845, %v1344
      %1349 = vst.msk [vmem:[#allocation2] sm:$0xff] %vm1119, %v1047
      %1350 = vst.msk [vmem:[#allocation2 + $0x8] sm:$0xff] %vm1119, %v1048
      %1351 = vst.msk [vmem:[#allocation2 + $0x10] sm:$0xff] %vm1119, %v1049
      %1352 = vst.msk [vmem:[#allocation2 + $0x18] sm:$0xff] %vm1119, %v1050
      // Predicated region
      $region33: #{decoder_layer_forward.11} parent=27 // pred_check
        %p1353 = pneg %p214
      $region34: #{decoder_layer_forward.11} parent=27 // pred_check_branch
        %1355 = sbr.rel (%p1353) target = $region36
      $region35: #{decoder_layer_forward.11} parent=27 // pred_region
        %v1356 = vld [vmem:[#allocation4] sm:$0xff]
        %v1357 = vld [vmem:[#allocation4 + $0x8] sm:$0xff]
        %v1358 = vld [vmem:[#allocation4 + $0x10] sm:$0xff]
        %v1359 = vld [vmem:[#allocation4 + $0x18] sm:$0xff]
        %v1360 = vld [vmem:[#allocation3] sm:$0xff]
        %v1361 = vld [vmem:[#allocation3 + $0x8] sm:$0xff]
        %v1362 = vld [vmem:[#allocation3 + $0x10] sm:$0xff]
        %v1363 = vld [vmem:[#allocation3 + $0x18] sm:$0xff]
        %1365 = vset.pattern.permute.xlu0 0
        %1366 = vperm.xlu0 %1365, %v1360
        %v1367 = vpop.permute.xlu0 %1366
        %1370 = vset.pattern.permute.xlu0 0
        %1371 = vperm.xlu0 %1370, %v1361
        %v1372 = vpop.permute.xlu0 %1371
        %1375 = vset.pattern.permute.xlu0 0
        %1376 = vperm.xlu0 %1375, %v1362
        %v1377 = vpop.permute.xlu0 %1376
        %1380 = vset.pattern.permute.xlu0 0
        %1381 = vperm.xlu0 %1380, %v1363
        %v1382 = vpop.permute.xlu0 %1381
        %v1384 = vrcp.pop %v1367
        %v1385 = vmul.f32 %v1356, %v1384
        %v1386 = vrcp.pop %v1372
        %v1387 = vmul.f32 %v1357, %v1386
        %v1388 = vrcp.pop %v1377
        %v1389 = vmul.f32 %v1358, %v1388
        %v1390 = vrcp.pop %v1382
        %v1391 = vmul.f32 %v1359, %v1390
        %v1392 = vcombine.low %v1385, %v1389
        %v1393 = vcombine.high %v1385, %v1389
        %v1395 = vunpack.c.l.s4 1983009808
        %v1396 = vunpack.c.0.s8 %v1395
        %v1397 = vlaneseq
        %v1398 = vshrl.u32 %v1397, 7
        %v1399 = vsub.s32 %v1396, %v1398
        %v1400 = vrot.slane %v1392, %v1399
        %v1402 = vunpack.c.l.s4 1983009808
        %v1403 = vunpack.c.0.s8 %v1402
        %v1404 = vlaneseq
        %v1405 = vshrl.u32 %v1404, 7
        %v1406 = vsub.s32 %v1403, %v1405
        %v1407 = vrot.slane %v1393, %v1406
        %v1408 = vcombine.low %v1387, %v1391
        %v1409 = vcombine.high %v1387, %v1391
        %v1411 = vunpack.c.l.s4 1983009808
        %v1412 = vunpack.c.0.s8 %v1411
        %v1413 = vlaneseq
        %v1414 = vshrl.u32 %v1413, 7
        %v1415 = vsub.s32 %v1412, %v1414
        %v1416 = vrot.slane %v1408, %v1415
        %v1418 = vunpack.c.l.s4 1983009808
        %v1419 = vunpack.c.0.s8 %v1418
        %v1420 = vlaneseq
        %v1421 = vshrl.u32 %v1420, 7
        %v1422 = vsub.s32 %v1419, %v1421
        %v1423 = vrot.slane %v1409, %v1422
        %v1424 = vcombine.low %v1400, %v1416
        %v1425 = vcombine.high %v1400, %v1416
        %v1427 = vunpack.c.l.s4 1934713408
        %v1428 = vunpack.c.0.s8 %v1427
        %v1429 = vlaneseq
        %v1430 = vshrl.u32 %v1429, 7
        %v1431 = vsub.s32 %v1428, %v1430
        %v1432 = vrot.slane %v1424, %v1431
        %v1434 = vunpack.c.l.s4 1934713408
        %v1435 = vunpack.c.0.s8 %v1434
        %v1436 = vlaneseq
        %v1437 = vshrl.u32 %v1436, 7
        %v1438 = vsub.s32 %v1435, %v1437
        %v1439 = vrot.slane %v1425, %v1438
        %v1440 = vcombine.low %v1407, %v1423
        %v1441 = vcombine.high %v1407, %v1423
        %v1443 = vunpack.c.l.s4 1934713408
        %v1444 = vunpack.c.0.s8 %v1443
        %v1445 = vlaneseq
        %v1446 = vshrl.u32 %v1445, 7
        %v1447 = vsub.s32 %v1444, %v1446
        %v1448 = vrot.slane %v1440, %v1447
        %v1450 = vunpack.c.l.s4 1934713408
        %v1451 = vunpack.c.0.s8 %v1450
        %v1452 = vlaneseq
        %v1453 = vshrl.u32 %v1452, 7
        %v1454 = vsub.s32 %v1451, %v1453
        %v1455 = vrot.slane %v1441, %v1454
        %v1456 = vcombine.high %v1432, 0.0
        %v1457 = vcombine.high %v1439, 0.0
        %v1458 = vcombine.high %v1448, 0.0
        %v1459 = vcombine.high %v1455, 0.0
        %v1460 = vcombine.low %v1432, %v1439
        %v1462 = vunpack.c.l.s4 1983009808
        %v1463 = vunpack.c.0.s8 %v1462
        %v1464 = vlaneseq
        %v1465 = vshrl.u32 %v1464, 7
        %v1466 = vsub.s32 %v1463, %v1465
        %v1467 = vrot.slane %v1460, %v1466
        %v1468 = vcombine.low %v1456, %v1457
        %v1470 = vunpack.c.l.s4 1983009808
        %v1471 = vunpack.c.0.s8 %v1470
        %v1472 = vlaneseq
        %v1473 = vshrl.u32 %v1472, 7
        %v1474 = vsub.s32 %v1471, %v1473
        %v1475 = vrot.slane %v1468, %v1474
        %v1476 = vcombine.low %v1448, %v1455
        %v1478 = vunpack.c.l.s4 1983009808
        %v1479 = vunpack.c.0.s8 %v1478
        %v1480 = vlaneseq
        %v1481 = vshrl.u32 %v1480, 7
        %v1482 = vsub.s32 %v1479, %v1481
        %v1483 = vrot.slane %v1476, %v1482
        %v1484 = vcombine.low %v1458, %v1459
        %v1486 = vunpack.c.l.s4 1983009808
        %v1487 = vunpack.c.0.s8 %v1486
        %v1488 = vlaneseq
        %v1489 = vshrl.u32 %v1488, 7
        %v1490 = vsub.s32 %v1487, %v1489
        %v1491 = vrot.slane %v1484, %v1490
        %v1492 = vcombine.low %v1467, %v1475
        %v1493 = vcombine.high %v1467, %v1475
        %v1495 = vunpack.c.l.s4 1934713408
        %v1496 = vunpack.c.0.s8 %v1495
        %v1497 = vlaneseq
        %v1498 = vshrl.u32 %v1497, 7
        %v1499 = vsub.s32 %v1496, %v1498
        %v1500 = vrot.slane %v1492, %v1499
        %v1502 = vunpack.c.l.s4 1934713408
        %v1503 = vunpack.c.0.s8 %v1502
        %v1504 = vlaneseq
        %v1505 = vshrl.u32 %v1504, 7
        %v1506 = vsub.s32 %v1503, %v1505
        %v1507 = vrot.slane %v1493, %v1506
        %v1508 = vcombine.low %v1483, %v1491
        %v1509 = vcombine.high %v1483, %v1491
        %v1511 = vunpack.c.l.s4 1934713408
        %v1512 = vunpack.c.0.s8 %v1511
        %v1513 = vlaneseq
        %v1514 = vshrl.u32 %v1513, 7
        %v1515 = vsub.s32 %v1512, %v1514
        %v1516 = vrot.slane %v1508, %v1515
        %v1518 = vunpack.c.l.s4 1934713408
        %v1519 = vunpack.c.0.s8 %v1518
        %v1520 = vlaneseq
        %v1521 = vshrl.u32 %v1520, 7
        %v1522 = vsub.s32 %v1519, %v1521
        %v1523 = vrot.slane %v1509, %v1522
        %v1524 = vcombine.low %v1500, %v1516
        %v1525 = vcombine.high %v1500, %v1516
        %v1526 = vcombine.low %v1507, %v1523
        %v1527 = vcombine.high %v1507, %v1523
        %1529 = vrot.lane.b32.xlu0 %v1525, 8
        %v1530 = vpop.permute.xlu0 %1529
        %1533 = vrot.lane.b32.xlu0 %v1526, 16
        %v1534 = vpop.permute.xlu0 %1533
        %1537 = vrot.lane.b32.xlu0 %v1527, 24
        %v1538 = vpop.permute.xlu0 %1537
        %v1540 = vsel %vm845, %v1524, %v1530
        %vm1541 = vcmask 130048
        %v1542 = vsel %vm1541, %v1540, %v1534
        %vm1543 = vcmask 195584
        %v1544 = vsel %vm1543, %v1542, %v1538
        %vm1545 = vcmask 261120
        %1546 = vst.msk [vmem:[%s212] sm:$0xff] %vm1545, %v1544
      $region36: #{decoder_layer_forward.11} parent=27 // pred_fallthru
        _
      %p1547 = scmp.lt.s32.totalorder %s18, 1
      %s1548 = scalar_select %p1547, %s18, 1
      %p1549 = scmp.lt.s32.totalorder %s19, 0
      %s1550 = scalar_select %p1549, %s19, 0
      %s1551 = sadd.s32 %s1550, %s1548
      %s1552 = smul.addr %s1551, 8
      %s1553 = scalar_lea.vmem %s2, %s1552
      // Predicated region
      $region37: #{decoder_layer_forward.11} parent=27 // pred_check
        %p1554 = pneg %p108
      $region38: #{decoder_layer_forward.11} parent=27 // pred_check_branch
        %1556 = sbr.rel (%p1554) target = $region40
      $region39: #{decoder_layer_forward.11} parent=27 // pred_region
        _
      $region40: #{decoder_layer_forward.11} parent=27 // pred_fallthru
        _
    $region28: #{decoder_layer_forward.11} parent=5 // pred_fallthru
      _
    %p1557 = scmp.le.s32.totalorder 2, %s8
    // Predicated region
    $region41: #{decoder_layer_forward.11} parent=5 // pred_check
      %p1558 = pneg %p1557
    $region42: #{decoder_layer_forward.11} parent=5 // pred_check_branch
      %1560 = sbr.rel (%p1558) target = $region44
    $region43: #{decoder_layer_forward.11} parent=5 // pred_region
      %s1561 = ssub.s32 %s8, 2
      // Predicated region
      $region45: #{decoder_layer_forward.11} parent=43 // pred_check
        %p1562 = pneg %p114
      $region46: #{decoder_layer_forward.11} parent=43 // pred_check_branch
        %1564 = sbr.rel (%p1562) target = $region48
      $region47: #{decoder_layer_forward.11} parent=43 // pred_region
        %p1565 = scmp.lt.s32.totalorder %s21, 1
        %s1566 = scalar_select %p1565, %s21, 1
        %p1567 = scmp.lt.s32.totalorder %s22, 0
        %s1568 = scalar_select %p1567, %s22, 0
        %s1569 = sadd.s32 %s1568, %s1566
        %s1570 = smul.addr %s1569, 8
        %s1571 = scalar_lea.vmem %s2, %s1570
      $region48: #{decoder_layer_forward.11} parent=43 // pred_fallthru
        _
    $region44: #{decoder_layer_forward.11} parent=5 // pred_fallthru
      _
  $region6: #{decoder_layer_forward.11} parent=0 // loop_footer
    %s12 = sadd.s32 1, %s8
  $region7: #{decoder_layer_forward.11} parent=0 // loop_footer_branch
    %7 = sbr.rel target = $region3
  $region8: #{decoder_layer_forward.11} parent=0 // loop_exit
    _

</llo_original>
